<compile_context>
chip_gen: v6e
topology: v6e:2x2x1
jax: 0.10.0
libtpu: 0.0.40
codegen_flags: <defaults>
</compile_context>

<pallas_src>
import jax
import jax.numpy as jnp
from jax import lax
from jax.experimental import pallas as pl
from jax.experimental.pallas import tpu as pltpu

KSIZE = 7
PAD = KSIZE // 2


def _pick_chunk(c):
    """Sublane chunk for streaming over C (<= one f32 sublane tile)."""
    for k in (8, 4, 2, 1):
        if c % k == 0:
            return k
    return 1


def _pick_batch_block(b, per_elem_bytes, target_bytes=1 << 20, max_nb=8):
    """Batch elements per grid step: pack tiny images so each step moves a
    reasonably sized block, but cap the block at ~1 MiB (VMEM double-buffers
    both input and output)."""
    nb = 1
    for d in range(min(b, max_nb), 0, -1):
        if b % d == 0 and d * per_elem_bytes <= max(per_elem_bytes, target_bytes):
            nb = d
            break
    return nb


def _make_kernel(nb, c, h, w, chunk):
    hw = h * w
    n_chunks = c // chunk
    inv_c = 1.0 / float(c)
    unroll = n_chunks <= 8

    def kernel(w_ref, x_ref, o_ref):
        # w_ref : SMEM (2*49,) f32 — [avg-channel taps (kh,kw), max-channel taps]
        # x_ref : VMEM (nb, C, H*W)
        # o_ref : VMEM (nb, C, H*W)

        # Row / column indices of every flat pixel, in f32 (exact for
        # H*W < 2**24; avoids vector integer div).  Shared by all nb elements.
        idx_f = lax.broadcasted_iota(jnp.int32, (1, hw), 1).astype(jnp.float32)
        row_f = jnp.floor(idx_f / float(w))
        col_f = idx_f - row_f * float(w)
        # Zero-padding validity masks for each vertical / horizontal tap offset.
        rmasks = [(row_f >= float(-dh)) & (row_f < float(h - dh))
                  for dh in range(-PAD, PAD + 1)]
        cmasks = [(col_f >= float(-dw)) & (col_f < float(w - dw))
                  for dw in range(-PAD, PAD + 1)]

        for b in range(nb):
            # ---- pass 1: streamed channel sum / max (lane-dense loads) ------
            def red_body(i, carry):
                s, m = carry
                c0 = pl.multiple_of(i * chunk, chunk)
                blk = x_ref[b, pl.ds(c0, chunk), :].astype(jnp.float32)
                s = s + jnp.sum(blk, axis=0, keepdims=True)
                m = jnp.maximum(m, jnp.max(blk, axis=0, keepdims=True))
                return s, m

            s0 = jnp.zeros((1, hw), jnp.float32)
            m0 = jnp.full((1, hw), -jnp.inf, jnp.float32)
            csum, cmax = lax.fori_loop(0, n_chunks, red_body, (s0, m0),
                                       unroll=unroll)
            cavg = csum * inv_c

            # ---- 7x7 conv on the pooled planes via static lane rolls --------
            # out[h,w] = sum_{kh,kw} Wa[kh,kw]*avg[h+kh-3,w+kw-3]
            #                      + Wm[kh,kw]*max[h+kh-3,w+kw-3]   (zero pad)
            acc = jnp.zeros((1, hw), jnp.float32)
            for kh in range(KSIZE):
                dh = kh - PAD
                for kw in range(KSIZE):
                    dw = kw - PAD
                    shift = (-(dh * w + dw)) % hw      # static, non-negative
                    if shift == 0:
                        a_sh, m_sh = cavg, cmax
                    else:
                        a_sh = pltpu.roll(cavg, shift, 1)
                        m_sh = pltpu.roll(cmax, shift, 1)
                    w_a = w_ref[kh * KSIZE + kw]
                    w_m = w_ref[KSIZE * KSIZE + kh * KSIZE + kw]
                    tap = w_a * a_sh + w_m * m_sh
                    acc = acc + jnp.where(rmasks[kh] & cmasks[kw], tap, 0.0)

            gate = jax.nn.sigmoid(acc)                 # (1, H*W) f32

            # ---- pass 2: streamed gating multiply + lane-dense stores -------
            def apply_body(i, carry):
                c0 = pl.multiple_of(i * chunk, chunk)
                blk = x_ref[b, pl.ds(c0, chunk), :].astype(jnp.float32)
                o_ref[b, pl.ds(c0, chunk), :] = (blk * gate).astype(o_ref.dtype)
                return carry

            lax.fori_loop(0, n_chunks, apply_body, 0, unroll=unroll)

    return kernel


def spatial_attention(x, weight):
    """x: [B, C, H, W]; weight: [1, 2, 7, 7] (PyTorch OIHW conv weight, no bias)."""
    B, C, H, W = x.shape
    HW = H * W

    x_flat = x.reshape(B, C, HW)                        # lane-dense last dim
    w_flat = weight.astype(jnp.float32).reshape(-1)     # (98,) flat SMEM weights

    chunk = _pick_chunk(C)
    nb = _pick_batch_block(B, C * HW * x.dtype.itemsize)
    grid = (B // nb,)

    kernel = _make_kernel(nb, C, H, W, chunk)

    out_flat = pl.pallas_call(
        kernel,
        out_shape=jax.ShapeDtypeStruct((B, C, HW), x.dtype),
        grid=grid,
        in_specs=[
            pl.BlockSpec(memory_space=pltpu.MemorySpace.SMEM),     # conv weights
            pl.BlockSpec((nb, C, HW), lambda i: (i, 0, 0)),
        ],
        out_specs=pl.BlockSpec((nb, C, HW), lambda i: (i, 0, 0)),
        compiler_params=pltpu.CompilerParams(
            dimension_semantics=("parallel",),
            # Blocks are capped at ~1 MiB, but allow larger resident blocks
            # (e.g. big single batch elements) without hitting the 16/32 MiB
            # default scoped limit; stays under v7x's 64 MiB physical VMEM.
            vmem_limit_bytes=48 * 1024 * 1024,
        ),
    )(w_flat, x_flat)

    return out_flat.reshape(B, C, H, W)


def spatial_attention_reference(x, weight):
    avg = jnp.mean(x, axis=1, keepdims=True)
    mx = jnp.max(x, axis=1, keepdims=True)
    y = jnp.concatenate([avg, mx], axis=1)
    y = jax.lax.conv_general_dilated(
        y, weight, window_strides=(1, 1),
        padding=[(PAD, PAD), (PAD, PAD)],
        dimension_numbers=("NCHW", "OIHW", "NCHW"))
    return x * jax.nn.sigmoid(y)


if __name__ == "__main__":
    key = jax.random.PRNGKey(0)
    kx, kw = jax.random.split(key)

    B, C, H, W = 2, 4, 16, 16
    x = jax.random.normal(kx, (B, C, H, W), dtype=jnp.float32)
    # Deterministic synthetic conv weights, PyTorch layout (out=1, in=2, 7, 7).
    weight = jax.random.normal(kw, (1, 2, KSIZE, KSIZE), dtype=jnp.float32) * 0.1

    out = jax.block_until_ready(spatial_attention(x, weight))

    ref = spatial_attention_reference(x, weight)
    assert out.shape == (B, C, H, W)
    assert jnp.allclose(out, ref, atol=1e-5, rtol=1e-5), "mismatch vs JAX reference"

    print("KERNEL_OK")
</pallas_src>

<mosaic_0001>
module attributes {stable_mosaic.version = 11 : i64} {
  func.func @kernel(%arg0: i32, %arg1: memref<98xf32, #tpu.memory_space<smem>>, %arg2: memref<2x4x256xf32, #tpu.memory_space<vmem>>, %arg3: memref<2x4x256xf32, #tpu.memory_space<vmem>>) attributes {dimension_semantics = [#tpu.dimension_semantics<parallel>], iteration_bounds = array<i64: 1>, scalar_prefetch = 0 : i64, scratch_operands = 0 : i64, tpu.core_type = #tpu.core_type<tc>, window_params = [{transform_indices = @transform_0, window_bounds = array<i64: 98>}, {transform_indices = @transform_1, window_bounds = array<i64: 2, 4, 256>}, {transform_indices = @transform_2, window_bounds = array<i64: 2, 4, 256>}]} {
    %0 = tpu.iota {dimensions = array<i32: 1>} : vector<1x256xi32>
    %1 = arith.sitofp %0 : vector<1x256xi32> to vector<1x256xf32>
    %cst = arith.constant 1.600000e+01 : f32
    %2 = vector.broadcast %cst : f32 to vector<1x256xf32>
    %3 = arith.divf %1, %2 : vector<1x256xf32>
    %4 = math.floor %3 : vector<1x256xf32>
    %cst_0 = arith.constant 1.600000e+01 : f32
    %5 = vector.broadcast %cst_0 : f32 to vector<1x256xf32>
    %6 = arith.mulf %4, %5 : vector<1x256xf32>
    %7 = arith.subf %1, %6 : vector<1x256xf32>
    %cst_1 = arith.constant 3.000000e+00 : f32
    %8 = vector.broadcast %cst_1 : f32 to vector<1x256xf32>
    %9 = arith.cmpf oge, %4, %8 : vector<1x256xf32>
    %cst_2 = arith.constant 1.900000e+01 : f32
    %10 = vector.broadcast %cst_2 : f32 to vector<1x256xf32>
    %11 = arith.cmpf olt, %4, %10 : vector<1x256xf32>
    %12 = arith.andi %9, %11 : vector<1x256xi1>
    %cst_3 = arith.constant 2.000000e+00 : f32
    %13 = vector.broadcast %cst_3 : f32 to vector<1x256xf32>
    %14 = arith.cmpf oge, %4, %13 : vector<1x256xf32>
    %cst_4 = arith.constant 1.800000e+01 : f32
    %15 = vector.broadcast %cst_4 : f32 to vector<1x256xf32>
    %16 = arith.cmpf olt, %4, %15 : vector<1x256xf32>
    %17 = arith.andi %14, %16 : vector<1x256xi1>
    %cst_5 = arith.constant 1.000000e+00 : f32
    %18 = vector.broadcast %cst_5 : f32 to vector<1x256xf32>
    %19 = arith.cmpf oge, %4, %18 : vector<1x256xf32>
    %cst_6 = arith.constant 1.700000e+01 : f32
    %20 = vector.broadcast %cst_6 : f32 to vector<1x256xf32>
    %21 = arith.cmpf olt, %4, %20 : vector<1x256xf32>
    %22 = arith.andi %19, %21 : vector<1x256xi1>
    %cst_7 = arith.constant 0.000000e+00 : f32
    %23 = vector.broadcast %cst_7 : f32 to vector<1x256xf32>
    %24 = arith.cmpf oge, %4, %23 : vector<1x256xf32>
    %cst_8 = arith.constant 1.600000e+01 : f32
    %25 = vector.broadcast %cst_8 : f32 to vector<1x256xf32>
    %26 = arith.cmpf olt, %4, %25 : vector<1x256xf32>
    %27 = arith.andi %24, %26 : vector<1x256xi1>
    %cst_9 = arith.constant -1.000000e+00 : f32
    %28 = vector.broadcast %cst_9 : f32 to vector<1x256xf32>
    %29 = arith.cmpf oge, %4, %28 : vector<1x256xf32>
    %cst_10 = arith.constant 1.500000e+01 : f32
    %30 = vector.broadcast %cst_10 : f32 to vector<1x256xf32>
    %31 = arith.cmpf olt, %4, %30 : vector<1x256xf32>
    %32 = arith.andi %29, %31 : vector<1x256xi1>
    %cst_11 = arith.constant -2.000000e+00 : f32
    %33 = vector.broadcast %cst_11 : f32 to vector<1x256xf32>
    %34 = arith.cmpf oge, %4, %33 : vector<1x256xf32>
    %cst_12 = arith.constant 1.400000e+01 : f32
    %35 = vector.broadcast %cst_12 : f32 to vector<1x256xf32>
    %36 = arith.cmpf olt, %4, %35 : vector<1x256xf32>
    %37 = arith.andi %34, %36 : vector<1x256xi1>
    %cst_13 = arith.constant -3.000000e+00 : f32
    %38 = vector.broadcast %cst_13 : f32 to vector<1x256xf32>
    %39 = arith.cmpf oge, %4, %38 : vector<1x256xf32>
    %cst_14 = arith.constant 1.300000e+01 : f32
    %40 = vector.broadcast %cst_14 : f32 to vector<1x256xf32>
    %41 = arith.cmpf olt, %4, %40 : vector<1x256xf32>
    %42 = arith.andi %39, %41 : vector<1x256xi1>
    %cst_15 = arith.constant 3.000000e+00 : f32
    %43 = vector.broadcast %cst_15 : f32 to vector<1x256xf32>
    %44 = arith.cmpf oge, %7, %43 : vector<1x256xf32>
    %cst_16 = arith.constant 1.900000e+01 : f32
    %45 = vector.broadcast %cst_16 : f32 to vector<1x256xf32>
    %46 = arith.cmpf olt, %7, %45 : vector<1x256xf32>
    %47 = arith.andi %44, %46 : vector<1x256xi1>
    %cst_17 = arith.constant 2.000000e+00 : f32
    %48 = vector.broadcast %cst_17 : f32 to vector<1x256xf32>
    %49 = arith.cmpf oge, %7, %48 : vector<1x256xf32>
    %cst_18 = arith.constant 1.800000e+01 : f32
    %50 = vector.broadcast %cst_18 : f32 to vector<1x256xf32>
    %51 = arith.cmpf olt, %7, %50 : vector<1x256xf32>
    %52 = arith.andi %49, %51 : vector<1x256xi1>
    %cst_19 = arith.constant 1.000000e+00 : f32
    %53 = vector.broadcast %cst_19 : f32 to vector<1x256xf32>
    %54 = arith.cmpf oge, %7, %53 : vector<1x256xf32>
    %cst_20 = arith.constant 1.700000e+01 : f32
    %55 = vector.broadcast %cst_20 : f32 to vector<1x256xf32>
    %56 = arith.cmpf olt, %7, %55 : vector<1x256xf32>
    %57 = arith.andi %54, %56 : vector<1x256xi1>
    %cst_21 = arith.constant 0.000000e+00 : f32
    %58 = vector.broadcast %cst_21 : f32 to vector<1x256xf32>
    %59 = arith.cmpf oge, %7, %58 : vector<1x256xf32>
    %cst_22 = arith.constant 1.600000e+01 : f32
    %60 = vector.broadcast %cst_22 : f32 to vector<1x256xf32>
    %61 = arith.cmpf olt, %7, %60 : vector<1x256xf32>
    %62 = arith.andi %59, %61 : vector<1x256xi1>
    %cst_23 = arith.constant -1.000000e+00 : f32
    %63 = vector.broadcast %cst_23 : f32 to vector<1x256xf32>
    %64 = arith.cmpf oge, %7, %63 : vector<1x256xf32>
    %cst_24 = arith.constant 1.500000e+01 : f32
    %65 = vector.broadcast %cst_24 : f32 to vector<1x256xf32>
    %66 = arith.cmpf olt, %7, %65 : vector<1x256xf32>
    %67 = arith.andi %64, %66 : vector<1x256xi1>
    %cst_25 = arith.constant -2.000000e+00 : f32
    %68 = vector.broadcast %cst_25 : f32 to vector<1x256xf32>
    %69 = arith.cmpf oge, %7, %68 : vector<1x256xf32>
    %cst_26 = arith.constant 1.400000e+01 : f32
    %70 = vector.broadcast %cst_26 : f32 to vector<1x256xf32>
    %71 = arith.cmpf olt, %7, %70 : vector<1x256xf32>
    %72 = arith.andi %69, %71 : vector<1x256xi1>
    %cst_27 = arith.constant -3.000000e+00 : f32
    %73 = vector.broadcast %cst_27 : f32 to vector<1x256xf32>
    %74 = arith.cmpf oge, %7, %73 : vector<1x256xf32>
    %cst_28 = arith.constant 1.300000e+01 : f32
    %75 = vector.broadcast %cst_28 : f32 to vector<1x256xf32>
    %76 = arith.cmpf olt, %7, %75 : vector<1x256xf32>
    %77 = arith.andi %74, %76 : vector<1x256xi1>
    %cst_29 = arith.constant 0.000000e+00 : f32
    %78 = vector.broadcast %cst_29 : f32 to vector<1x256xf32>
    %cst_30 = arith.constant 0xFF800000 : f32
    %79 = vector.broadcast %cst_30 : f32 to vector<1x256xf32>
    %c0_i32 = arith.constant 0 : i32
    %c4_i32 = arith.constant 4 : i32
    %80 = arith.muli %c0_i32, %c4_i32 : i32
    %81 = tpu.assume_multiple %80, 4 : i32
    %c0 = arith.constant 0 : index
    %82 = arith.index_cast %81 : i32 to index
    %c0_31 = arith.constant 0 : index
    %83 = vector.load %arg2[%c0, %82, %c0_31] : memref<2x4x256xf32, #tpu.memory_space<vmem>>, vector<1x4x256xf32>
    %84 = vector.shape_cast %83 : vector<1x4x256xf32> to vector<4x256xf32>
    %cst_32 = arith.constant dense<0.000000e+00> : vector<256xf32>
    %85 = vector.multi_reduction <add>, %84, %cst_32 [0] : vector<4x256xf32> to vector<256xf32>
    %86 = vector.shape_cast %85 : vector<256xf32> to vector<1x256xf32>
    %87 = arith.addf %78, %86 : vector<1x256xf32>
    %cst_33 = arith.constant dense<0xFF800000> : vector<256xf32>
    %88 = vector.multi_reduction <maximumf>, %84, %cst_33 [0] : vector<4x256xf32> to vector<256xf32>
    %89 = vector.shape_cast %88 : vector<256xf32> to vector<1x256xf32>
    %90 = arith.maximumf %79, %89 : vector<1x256xf32>
    %c1_i32 = arith.constant 1 : i32
    %cst_34 = arith.constant 2.500000e-01 : f32
    %91 = vector.broadcast %cst_34 : f32 to vector<1x256xf32>
    %92 = arith.mulf %87, %91 : vector<1x256xf32>
    %cst_35 = arith.constant 0.000000e+00 : f32
    %93 = vector.broadcast %cst_35 : f32 to vector<1x256xf32>
    %c51_i32 = arith.constant 51 : i32
    %94 = tpu.dynamic_rotate %92 by %c51_i32 dim 1 : vector<1x256xf32>, i32 -> vector<1x256xf32>
    %c51_i32_36 = arith.constant 51 : i32
    %95 = tpu.dynamic_rotate %90 by %c51_i32_36 dim 1 : vector<1x256xf32>, i32 -> vector<1x256xf32>
    %c0_37 = arith.constant 0 : index
    %96 = memref.load %arg1[%c0_37] : memref<98xf32, #tpu.memory_space<smem>>
    %c49 = arith.constant 49 : index
    %97 = memref.load %arg1[%c49] : memref<98xf32, #tpu.memory_space<smem>>
    %98 = vector.broadcast %96 : f32 to vector<1x256xf32>
    %99 = arith.mulf %98, %94 : vector<1x256xf32>
    %100 = vector.broadcast %97 : f32 to vector<1x256xf32>
    %101 = arith.mulf %100, %95 : vector<1x256xf32>
    %102 = arith.addf %99, %101 : vector<1x256xf32>
    %103 = arith.andi %12, %47 : vector<1x256xi1>
    %cst_38 = arith.constant 0.000000e+00 : f32
    %104 = vector.broadcast %cst_38 : f32 to vector<1x256xf32>
    %105 = arith.select %103, %102, %104 : vector<1x256xi1>, vector<1x256xf32>
    %106 = arith.addf %93, %105 : vector<1x256xf32>
    %c50_i32 = arith.constant 50 : i32
    %107 = tpu.dynamic_rotate %92 by %c50_i32 dim 1 : vector<1x256xf32>, i32 -> vector<1x256xf32>
    %c50_i32_39 = arith.constant 50 : i32
    %108 = tpu.dynamic_rotate %90 by %c50_i32_39 dim 1 : vector<1x256xf32>, i32 -> vector<1x256xf32>
    %c1 = arith.constant 1 : index
    %109 = memref.load %arg1[%c1] : memref<98xf32, #tpu.memory_space<smem>>
    %c50 = arith.constant 50 : index
    %110 = memref.load %arg1[%c50] : memref<98xf32, #tpu.memory_space<smem>>
    %111 = vector.broadcast %109 : f32 to vector<1x256xf32>
    %112 = arith.mulf %111, %107 : vector<1x256xf32>
    %113 = vector.broadcast %110 : f32 to vector<1x256xf32>
    %114 = arith.mulf %113, %108 : vector<1x256xf32>
    %115 = arith.addf %112, %114 : vector<1x256xf32>
    %116 = arith.andi %12, %52 : vector<1x256xi1>
    %cst_40 = arith.constant 0.000000e+00 : f32
    %117 = vector.broadcast %cst_40 : f32 to vector<1x256xf32>
    %118 = arith.select %116, %115, %117 : vector<1x256xi1>, vector<1x256xf32>
    %119 = arith.addf %106, %118 : vector<1x256xf32>
    %c49_i32 = arith.constant 49 : i32
    %120 = tpu.dynamic_rotate %92 by %c49_i32 dim 1 : vector<1x256xf32>, i32 -> vector<1x256xf32>
    %c49_i32_41 = arith.constant 49 : i32
    %121 = tpu.dynamic_rotate %90 by %c49_i32_41 dim 1 : vector<1x256xf32>, i32 -> vector<1x256xf32>
    %c2 = arith.constant 2 : index
    %122 = memref.load %arg1[%c2] : memref<98xf32, #tpu.memory_space<smem>>
    %c51 = arith.constant 51 : index
    %123 = memref.load %arg1[%c51] : memref<98xf32, #tpu.memory_space<smem>>
    %124 = vector.broadcast %122 : f32 to vector<1x256xf32>
    %125 = arith.mulf %124, %120 : vector<1x256xf32>
    %126 = vector.broadcast %123 : f32 to vector<1x256xf32>
    %127 = arith.mulf %126, %121 : vector<1x256xf32>
    %128 = arith.addf %125, %127 : vector<1x256xf32>
    %129 = arith.andi %12, %57 : vector<1x256xi1>
    %cst_42 = arith.constant 0.000000e+00 : f32
    %130 = vector.broadcast %cst_42 : f32 to vector<1x256xf32>
    %131 = arith.select %129, %128, %130 : vector<1x256xi1>, vector<1x256xf32>
    %132 = arith.addf %119, %131 : vector<1x256xf32>
    %c48_i32 = arith.constant 48 : i32
    %133 = tpu.dynamic_rotate %92 by %c48_i32 dim 1 : vector<1x256xf32>, i32 -> vector<1x256xf32>
    %c48_i32_43 = arith.constant 48 : i32
    %134 = tpu.dynamic_rotate %90 by %c48_i32_43 dim 1 : vector<1x256xf32>, i32 -> vector<1x256xf32>
    %c3 = arith.constant 3 : index
    %135 = memref.load %arg1[%c3] : memref<98xf32, #tpu.memory_space<smem>>
    %c52 = arith.constant 52 : index
    %136 = memref.load %arg1[%c52] : memref<98xf32, #tpu.memory_space<smem>>
    %137 = vector.broadcast %135 : f32 to vector<1x256xf32>
    %138 = arith.mulf %137, %133 : vector<1x256xf32>
    %139 = vector.broadcast %136 : f32 to vector<1x256xf32>
    %140 = arith.mulf %139, %134 : vector<1x256xf32>
    %141 = arith.addf %138, %140 : vector<1x256xf32>
    %142 = arith.andi %12, %62 : vector<1x256xi1>
    %cst_44 = arith.constant 0.000000e+00 : f32
    %143 = vector.broadcast %cst_44 : f32 to vector<1x256xf32>
    %144 = arith.select %142, %141, %143 : vector<1x256xi1>, vector<1x256xf32>
    %145 = arith.addf %132, %144 : vector<1x256xf32>
    %c47_i32 = arith.constant 47 : i32
    %146 = tpu.dynamic_rotate %92 by %c47_i32 dim 1 : vector<1x256xf32>, i32 -> vector<1x256xf32>
    %c47_i32_45 = arith.constant 47 : i32
    %147 = tpu.dynamic_rotate %90 by %c47_i32_45 dim 1 : vector<1x256xf32>, i32 -> vector<1x256xf32>
    %c4 = arith.constant 4 : index
    %148 = memref.load %arg1[%c4] : memref<98xf32, #tpu.memory_space<smem>>
    %c53 = arith.constant 53 : index
    %149 = memref.load %arg1[%c53] : memref<98xf32, #tpu.memory_space<smem>>
    %150 = vector.broadcast %148 : f32 to vector<1x256xf32>
    %151 = arith.mulf %150, %146 : vector<1x256xf32>
    %152 = vector.broadcast %149 : f32 to vector<1x256xf32>
    %153 = arith.mulf %152, %147 : vector<1x256xf32>
    %154 = arith.addf %151, %153 : vector<1x256xf32>
    %155 = arith.andi %12, %67 : vector<1x256xi1>
    %cst_46 = arith.constant 0.000000e+00 : f32
    %156 = vector.broadcast %cst_46 : f32 to vector<1x256xf32>
    %157 = arith.select %155, %154, %156 : vector<1x256xi1>, vector<1x256xf32>
    %158 = arith.addf %145, %157 : vector<1x256xf32>
    %c46_i32 = arith.constant 46 : i32
    %159 = tpu.dynamic_rotate %92 by %c46_i32 dim 1 : vector<1x256xf32>, i32 -> vector<1x256xf32>
    %c46_i32_47 = arith.constant 46 : i32
    %160 = tpu.dynamic_rotate %90 by %c46_i32_47 dim 1 : vector<1x256xf32>, i32 -> vector<1x256xf32>
    %c5 = arith.constant 5 : index
    %161 = memref.load %arg1[%c5] : memref<98xf32, #tpu.memory_space<smem>>
    %c54 = arith.constant 54 : index
    %162 = memref.load %arg1[%c54] : memref<98xf32, #tpu.memory_space<smem>>
    %163 = vector.broadcast %161 : f32 to vector<1x256xf32>
    %164 = arith.mulf %163, %159 : vector<1x256xf32>
    %165 = vector.broadcast %162 : f32 to vector<1x256xf32>
    %166 = arith.mulf %165, %160 : vector<1x256xf32>
    %167 = arith.addf %164, %166 : vector<1x256xf32>
    %168 = arith.andi %12, %72 : vector<1x256xi1>
    %cst_48 = arith.constant 0.000000e+00 : f32
    %169 = vector.broadcast %cst_48 : f32 to vector<1x256xf32>
    %170 = arith.select %168, %167, %169 : vector<1x256xi1>, vector<1x256xf32>
    %171 = arith.addf %158, %170 : vector<1x256xf32>
    %c45_i32 = arith.constant 45 : i32
    %172 = tpu.dynamic_rotate %92 by %c45_i32 dim 1 : vector<1x256xf32>, i32 -> vector<1x256xf32>
    %c45_i32_49 = arith.constant 45 : i32
    %173 = tpu.dynamic_rotate %90 by %c45_i32_49 dim 1 : vector<1x256xf32>, i32 -> vector<1x256xf32>
    %c6 = arith.constant 6 : index
    %174 = memref.load %arg1[%c6] : memref<98xf32, #tpu.memory_space<smem>>
    %c55 = arith.constant 55 : index
    %175 = memref.load %arg1[%c55] : memref<98xf32, #tpu.memory_space<smem>>
    %176 = vector.broadcast %174 : f32 to vector<1x256xf32>
    %177 = arith.mulf %176, %172 : vector<1x256xf32>
    %178 = vector.broadcast %175 : f32 to vector<1x256xf32>
    %179 = arith.mulf %178, %173 : vector<1x256xf32>
    %180 = arith.addf %177, %179 : vector<1x256xf32>
    %181 = arith.andi %12, %77 : vector<1x256xi1>
    %cst_50 = arith.constant 0.000000e+00 : f32
    %182 = vector.broadcast %cst_50 : f32 to vector<1x256xf32>
    %183 = arith.select %181, %180, %182 : vector<1x256xi1>, vector<1x256xf32>
    %184 = arith.addf %171, %183 : vector<1x256xf32>
    %c35_i32 = arith.constant 35 : i32
    %185 = tpu.dynamic_rotate %92 by %c35_i32 dim 1 : vector<1x256xf32>, i32 -> vector<1x256xf32>
    %c35_i32_51 = arith.constant 35 : i32
    %186 = tpu.dynamic_rotate %90 by %c35_i32_51 dim 1 : vector<1x256xf32>, i32 -> vector<1x256xf32>
    %c7 = arith.constant 7 : index
    %187 = memref.load %arg1[%c7] : memref<98xf32, #tpu.memory_space<smem>>
    %c56 = arith.constant 56 : index
    %188 = memref.load %arg1[%c56] : memref<98xf32, #tpu.memory_space<smem>>
    %189 = vector.broadcast %187 : f32 to vector<1x256xf32>
    %190 = arith.mulf %189, %185 : vector<1x256xf32>
    %191 = vector.broadcast %188 : f32 to vector<1x256xf32>
    %192 = arith.mulf %191, %186 : vector<1x256xf32>
    %193 = arith.addf %190, %192 : vector<1x256xf32>
    %194 = arith.andi %17, %47 : vector<1x256xi1>
    %cst_52 = arith.constant 0.000000e+00 : f32
    %195 = vector.broadcast %cst_52 : f32 to vector<1x256xf32>
    %196 = arith.select %194, %193, %195 : vector<1x256xi1>, vector<1x256xf32>
    %197 = arith.addf %184, %196 : vector<1x256xf32>
    %c34_i32 = arith.constant 34 : i32
    %198 = tpu.dynamic_rotate %92 by %c34_i32 dim 1 : vector<1x256xf32>, i32 -> vector<1x256xf32>
    %c34_i32_53 = arith.constant 34 : i32
    %199 = tpu.dynamic_rotate %90 by %c34_i32_53 dim 1 : vector<1x256xf32>, i32 -> vector<1x256xf32>
    %c8 = arith.constant 8 : index
    %200 = memref.load %arg1[%c8] : memref<98xf32, #tpu.memory_space<smem>>
    %c57 = arith.constant 57 : index
    %201 = memref.load %arg1[%c57] : memref<98xf32, #tpu.memory_space<smem>>
    %202 = vector.broadcast %200 : f32 to vector<1x256xf32>
    %203 = arith.mulf %202, %198 : vector<1x256xf32>
    %204 = vector.broadcast %201 : f32 to vector<1x256xf32>
    %205 = arith.mulf %204, %199 : vector<1x256xf32>
    %206 = arith.addf %203, %205 : vector<1x256xf32>
    %207 = arith.andi %17, %52 : vector<1x256xi1>
    %cst_54 = arith.constant 0.000000e+00 : f32
    %208 = vector.broadcast %cst_54 : f32 to vector<1x256xf32>
    %209 = arith.select %207, %206, %208 : vector<1x256xi1>, vector<1x256xf32>
    %210 = arith.addf %197, %209 : vector<1x256xf32>
    %c33_i32 = arith.constant 33 : i32
    %211 = tpu.dynamic_rotate %92 by %c33_i32 dim 1 : vector<1x256xf32>, i32 -> vector<1x256xf32>
    %c33_i32_55 = arith.constant 33 : i32
    %212 = tpu.dynamic_rotate %90 by %c33_i32_55 dim 1 : vector<1x256xf32>, i32 -> vector<1x256xf32>
    %c9 = arith.constant 9 : index
    %213 = memref.load %arg1[%c9] : memref<98xf32, #tpu.memory_space<smem>>
    %c58 = arith.constant 58 : index
    %214 = memref.load %arg1[%c58] : memref<98xf32, #tpu.memory_space<smem>>
    %215 = vector.broadcast %213 : f32 to vector<1x256xf32>
    %216 = arith.mulf %215, %211 : vector<1x256xf32>
    %217 = vector.broadcast %214 : f32 to vector<1x256xf32>
    %218 = arith.mulf %217, %212 : vector<1x256xf32>
    %219 = arith.addf %216, %218 : vector<1x256xf32>
    %220 = arith.andi %17, %57 : vector<1x256xi1>
    %cst_56 = arith.constant 0.000000e+00 : f32
    %221 = vector.broadcast %cst_56 : f32 to vector<1x256xf32>
    %222 = arith.select %220, %219, %221 : vector<1x256xi1>, vector<1x256xf32>
    %223 = arith.addf %210, %222 : vector<1x256xf32>
    %c32_i32 = arith.constant 32 : i32
    %224 = tpu.dynamic_rotate %92 by %c32_i32 dim 1 : vector<1x256xf32>, i32 -> vector<1x256xf32>
    %c32_i32_57 = arith.constant 32 : i32
    %225 = tpu.dynamic_rotate %90 by %c32_i32_57 dim 1 : vector<1x256xf32>, i32 -> vector<1x256xf32>
    %c10 = arith.constant 10 : index
    %226 = memref.load %arg1[%c10] : memref<98xf32, #tpu.memory_space<smem>>
    %c59 = arith.constant 59 : index
    %227 = memref.load %arg1[%c59] : memref<98xf32, #tpu.memory_space<smem>>
    %228 = vector.broadcast %226 : f32 to vector<1x256xf32>
    %229 = arith.mulf %228, %224 : vector<1x256xf32>
    %230 = vector.broadcast %227 : f32 to vector<1x256xf32>
    %231 = arith.mulf %230, %225 : vector<1x256xf32>
    %232 = arith.addf %229, %231 : vector<1x256xf32>
    %233 = arith.andi %17, %62 : vector<1x256xi1>
    %cst_58 = arith.constant 0.000000e+00 : f32
    %234 = vector.broadcast %cst_58 : f32 to vector<1x256xf32>
    %235 = arith.select %233, %232, %234 : vector<1x256xi1>, vector<1x256xf32>
    %236 = arith.addf %223, %235 : vector<1x256xf32>
    %c31_i32 = arith.constant 31 : i32
    %237 = tpu.dynamic_rotate %92 by %c31_i32 dim 1 : vector<1x256xf32>, i32 -> vector<1x256xf32>
    %c31_i32_59 = arith.constant 31 : i32
    %238 = tpu.dynamic_rotate %90 by %c31_i32_59 dim 1 : vector<1x256xf32>, i32 -> vector<1x256xf32>
    %c11 = arith.constant 11 : index
    %239 = memref.load %arg1[%c11] : memref<98xf32, #tpu.memory_space<smem>>
    %c60 = arith.constant 60 : index
    %240 = memref.load %arg1[%c60] : memref<98xf32, #tpu.memory_space<smem>>
    %241 = vector.broadcast %239 : f32 to vector<1x256xf32>
    %242 = arith.mulf %241, %237 : vector<1x256xf32>
    %243 = vector.broadcast %240 : f32 to vector<1x256xf32>
    %244 = arith.mulf %243, %238 : vector<1x256xf32>
    %245 = arith.addf %242, %244 : vector<1x256xf32>
    %246 = arith.andi %17, %67 : vector<1x256xi1>
    %cst_60 = arith.constant 0.000000e+00 : f32
    %247 = vector.broadcast %cst_60 : f32 to vector<1x256xf32>
    %248 = arith.select %246, %245, %247 : vector<1x256xi1>, vector<1x256xf32>
    %249 = arith.addf %236, %248 : vector<1x256xf32>
    %c30_i32 = arith.constant 30 : i32
    %250 = tpu.dynamic_rotate %92 by %c30_i32 dim 1 : vector<1x256xf32>, i32 -> vector<1x256xf32>
    %c30_i32_61 = arith.constant 30 : i32
    %251 = tpu.dynamic_rotate %90 by %c30_i32_61 dim 1 : vector<1x256xf32>, i32 -> vector<1x256xf32>
    %c12 = arith.constant 12 : index
    %252 = memref.load %arg1[%c12] : memref<98xf32, #tpu.memory_space<smem>>
    %c61 = arith.constant 61 : index
    %253 = memref.load %arg1[%c61] : memref<98xf32, #tpu.memory_space<smem>>
    %254 = vector.broadcast %252 : f32 to vector<1x256xf32>
    %255 = arith.mulf %254, %250 : vector<1x256xf32>
    %256 = vector.broadcast %253 : f32 to vector<1x256xf32>
    %257 = arith.mulf %256, %251 : vector<1x256xf32>
    %258 = arith.addf %255, %257 : vector<1x256xf32>
    %259 = arith.andi %17, %72 : vector<1x256xi1>
    %cst_62 = arith.constant 0.000000e+00 : f32
    %260 = vector.broadcast %cst_62 : f32 to vector<1x256xf32>
    %261 = arith.select %259, %258, %260 : vector<1x256xi1>, vector<1x256xf32>
    %262 = arith.addf %249, %261 : vector<1x256xf32>
    %c29_i32 = arith.constant 29 : i32
    %263 = tpu.dynamic_rotate %92 by %c29_i32 dim 1 : vector<1x256xf32>, i32 -> vector<1x256xf32>
    %c29_i32_63 = arith.constant 29 : i32
    %264 = tpu.dynamic_rotate %90 by %c29_i32_63 dim 1 : vector<1x256xf32>, i32 -> vector<1x256xf32>
    %c13 = arith.constant 13 : index
    %265 = memref.load %arg1[%c13] : memref<98xf32, #tpu.memory_space<smem>>
    %c62 = arith.constant 62 : index
    %266 = memref.load %arg1[%c62] : memref<98xf32, #tpu.memory_space<smem>>
    %267 = vector.broadcast %265 : f32 to vector<1x256xf32>
    %268 = arith.mulf %267, %263 : vector<1x256xf32>
    %269 = vector.broadcast %266 : f32 to vector<1x256xf32>
    %270 = arith.mulf %269, %264 : vector<1x256xf32>
    %271 = arith.addf %268, %270 : vector<1x256xf32>
    %272 = arith.andi %17, %77 : vector<1x256xi1>
    %cst_64 = arith.constant 0.000000e+00 : f32
    %273 = vector.broadcast %cst_64 : f32 to vector<1x256xf32>
    %274 = arith.select %272, %271, %273 : vector<1x256xi1>, vector<1x256xf32>
    %275 = arith.addf %262, %274 : vector<1x256xf32>
    %c19_i32 = arith.constant 19 : i32
    %276 = tpu.dynamic_rotate %92 by %c19_i32 dim 1 : vector<1x256xf32>, i32 -> vector<1x256xf32>
    %c19_i32_65 = arith.constant 19 : i32
    %277 = tpu.dynamic_rotate %90 by %c19_i32_65 dim 1 : vector<1x256xf32>, i32 -> vector<1x256xf32>
    %c14 = arith.constant 14 : index
    %278 = memref.load %arg1[%c14] : memref<98xf32, #tpu.memory_space<smem>>
    %c63 = arith.constant 63 : index
    %279 = memref.load %arg1[%c63] : memref<98xf32, #tpu.memory_space<smem>>
    %280 = vector.broadcast %278 : f32 to vector<1x256xf32>
    %281 = arith.mulf %280, %276 : vector<1x256xf32>
    %282 = vector.broadcast %279 : f32 to vector<1x256xf32>
    %283 = arith.mulf %282, %277 : vector<1x256xf32>
    %284 = arith.addf %281, %283 : vector<1x256xf32>
    %285 = arith.andi %22, %47 : vector<1x256xi1>
    %cst_66 = arith.constant 0.000000e+00 : f32
    %286 = vector.broadcast %cst_66 : f32 to vector<1x256xf32>
    %287 = arith.select %285, %284, %286 : vector<1x256xi1>, vector<1x256xf32>
    %288 = arith.addf %275, %287 : vector<1x256xf32>
    %c18_i32 = arith.constant 18 : i32
    %289 = tpu.dynamic_rotate %92 by %c18_i32 dim 1 : vector<1x256xf32>, i32 -> vector<1x256xf32>
    %c18_i32_67 = arith.constant 18 : i32
    %290 = tpu.dynamic_rotate %90 by %c18_i32_67 dim 1 : vector<1x256xf32>, i32 -> vector<1x256xf32>
    %c15 = arith.constant 15 : index
    %291 = memref.load %arg1[%c15] : memref<98xf32, #tpu.memory_space<smem>>
    %c64 = arith.constant 64 : index
    %292 = memref.load %arg1[%c64] : memref<98xf32, #tpu.memory_space<smem>>
    %293 = vector.broadcast %291 : f32 to vector<1x256xf32>
    %294 = arith.mulf %293, %289 : vector<1x256xf32>
    %295 = vector.broadcast %292 : f32 to vector<1x256xf32>
    %296 = arith.mulf %295, %290 : vector<1x256xf32>
    %297 = arith.addf %294, %296 : vector<1x256xf32>
    %298 = arith.andi %22, %52 : vector<1x256xi1>
    %cst_68 = arith.constant 0.000000e+00 : f32
    %299 = vector.broadcast %cst_68 : f32 to vector<1x256xf32>
    %300 = arith.select %298, %297, %299 : vector<1x256xi1>, vector<1x256xf32>
    %301 = arith.addf %288, %300 : vector<1x256xf32>
    %c17_i32 = arith.constant 17 : i32
    %302 = tpu.dynamic_rotate %92 by %c17_i32 dim 1 : vector<1x256xf32>, i32 -> vector<1x256xf32>
    %c17_i32_69 = arith.constant 17 : i32
    %303 = tpu.dynamic_rotate %90 by %c17_i32_69 dim 1 : vector<1x256xf32>, i32 -> vector<1x256xf32>
    %c16 = arith.constant 16 : index
    %304 = memref.load %arg1[%c16] : memref<98xf32, #tpu.memory_space<smem>>
    %c65 = arith.constant 65 : index
    %305 = memref.load %arg1[%c65] : memref<98xf32, #tpu.memory_space<smem>>
    %306 = vector.broadcast %304 : f32 to vector<1x256xf32>
    %307 = arith.mulf %306, %302 : vector<1x256xf32>
    %308 = vector.broadcast %305 : f32 to vector<1x256xf32>
    %309 = arith.mulf %308, %303 : vector<1x256xf32>
    %310 = arith.addf %307, %309 : vector<1x256xf32>
    %311 = arith.andi %22, %57 : vector<1x256xi1>
    %cst_70 = arith.constant 0.000000e+00 : f32
    %312 = vector.broadcast %cst_70 : f32 to vector<1x256xf32>
    %313 = arith.select %311, %310, %312 : vector<1x256xi1>, vector<1x256xf32>
    %314 = arith.addf %301, %313 : vector<1x256xf32>
    %c16_i32 = arith.constant 16 : i32
    %315 = tpu.dynamic_rotate %92 by %c16_i32 dim 1 : vector<1x256xf32>, i32 -> vector<1x256xf32>
    %c16_i32_71 = arith.constant 16 : i32
    %316 = tpu.dynamic_rotate %90 by %c16_i32_71 dim 1 : vector<1x256xf32>, i32 -> vector<1x256xf32>
    %c17 = arith.constant 17 : index
    %317 = memref.load %arg1[%c17] : memref<98xf32, #tpu.memory_space<smem>>
    %c66 = arith.constant 66 : index
    %318 = memref.load %arg1[%c66] : memref<98xf32, #tpu.memory_space<smem>>
    %319 = vector.broadcast %317 : f32 to vector<1x256xf32>
    %320 = arith.mulf %319, %315 : vector<1x256xf32>
    %321 = vector.broadcast %318 : f32 to vector<1x256xf32>
    %322 = arith.mulf %321, %316 : vector<1x256xf32>
    %323 = arith.addf %320, %322 : vector<1x256xf32>
    %324 = arith.andi %22, %62 : vector<1x256xi1>
    %cst_72 = arith.constant 0.000000e+00 : f32
    %325 = vector.broadcast %cst_72 : f32 to vector<1x256xf32>
    %326 = arith.select %324, %323, %325 : vector<1x256xi1>, vector<1x256xf32>
    %327 = arith.addf %314, %326 : vector<1x256xf32>
    %c15_i32 = arith.constant 15 : i32
    %328 = tpu.dynamic_rotate %92 by %c15_i32 dim 1 : vector<1x256xf32>, i32 -> vector<1x256xf32>
    %c15_i32_73 = arith.constant 15 : i32
    %329 = tpu.dynamic_rotate %90 by %c15_i32_73 dim 1 : vector<1x256xf32>, i32 -> vector<1x256xf32>
    %c18 = arith.constant 18 : index
    %330 = memref.load %arg1[%c18] : memref<98xf32, #tpu.memory_space<smem>>
    %c67 = arith.constant 67 : index
    %331 = memref.load %arg1[%c67] : memref<98xf32, #tpu.memory_space<smem>>
    %332 = vector.broadcast %330 : f32 to vector<1x256xf32>
    %333 = arith.mulf %332, %328 : vector<1x256xf32>
    %334 = vector.broadcast %331 : f32 to vector<1x256xf32>
    %335 = arith.mulf %334, %329 : vector<1x256xf32>
    %336 = arith.addf %333, %335 : vector<1x256xf32>
    %337 = arith.andi %22, %67 : vector<1x256xi1>
    %cst_74 = arith.constant 0.000000e+00 : f32
    %338 = vector.broadcast %cst_74 : f32 to vector<1x256xf32>
    %339 = arith.select %337, %336, %338 : vector<1x256xi1>, vector<1x256xf32>
    %340 = arith.addf %327, %339 : vector<1x256xf32>
    %c14_i32 = arith.constant 14 : i32
    %341 = tpu.dynamic_rotate %92 by %c14_i32 dim 1 : vector<1x256xf32>, i32 -> vector<1x256xf32>
    %c14_i32_75 = arith.constant 14 : i32
    %342 = tpu.dynamic_rotate %90 by %c14_i32_75 dim 1 : vector<1x256xf32>, i32 -> vector<1x256xf32>
    %c19 = arith.constant 19 : index
    %343 = memref.load %arg1[%c19] : memref<98xf32, #tpu.memory_space<smem>>
    %c68 = arith.constant 68 : index
    %344 = memref.load %arg1[%c68] : memref<98xf32, #tpu.memory_space<smem>>
    %345 = vector.broadcast %343 : f32 to vector<1x256xf32>
    %346 = arith.mulf %345, %341 : vector<1x256xf32>
    %347 = vector.broadcast %344 : f32 to vector<1x256xf32>
    %348 = arith.mulf %347, %342 : vector<1x256xf32>
    %349 = arith.addf %346, %348 : vector<1x256xf32>
    %350 = arith.andi %22, %72 : vector<1x256xi1>
    %cst_76 = arith.constant 0.000000e+00 : f32
    %351 = vector.broadcast %cst_76 : f32 to vector<1x256xf32>
    %352 = arith.select %350, %349, %351 : vector<1x256xi1>, vector<1x256xf32>
    %353 = arith.addf %340, %352 : vector<1x256xf32>
    %c13_i32 = arith.constant 13 : i32
    %354 = tpu.dynamic_rotate %92 by %c13_i32 dim 1 : vector<1x256xf32>, i32 -> vector<1x256xf32>
    %c13_i32_77 = arith.constant 13 : i32
    %355 = tpu.dynamic_rotate %90 by %c13_i32_77 dim 1 : vector<1x256xf32>, i32 -> vector<1x256xf32>
    %c20 = arith.constant 20 : index
    %356 = memref.load %arg1[%c20] : memref<98xf32, #tpu.memory_space<smem>>
    %c69 = arith.constant 69 : index
    %357 = memref.load %arg1[%c69] : memref<98xf32, #tpu.memory_space<smem>>
    %358 = vector.broadcast %356 : f32 to vector<1x256xf32>
    %359 = arith.mulf %358, %354 : vector<1x256xf32>
    %360 = vector.broadcast %357 : f32 to vector<1x256xf32>
    %361 = arith.mulf %360, %355 : vector<1x256xf32>
    %362 = arith.addf %359, %361 : vector<1x256xf32>
    %363 = arith.andi %22, %77 : vector<1x256xi1>
    %cst_78 = arith.constant 0.000000e+00 : f32
    %364 = vector.broadcast %cst_78 : f32 to vector<1x256xf32>
    %365 = arith.select %363, %362, %364 : vector<1x256xi1>, vector<1x256xf32>
    %366 = arith.addf %353, %365 : vector<1x256xf32>
    %c3_i32 = arith.constant 3 : i32
    %367 = tpu.dynamic_rotate %92 by %c3_i32 dim 1 : vector<1x256xf32>, i32 -> vector<1x256xf32>
    %c3_i32_79 = arith.constant 3 : i32
    %368 = tpu.dynamic_rotate %90 by %c3_i32_79 dim 1 : vector<1x256xf32>, i32 -> vector<1x256xf32>
    %c21 = arith.constant 21 : index
    %369 = memref.load %arg1[%c21] : memref<98xf32, #tpu.memory_space<smem>>
    %c70 = arith.constant 70 : index
    %370 = memref.load %arg1[%c70] : memref<98xf32, #tpu.memory_space<smem>>
    %371 = vector.broadcast %369 : f32 to vector<1x256xf32>
    %372 = arith.mulf %371, %367 : vector<1x256xf32>
    %373 = vector.broadcast %370 : f32 to vector<1x256xf32>
    %374 = arith.mulf %373, %368 : vector<1x256xf32>
    %375 = arith.addf %372, %374 : vector<1x256xf32>
    %376 = arith.andi %27, %47 : vector<1x256xi1>
    %cst_80 = arith.constant 0.000000e+00 : f32
    %377 = vector.broadcast %cst_80 : f32 to vector<1x256xf32>
    %378 = arith.select %376, %375, %377 : vector<1x256xi1>, vector<1x256xf32>
    %379 = arith.addf %366, %378 : vector<1x256xf32>
    %c2_i32 = arith.constant 2 : i32
    %380 = tpu.dynamic_rotate %92 by %c2_i32 dim 1 : vector<1x256xf32>, i32 -> vector<1x256xf32>
    %c2_i32_81 = arith.constant 2 : i32
    %381 = tpu.dynamic_rotate %90 by %c2_i32_81 dim 1 : vector<1x256xf32>, i32 -> vector<1x256xf32>
    %c22 = arith.constant 22 : index
    %382 = memref.load %arg1[%c22] : memref<98xf32, #tpu.memory_space<smem>>
    %c71 = arith.constant 71 : index
    %383 = memref.load %arg1[%c71] : memref<98xf32, #tpu.memory_space<smem>>
    %384 = vector.broadcast %382 : f32 to vector<1x256xf32>
    %385 = arith.mulf %384, %380 : vector<1x256xf32>
    %386 = vector.broadcast %383 : f32 to vector<1x256xf32>
    %387 = arith.mulf %386, %381 : vector<1x256xf32>
    %388 = arith.addf %385, %387 : vector<1x256xf32>
    %389 = arith.andi %27, %52 : vector<1x256xi1>
    %cst_82 = arith.constant 0.000000e+00 : f32
    %390 = vector.broadcast %cst_82 : f32 to vector<1x256xf32>
    %391 = arith.select %389, %388, %390 : vector<1x256xi1>, vector<1x256xf32>
    %392 = arith.addf %379, %391 : vector<1x256xf32>
    %c1_i32_83 = arith.constant 1 : i32
    %393 = tpu.dynamic_rotate %92 by %c1_i32_83 dim 1 : vector<1x256xf32>, i32 -> vector<1x256xf32>
    %c1_i32_84 = arith.constant 1 : i32
    %394 = tpu.dynamic_rotate %90 by %c1_i32_84 dim 1 : vector<1x256xf32>, i32 -> vector<1x256xf32>
    %c23 = arith.constant 23 : index
    %395 = memref.load %arg1[%c23] : memref<98xf32, #tpu.memory_space<smem>>
    %c72 = arith.constant 72 : index
    %396 = memref.load %arg1[%c72] : memref<98xf32, #tpu.memory_space<smem>>
    %397 = vector.broadcast %395 : f32 to vector<1x256xf32>
    %398 = arith.mulf %397, %393 : vector<1x256xf32>
    %399 = vector.broadcast %396 : f32 to vector<1x256xf32>
    %400 = arith.mulf %399, %394 : vector<1x256xf32>
    %401 = arith.addf %398, %400 : vector<1x256xf32>
    %402 = arith.andi %27, %57 : vector<1x256xi1>
    %cst_85 = arith.constant 0.000000e+00 : f32
    %403 = vector.broadcast %cst_85 : f32 to vector<1x256xf32>
    %404 = arith.select %402, %401, %403 : vector<1x256xi1>, vector<1x256xf32>
    %405 = arith.addf %392, %404 : vector<1x256xf32>
    %c24 = arith.constant 24 : index
    %406 = memref.load %arg1[%c24] : memref<98xf32, #tpu.memory_space<smem>>
    %c73 = arith.constant 73 : index
    %407 = memref.load %arg1[%c73] : memref<98xf32, #tpu.memory_space<smem>>
    %408 = vector.broadcast %406 : f32 to vector<1x256xf32>
    %409 = arith.mulf %408, %92 : vector<1x256xf32>
    %410 = vector.broadcast %407 : f32 to vector<1x256xf32>
    %411 = arith.mulf %410, %90 : vector<1x256xf32>
    %412 = arith.addf %409, %411 : vector<1x256xf32>
    %413 = arith.andi %27, %62 : vector<1x256xi1>
    %cst_86 = arith.constant 0.000000e+00 : f32
    %414 = vector.broadcast %cst_86 : f32 to vector<1x256xf32>
    %415 = arith.select %413, %412, %414 : vector<1x256xi1>, vector<1x256xf32>
    %416 = arith.addf %405, %415 : vector<1x256xf32>
    %c255_i32 = arith.constant 255 : i32
    %417 = tpu.dynamic_rotate %92 by %c255_i32 dim 1 : vector<1x256xf32>, i32 -> vector<1x256xf32>
    %c255_i32_87 = arith.constant 255 : i32
    %418 = tpu.dynamic_rotate %90 by %c255_i32_87 dim 1 : vector<1x256xf32>, i32 -> vector<1x256xf32>
    %c25 = arith.constant 25 : index
    %419 = memref.load %arg1[%c25] : memref<98xf32, #tpu.memory_space<smem>>
    %c74 = arith.constant 74 : index
    %420 = memref.load %arg1[%c74] : memref<98xf32, #tpu.memory_space<smem>>
    %421 = vector.broadcast %419 : f32 to vector<1x256xf32>
    %422 = arith.mulf %421, %417 : vector<1x256xf32>
    %423 = vector.broadcast %420 : f32 to vector<1x256xf32>
    %424 = arith.mulf %423, %418 : vector<1x256xf32>
    %425 = arith.addf %422, %424 : vector<1x256xf32>
    %426 = arith.andi %27, %67 : vector<1x256xi1>
    %cst_88 = arith.constant 0.000000e+00 : f32
    %427 = vector.broadcast %cst_88 : f32 to vector<1x256xf32>
    %428 = arith.select %426, %425, %427 : vector<1x256xi1>, vector<1x256xf32>
    %429 = arith.addf %416, %428 : vector<1x256xf32>
    %c254_i32 = arith.constant 254 : i32
    %430 = tpu.dynamic_rotate %92 by %c254_i32 dim 1 : vector<1x256xf32>, i32 -> vector<1x256xf32>
    %c254_i32_89 = arith.constant 254 : i32
    %431 = tpu.dynamic_rotate %90 by %c254_i32_89 dim 1 : vector<1x256xf32>, i32 -> vector<1x256xf32>
    %c26 = arith.constant 26 : index
    %432 = memref.load %arg1[%c26] : memref<98xf32, #tpu.memory_space<smem>>
    %c75 = arith.constant 75 : index
    %433 = memref.load %arg1[%c75] : memref<98xf32, #tpu.memory_space<smem>>
    %434 = vector.broadcast %432 : f32 to vector<1x256xf32>
    %435 = arith.mulf %434, %430 : vector<1x256xf32>
    %436 = vector.broadcast %433 : f32 to vector<1x256xf32>
    %437 = arith.mulf %436, %431 : vector<1x256xf32>
    %438 = arith.addf %435, %437 : vector<1x256xf32>
    %439 = arith.andi %27, %72 : vector<1x256xi1>
    %cst_90 = arith.constant 0.000000e+00 : f32
    %440 = vector.broadcast %cst_90 : f32 to vector<1x256xf32>
    %441 = arith.select %439, %438, %440 : vector<1x256xi1>, vector<1x256xf32>
    %442 = arith.addf %429, %441 : vector<1x256xf32>
    %c253_i32 = arith.constant 253 : i32
    %443 = tpu.dynamic_rotate %92 by %c253_i32 dim 1 : vector<1x256xf32>, i32 -> vector<1x256xf32>
    %c253_i32_91 = arith.constant 253 : i32
    %444 = tpu.dynamic_rotate %90 by %c253_i32_91 dim 1 : vector<1x256xf32>, i32 -> vector<1x256xf32>
    %c27 = arith.constant 27 : index
    %445 = memref.load %arg1[%c27] : memref<98xf32, #tpu.memory_space<smem>>
    %c76 = arith.constant 76 : index
    %446 = memref.load %arg1[%c76] : memref<98xf32, #tpu.memory_space<smem>>
    %447 = vector.broadcast %445 : f32 to vector<1x256xf32>
    %448 = arith.mulf %447, %443 : vector<1x256xf32>
    %449 = vector.broadcast %446 : f32 to vector<1x256xf32>
    %450 = arith.mulf %449, %444 : vector<1x256xf32>
    %451 = arith.addf %448, %450 : vector<1x256xf32>
    %452 = arith.andi %27, %77 : vector<1x256xi1>
    %cst_92 = arith.constant 0.000000e+00 : f32
    %453 = vector.broadcast %cst_92 : f32 to vector<1x256xf32>
    %454 = arith.select %452, %451, %453 : vector<1x256xi1>, vector<1x256xf32>
    %455 = arith.addf %442, %454 : vector<1x256xf32>
    %c243_i32 = arith.constant 243 : i32
    %456 = tpu.dynamic_rotate %92 by %c243_i32 dim 1 : vector<1x256xf32>, i32 -> vector<1x256xf32>
    %c243_i32_93 = arith.constant 243 : i32
    %457 = tpu.dynamic_rotate %90 by %c243_i32_93 dim 1 : vector<1x256xf32>, i32 -> vector<1x256xf32>
    %c28 = arith.constant 28 : index
    %458 = memref.load %arg1[%c28] : memref<98xf32, #tpu.memory_space<smem>>
    %c77 = arith.constant 77 : index
    %459 = memref.load %arg1[%c77] : memref<98xf32, #tpu.memory_space<smem>>
    %460 = vector.broadcast %458 : f32 to vector<1x256xf32>
    %461 = arith.mulf %460, %456 : vector<1x256xf32>
    %462 = vector.broadcast %459 : f32 to vector<1x256xf32>
    %463 = arith.mulf %462, %457 : vector<1x256xf32>
    %464 = arith.addf %461, %463 : vector<1x256xf32>
    %465 = arith.andi %32, %47 : vector<1x256xi1>
    %cst_94 = arith.constant 0.000000e+00 : f32
    %466 = vector.broadcast %cst_94 : f32 to vector<1x256xf32>
    %467 = arith.select %465, %464, %466 : vector<1x256xi1>, vector<1x256xf32>
    %468 = arith.addf %455, %467 : vector<1x256xf32>
    %c242_i32 = arith.constant 242 : i32
    %469 = tpu.dynamic_rotate %92 by %c242_i32 dim 1 : vector<1x256xf32>, i32 -> vector<1x256xf32>
    %c242_i32_95 = arith.constant 242 : i32
    %470 = tpu.dynamic_rotate %90 by %c242_i32_95 dim 1 : vector<1x256xf32>, i32 -> vector<1x256xf32>
    %c29 = arith.constant 29 : index
    %471 = memref.load %arg1[%c29] : memref<98xf32, #tpu.memory_space<smem>>
    %c78 = arith.constant 78 : index
    %472 = memref.load %arg1[%c78] : memref<98xf32, #tpu.memory_space<smem>>
    %473 = vector.broadcast %471 : f32 to vector<1x256xf32>
    %474 = arith.mulf %473, %469 : vector<1x256xf32>
    %475 = vector.broadcast %472 : f32 to vector<1x256xf32>
    %476 = arith.mulf %475, %470 : vector<1x256xf32>
    %477 = arith.addf %474, %476 : vector<1x256xf32>
    %478 = arith.andi %32, %52 : vector<1x256xi1>
    %cst_96 = arith.constant 0.000000e+00 : f32
    %479 = vector.broadcast %cst_96 : f32 to vector<1x256xf32>
    %480 = arith.select %478, %477, %479 : vector<1x256xi1>, vector<1x256xf32>
    %481 = arith.addf %468, %480 : vector<1x256xf32>
    %c241_i32 = arith.constant 241 : i32
    %482 = tpu.dynamic_rotate %92 by %c241_i32 dim 1 : vector<1x256xf32>, i32 -> vector<1x256xf32>
    %c241_i32_97 = arith.constant 241 : i32
    %483 = tpu.dynamic_rotate %90 by %c241_i32_97 dim 1 : vector<1x256xf32>, i32 -> vector<1x256xf32>
    %c30 = arith.constant 30 : index
    %484 = memref.load %arg1[%c30] : memref<98xf32, #tpu.memory_space<smem>>
    %c79 = arith.constant 79 : index
    %485 = memref.load %arg1[%c79] : memref<98xf32, #tpu.memory_space<smem>>
    %486 = vector.broadcast %484 : f32 to vector<1x256xf32>
    %487 = arith.mulf %486, %482 : vector<1x256xf32>
    %488 = vector.broadcast %485 : f32 to vector<1x256xf32>
    %489 = arith.mulf %488, %483 : vector<1x256xf32>
    %490 = arith.addf %487, %489 : vector<1x256xf32>
    %491 = arith.andi %32, %57 : vector<1x256xi1>
    %cst_98 = arith.constant 0.000000e+00 : f32
    %492 = vector.broadcast %cst_98 : f32 to vector<1x256xf32>
    %493 = arith.select %491, %490, %492 : vector<1x256xi1>, vector<1x256xf32>
    %494 = arith.addf %481, %493 : vector<1x256xf32>
    %c240_i32 = arith.constant 240 : i32
    %495 = tpu.dynamic_rotate %92 by %c240_i32 dim 1 : vector<1x256xf32>, i32 -> vector<1x256xf32>
    %c240_i32_99 = arith.constant 240 : i32
    %496 = tpu.dynamic_rotate %90 by %c240_i32_99 dim 1 : vector<1x256xf32>, i32 -> vector<1x256xf32>
    %c31 = arith.constant 31 : index
    %497 = memref.load %arg1[%c31] : memref<98xf32, #tpu.memory_space<smem>>
    %c80 = arith.constant 80 : index
    %498 = memref.load %arg1[%c80] : memref<98xf32, #tpu.memory_space<smem>>
    %499 = vector.broadcast %497 : f32 to vector<1x256xf32>
    %500 = arith.mulf %499, %495 : vector<1x256xf32>
    %501 = vector.broadcast %498 : f32 to vector<1x256xf32>
    %502 = arith.mulf %501, %496 : vector<1x256xf32>
    %503 = arith.addf %500, %502 : vector<1x256xf32>
    %504 = arith.andi %32, %62 : vector<1x256xi1>
    %cst_100 = arith.constant 0.000000e+00 : f32
    %505 = vector.broadcast %cst_100 : f32 to vector<1x256xf32>
    %506 = arith.select %504, %503, %505 : vector<1x256xi1>, vector<1x256xf32>
    %507 = arith.addf %494, %506 : vector<1x256xf32>
    %c239_i32 = arith.constant 239 : i32
    %508 = tpu.dynamic_rotate %92 by %c239_i32 dim 1 : vector<1x256xf32>, i32 -> vector<1x256xf32>
    %c239_i32_101 = arith.constant 239 : i32
    %509 = tpu.dynamic_rotate %90 by %c239_i32_101 dim 1 : vector<1x256xf32>, i32 -> vector<1x256xf32>
    %c32 = arith.constant 32 : index
    %510 = memref.load %arg1[%c32] : memref<98xf32, #tpu.memory_space<smem>>
    %c81 = arith.constant 81 : index
    %511 = memref.load %arg1[%c81] : memref<98xf32, #tpu.memory_space<smem>>
    %512 = vector.broadcast %510 : f32 to vector<1x256xf32>
    %513 = arith.mulf %512, %508 : vector<1x256xf32>
    %514 = vector.broadcast %511 : f32 to vector<1x256xf32>
    %515 = arith.mulf %514, %509 : vector<1x256xf32>
    %516 = arith.addf %513, %515 : vector<1x256xf32>
    %517 = arith.andi %32, %67 : vector<1x256xi1>
    %cst_102 = arith.constant 0.000000e+00 : f32
    %518 = vector.broadcast %cst_102 : f32 to vector<1x256xf32>
    %519 = arith.select %517, %516, %518 : vector<1x256xi1>, vector<1x256xf32>
    %520 = arith.addf %507, %519 : vector<1x256xf32>
    %c238_i32 = arith.constant 238 : i32
    %521 = tpu.dynamic_rotate %92 by %c238_i32 dim 1 : vector<1x256xf32>, i32 -> vector<1x256xf32>
    %c238_i32_103 = arith.constant 238 : i32
    %522 = tpu.dynamic_rotate %90 by %c238_i32_103 dim 1 : vector<1x256xf32>, i32 -> vector<1x256xf32>
    %c33 = arith.constant 33 : index
    %523 = memref.load %arg1[%c33] : memref<98xf32, #tpu.memory_space<smem>>
    %c82 = arith.constant 82 : index
    %524 = memref.load %arg1[%c82] : memref<98xf32, #tpu.memory_space<smem>>
    %525 = vector.broadcast %523 : f32 to vector<1x256xf32>
    %526 = arith.mulf %525, %521 : vector<1x256xf32>
    %527 = vector.broadcast %524 : f32 to vector<1x256xf32>
    %528 = arith.mulf %527, %522 : vector<1x256xf32>
    %529 = arith.addf %526, %528 : vector<1x256xf32>
    %530 = arith.andi %32, %72 : vector<1x256xi1>
    %cst_104 = arith.constant 0.000000e+00 : f32
    %531 = vector.broadcast %cst_104 : f32 to vector<1x256xf32>
    %532 = arith.select %530, %529, %531 : vector<1x256xi1>, vector<1x256xf32>
    %533 = arith.addf %520, %532 : vector<1x256xf32>
    %c237_i32 = arith.constant 237 : i32
    %534 = tpu.dynamic_rotate %92 by %c237_i32 dim 1 : vector<1x256xf32>, i32 -> vector<1x256xf32>
    %c237_i32_105 = arith.constant 237 : i32
    %535 = tpu.dynamic_rotate %90 by %c237_i32_105 dim 1 : vector<1x256xf32>, i32 -> vector<1x256xf32>
    %c34 = arith.constant 34 : index
    %536 = memref.load %arg1[%c34] : memref<98xf32, #tpu.memory_space<smem>>
    %c83 = arith.constant 83 : index
    %537 = memref.load %arg1[%c83] : memref<98xf32, #tpu.memory_space<smem>>
    %538 = vector.broadcast %536 : f32 to vector<1x256xf32>
    %539 = arith.mulf %538, %534 : vector<1x256xf32>
    %540 = vector.broadcast %537 : f32 to vector<1x256xf32>
    %541 = arith.mulf %540, %535 : vector<1x256xf32>
    %542 = arith.addf %539, %541 : vector<1x256xf32>
    %543 = arith.andi %32, %77 : vector<1x256xi1>
    %cst_106 = arith.constant 0.000000e+00 : f32
    %544 = vector.broadcast %cst_106 : f32 to vector<1x256xf32>
    %545 = arith.select %543, %542, %544 : vector<1x256xi1>, vector<1x256xf32>
    %546 = arith.addf %533, %545 : vector<1x256xf32>
    %c227_i32 = arith.constant 227 : i32
    %547 = tpu.dynamic_rotate %92 by %c227_i32 dim 1 : vector<1x256xf32>, i32 -> vector<1x256xf32>
    %c227_i32_107 = arith.constant 227 : i32
    %548 = tpu.dynamic_rotate %90 by %c227_i32_107 dim 1 : vector<1x256xf32>, i32 -> vector<1x256xf32>
    %c35 = arith.constant 35 : index
    %549 = memref.load %arg1[%c35] : memref<98xf32, #tpu.memory_space<smem>>
    %c84 = arith.constant 84 : index
    %550 = memref.load %arg1[%c84] : memref<98xf32, #tpu.memory_space<smem>>
    %551 = vector.broadcast %549 : f32 to vector<1x256xf32>
    %552 = arith.mulf %551, %547 : vector<1x256xf32>
    %553 = vector.broadcast %550 : f32 to vector<1x256xf32>
    %554 = arith.mulf %553, %548 : vector<1x256xf32>
    %555 = arith.addf %552, %554 : vector<1x256xf32>
    %556 = arith.andi %37, %47 : vector<1x256xi1>
    %cst_108 = arith.constant 0.000000e+00 : f32
    %557 = vector.broadcast %cst_108 : f32 to vector<1x256xf32>
    %558 = arith.select %556, %555, %557 : vector<1x256xi1>, vector<1x256xf32>
    %559 = arith.addf %546, %558 : vector<1x256xf32>
    %c226_i32 = arith.constant 226 : i32
    %560 = tpu.dynamic_rotate %92 by %c226_i32 dim 1 : vector<1x256xf32>, i32 -> vector<1x256xf32>
    %c226_i32_109 = arith.constant 226 : i32
    %561 = tpu.dynamic_rotate %90 by %c226_i32_109 dim 1 : vector<1x256xf32>, i32 -> vector<1x256xf32>
    %c36 = arith.constant 36 : index
    %562 = memref.load %arg1[%c36] : memref<98xf32, #tpu.memory_space<smem>>
    %c85 = arith.constant 85 : index
    %563 = memref.load %arg1[%c85] : memref<98xf32, #tpu.memory_space<smem>>
    %564 = vector.broadcast %562 : f32 to vector<1x256xf32>
    %565 = arith.mulf %564, %560 : vector<1x256xf32>
    %566 = vector.broadcast %563 : f32 to vector<1x256xf32>
    %567 = arith.mulf %566, %561 : vector<1x256xf32>
    %568 = arith.addf %565, %567 : vector<1x256xf32>
    %569 = arith.andi %37, %52 : vector<1x256xi1>
    %cst_110 = arith.constant 0.000000e+00 : f32
    %570 = vector.broadcast %cst_110 : f32 to vector<1x256xf32>
    %571 = arith.select %569, %568, %570 : vector<1x256xi1>, vector<1x256xf32>
    %572 = arith.addf %559, %571 : vector<1x256xf32>
    %c225_i32 = arith.constant 225 : i32
    %573 = tpu.dynamic_rotate %92 by %c225_i32 dim 1 : vector<1x256xf32>, i32 -> vector<1x256xf32>
    %c225_i32_111 = arith.constant 225 : i32
    %574 = tpu.dynamic_rotate %90 by %c225_i32_111 dim 1 : vector<1x256xf32>, i32 -> vector<1x256xf32>
    %c37 = arith.constant 37 : index
    %575 = memref.load %arg1[%c37] : memref<98xf32, #tpu.memory_space<smem>>
    %c86 = arith.constant 86 : index
    %576 = memref.load %arg1[%c86] : memref<98xf32, #tpu.memory_space<smem>>
    %577 = vector.broadcast %575 : f32 to vector<1x256xf32>
    %578 = arith.mulf %577, %573 : vector<1x256xf32>
    %579 = vector.broadcast %576 : f32 to vector<1x256xf32>
    %580 = arith.mulf %579, %574 : vector<1x256xf32>
    %581 = arith.addf %578, %580 : vector<1x256xf32>
    %582 = arith.andi %37, %57 : vector<1x256xi1>
    %cst_112 = arith.constant 0.000000e+00 : f32
    %583 = vector.broadcast %cst_112 : f32 to vector<1x256xf32>
    %584 = arith.select %582, %581, %583 : vector<1x256xi1>, vector<1x256xf32>
    %585 = arith.addf %572, %584 : vector<1x256xf32>
    %c224_i32 = arith.constant 224 : i32
    %586 = tpu.dynamic_rotate %92 by %c224_i32 dim 1 : vector<1x256xf32>, i32 -> vector<1x256xf32>
    %c224_i32_113 = arith.constant 224 : i32
    %587 = tpu.dynamic_rotate %90 by %c224_i32_113 dim 1 : vector<1x256xf32>, i32 -> vector<1x256xf32>
    %c38 = arith.constant 38 : index
    %588 = memref.load %arg1[%c38] : memref<98xf32, #tpu.memory_space<smem>>
    %c87 = arith.constant 87 : index
    %589 = memref.load %arg1[%c87] : memref<98xf32, #tpu.memory_space<smem>>
    %590 = vector.broadcast %588 : f32 to vector<1x256xf32>
    %591 = arith.mulf %590, %586 : vector<1x256xf32>
    %592 = vector.broadcast %589 : f32 to vector<1x256xf32>
    %593 = arith.mulf %592, %587 : vector<1x256xf32>
    %594 = arith.addf %591, %593 : vector<1x256xf32>
    %595 = arith.andi %37, %62 : vector<1x256xi1>
    %cst_114 = arith.constant 0.000000e+00 : f32
    %596 = vector.broadcast %cst_114 : f32 to vector<1x256xf32>
    %597 = arith.select %595, %594, %596 : vector<1x256xi1>, vector<1x256xf32>
    %598 = arith.addf %585, %597 : vector<1x256xf32>
    %c223_i32 = arith.constant 223 : i32
    %599 = tpu.dynamic_rotate %92 by %c223_i32 dim 1 : vector<1x256xf32>, i32 -> vector<1x256xf32>
    %c223_i32_115 = arith.constant 223 : i32
    %600 = tpu.dynamic_rotate %90 by %c223_i32_115 dim 1 : vector<1x256xf32>, i32 -> vector<1x256xf32>
    %c39 = arith.constant 39 : index
    %601 = memref.load %arg1[%c39] : memref<98xf32, #tpu.memory_space<smem>>
    %c88 = arith.constant 88 : index
    %602 = memref.load %arg1[%c88] : memref<98xf32, #tpu.memory_space<smem>>
    %603 = vector.broadcast %601 : f32 to vector<1x256xf32>
    %604 = arith.mulf %603, %599 : vector<1x256xf32>
    %605 = vector.broadcast %602 : f32 to vector<1x256xf32>
    %606 = arith.mulf %605, %600 : vector<1x256xf32>
    %607 = arith.addf %604, %606 : vector<1x256xf32>
    %608 = arith.andi %37, %67 : vector<1x256xi1>
    %cst_116 = arith.constant 0.000000e+00 : f32
    %609 = vector.broadcast %cst_116 : f32 to vector<1x256xf32>
    %610 = arith.select %608, %607, %609 : vector<1x256xi1>, vector<1x256xf32>
    %611 = arith.addf %598, %610 : vector<1x256xf32>
    %c222_i32 = arith.constant 222 : i32
    %612 = tpu.dynamic_rotate %92 by %c222_i32 dim 1 : vector<1x256xf32>, i32 -> vector<1x256xf32>
    %c222_i32_117 = arith.constant 222 : i32
    %613 = tpu.dynamic_rotate %90 by %c222_i32_117 dim 1 : vector<1x256xf32>, i32 -> vector<1x256xf32>
    %c40 = arith.constant 40 : index
    %614 = memref.load %arg1[%c40] : memref<98xf32, #tpu.memory_space<smem>>
    %c89 = arith.constant 89 : index
    %615 = memref.load %arg1[%c89] : memref<98xf32, #tpu.memory_space<smem>>
    %616 = vector.broadcast %614 : f32 to vector<1x256xf32>
    %617 = arith.mulf %616, %612 : vector<1x256xf32>
    %618 = vector.broadcast %615 : f32 to vector<1x256xf32>
    %619 = arith.mulf %618, %613 : vector<1x256xf32>
    %620 = arith.addf %617, %619 : vector<1x256xf32>
    %621 = arith.andi %37, %72 : vector<1x256xi1>
    %cst_118 = arith.constant 0.000000e+00 : f32
    %622 = vector.broadcast %cst_118 : f32 to vector<1x256xf32>
    %623 = arith.select %621, %620, %622 : vector<1x256xi1>, vector<1x256xf32>
    %624 = arith.addf %611, %623 : vector<1x256xf32>
    %c221_i32 = arith.constant 221 : i32
    %625 = tpu.dynamic_rotate %92 by %c221_i32 dim 1 : vector<1x256xf32>, i32 -> vector<1x256xf32>
    %c221_i32_119 = arith.constant 221 : i32
    %626 = tpu.dynamic_rotate %90 by %c221_i32_119 dim 1 : vector<1x256xf32>, i32 -> vector<1x256xf32>
    %c41 = arith.constant 41 : index
    %627 = memref.load %arg1[%c41] : memref<98xf32, #tpu.memory_space<smem>>
    %c90 = arith.constant 90 : index
    %628 = memref.load %arg1[%c90] : memref<98xf32, #tpu.memory_space<smem>>
    %629 = vector.broadcast %627 : f32 to vector<1x256xf32>
    %630 = arith.mulf %629, %625 : vector<1x256xf32>
    %631 = vector.broadcast %628 : f32 to vector<1x256xf32>
    %632 = arith.mulf %631, %626 : vector<1x256xf32>
    %633 = arith.addf %630, %632 : vector<1x256xf32>
    %634 = arith.andi %37, %77 : vector<1x256xi1>
    %cst_120 = arith.constant 0.000000e+00 : f32
    %635 = vector.broadcast %cst_120 : f32 to vector<1x256xf32>
    %636 = arith.select %634, %633, %635 : vector<1x256xi1>, vector<1x256xf32>
    %637 = arith.addf %624, %636 : vector<1x256xf32>
    %c211_i32 = arith.constant 211 : i32
    %638 = tpu.dynamic_rotate %92 by %c211_i32 dim 1 : vector<1x256xf32>, i32 -> vector<1x256xf32>
    %c211_i32_121 = arith.constant 211 : i32
    %639 = tpu.dynamic_rotate %90 by %c211_i32_121 dim 1 : vector<1x256xf32>, i32 -> vector<1x256xf32>
    %c42 = arith.constant 42 : index
    %640 = memref.load %arg1[%c42] : memref<98xf32, #tpu.memory_space<smem>>
    %c91 = arith.constant 91 : index
    %641 = memref.load %arg1[%c91] : memref<98xf32, #tpu.memory_space<smem>>
    %642 = vector.broadcast %640 : f32 to vector<1x256xf32>
    %643 = arith.mulf %642, %638 : vector<1x256xf32>
    %644 = vector.broadcast %641 : f32 to vector<1x256xf32>
    %645 = arith.mulf %644, %639 : vector<1x256xf32>
    %646 = arith.addf %643, %645 : vector<1x256xf32>
    %647 = arith.andi %42, %47 : vector<1x256xi1>
    %cst_122 = arith.constant 0.000000e+00 : f32
    %648 = vector.broadcast %cst_122 : f32 to vector<1x256xf32>
    %649 = arith.select %647, %646, %648 : vector<1x256xi1>, vector<1x256xf32>
    %650 = arith.addf %637, %649 : vector<1x256xf32>
    %c210_i32 = arith.constant 210 : i32
    %651 = tpu.dynamic_rotate %92 by %c210_i32 dim 1 : vector<1x256xf32>, i32 -> vector<1x256xf32>
    %c210_i32_123 = arith.constant 210 : i32
    %652 = tpu.dynamic_rotate %90 by %c210_i32_123 dim 1 : vector<1x256xf32>, i32 -> vector<1x256xf32>
    %c43 = arith.constant 43 : index
    %653 = memref.load %arg1[%c43] : memref<98xf32, #tpu.memory_space<smem>>
    %c92 = arith.constant 92 : index
    %654 = memref.load %arg1[%c92] : memref<98xf32, #tpu.memory_space<smem>>
    %655 = vector.broadcast %653 : f32 to vector<1x256xf32>
    %656 = arith.mulf %655, %651 : vector<1x256xf32>
    %657 = vector.broadcast %654 : f32 to vector<1x256xf32>
    %658 = arith.mulf %657, %652 : vector<1x256xf32>
    %659 = arith.addf %656, %658 : vector<1x256xf32>
    %660 = arith.andi %42, %52 : vector<1x256xi1>
    %cst_124 = arith.constant 0.000000e+00 : f32
    %661 = vector.broadcast %cst_124 : f32 to vector<1x256xf32>
    %662 = arith.select %660, %659, %661 : vector<1x256xi1>, vector<1x256xf32>
    %663 = arith.addf %650, %662 : vector<1x256xf32>
    %c209_i32 = arith.constant 209 : i32
    %664 = tpu.dynamic_rotate %92 by %c209_i32 dim 1 : vector<1x256xf32>, i32 -> vector<1x256xf32>
    %c209_i32_125 = arith.constant 209 : i32
    %665 = tpu.dynamic_rotate %90 by %c209_i32_125 dim 1 : vector<1x256xf32>, i32 -> vector<1x256xf32>
    %c44 = arith.constant 44 : index
    %666 = memref.load %arg1[%c44] : memref<98xf32, #tpu.memory_space<smem>>
    %c93 = arith.constant 93 : index
    %667 = memref.load %arg1[%c93] : memref<98xf32, #tpu.memory_space<smem>>
    %668 = vector.broadcast %666 : f32 to vector<1x256xf32>
    %669 = arith.mulf %668, %664 : vector<1x256xf32>
    %670 = vector.broadcast %667 : f32 to vector<1x256xf32>
    %671 = arith.mulf %670, %665 : vector<1x256xf32>
    %672 = arith.addf %669, %671 : vector<1x256xf32>
    %673 = arith.andi %42, %57 : vector<1x256xi1>
    %cst_126 = arith.constant 0.000000e+00 : f32
    %674 = vector.broadcast %cst_126 : f32 to vector<1x256xf32>
    %675 = arith.select %673, %672, %674 : vector<1x256xi1>, vector<1x256xf32>
    %676 = arith.addf %663, %675 : vector<1x256xf32>
    %c208_i32 = arith.constant 208 : i32
    %677 = tpu.dynamic_rotate %92 by %c208_i32 dim 1 : vector<1x256xf32>, i32 -> vector<1x256xf32>
    %c208_i32_127 = arith.constant 208 : i32
    %678 = tpu.dynamic_rotate %90 by %c208_i32_127 dim 1 : vector<1x256xf32>, i32 -> vector<1x256xf32>
    %c45 = arith.constant 45 : index
    %679 = memref.load %arg1[%c45] : memref<98xf32, #tpu.memory_space<smem>>
    %c94 = arith.constant 94 : index
    %680 = memref.load %arg1[%c94] : memref<98xf32, #tpu.memory_space<smem>>
    %681 = vector.broadcast %679 : f32 to vector<1x256xf32>
    %682 = arith.mulf %681, %677 : vector<1x256xf32>
    %683 = vector.broadcast %680 : f32 to vector<1x256xf32>
    %684 = arith.mulf %683, %678 : vector<1x256xf32>
    %685 = arith.addf %682, %684 : vector<1x256xf32>
    %686 = arith.andi %42, %62 : vector<1x256xi1>
    %cst_128 = arith.constant 0.000000e+00 : f32
    %687 = vector.broadcast %cst_128 : f32 to vector<1x256xf32>
    %688 = arith.select %686, %685, %687 : vector<1x256xi1>, vector<1x256xf32>
    %689 = arith.addf %676, %688 : vector<1x256xf32>
    %c207_i32 = arith.constant 207 : i32
    %690 = tpu.dynamic_rotate %92 by %c207_i32 dim 1 : vector<1x256xf32>, i32 -> vector<1x256xf32>
    %c207_i32_129 = arith.constant 207 : i32
    %691 = tpu.dynamic_rotate %90 by %c207_i32_129 dim 1 : vector<1x256xf32>, i32 -> vector<1x256xf32>
    %c46 = arith.constant 46 : index
    %692 = memref.load %arg1[%c46] : memref<98xf32, #tpu.memory_space<smem>>
    %c95 = arith.constant 95 : index
    %693 = memref.load %arg1[%c95] : memref<98xf32, #tpu.memory_space<smem>>
    %694 = vector.broadcast %692 : f32 to vector<1x256xf32>
    %695 = arith.mulf %694, %690 : vector<1x256xf32>
    %696 = vector.broadcast %693 : f32 to vector<1x256xf32>
    %697 = arith.mulf %696, %691 : vector<1x256xf32>
    %698 = arith.addf %695, %697 : vector<1x256xf32>
    %699 = arith.andi %42, %67 : vector<1x256xi1>
    %cst_130 = arith.constant 0.000000e+00 : f32
    %700 = vector.broadcast %cst_130 : f32 to vector<1x256xf32>
    %701 = arith.select %699, %698, %700 : vector<1x256xi1>, vector<1x256xf32>
    %702 = arith.addf %689, %701 : vector<1x256xf32>
    %c206_i32 = arith.constant 206 : i32
    %703 = tpu.dynamic_rotate %92 by %c206_i32 dim 1 : vector<1x256xf32>, i32 -> vector<1x256xf32>
    %c206_i32_131 = arith.constant 206 : i32
    %704 = tpu.dynamic_rotate %90 by %c206_i32_131 dim 1 : vector<1x256xf32>, i32 -> vector<1x256xf32>
    %c47 = arith.constant 47 : index
    %705 = memref.load %arg1[%c47] : memref<98xf32, #tpu.memory_space<smem>>
    %c96 = arith.constant 96 : index
    %706 = memref.load %arg1[%c96] : memref<98xf32, #tpu.memory_space<smem>>
    %707 = vector.broadcast %705 : f32 to vector<1x256xf32>
    %708 = arith.mulf %707, %703 : vector<1x256xf32>
    %709 = vector.broadcast %706 : f32 to vector<1x256xf32>
    %710 = arith.mulf %709, %704 : vector<1x256xf32>
    %711 = arith.addf %708, %710 : vector<1x256xf32>
    %712 = arith.andi %42, %72 : vector<1x256xi1>
    %cst_132 = arith.constant 0.000000e+00 : f32
    %713 = vector.broadcast %cst_132 : f32 to vector<1x256xf32>
    %714 = arith.select %712, %711, %713 : vector<1x256xi1>, vector<1x256xf32>
    %715 = arith.addf %702, %714 : vector<1x256xf32>
    %c205_i32 = arith.constant 205 : i32
    %716 = tpu.dynamic_rotate %92 by %c205_i32 dim 1 : vector<1x256xf32>, i32 -> vector<1x256xf32>
    %c205_i32_133 = arith.constant 205 : i32
    %717 = tpu.dynamic_rotate %90 by %c205_i32_133 dim 1 : vector<1x256xf32>, i32 -> vector<1x256xf32>
    %c48 = arith.constant 48 : index
    %718 = memref.load %arg1[%c48] : memref<98xf32, #tpu.memory_space<smem>>
    %c97 = arith.constant 97 : index
    %719 = memref.load %arg1[%c97] : memref<98xf32, #tpu.memory_space<smem>>
    %720 = vector.broadcast %718 : f32 to vector<1x256xf32>
    %721 = arith.mulf %720, %716 : vector<1x256xf32>
    %722 = vector.broadcast %719 : f32 to vector<1x256xf32>
    %723 = arith.mulf %722, %717 : vector<1x256xf32>
    %724 = arith.addf %721, %723 : vector<1x256xf32>
    %725 = arith.andi %42, %77 : vector<1x256xi1>
    %cst_134 = arith.constant 0.000000e+00 : f32
    %726 = vector.broadcast %cst_134 : f32 to vector<1x256xf32>
    %727 = arith.select %725, %724, %726 : vector<1x256xi1>, vector<1x256xf32>
    %728 = arith.addf %715, %727 : vector<1x256xf32>
    %729 = arith.negf %728 : vector<1x256xf32>
    %730 = math.exp %729 : vector<1x256xf32>
    %cst_135 = arith.constant 1.000000e+00 : f32
    %731 = vector.broadcast %cst_135 : f32 to vector<1x256xf32>
    %732 = arith.addf %731, %730 : vector<1x256xf32>
    %733 = arith.divf %731, %732 : vector<1x256xf32>
    %c0_i32_136 = arith.constant 0 : i32
    %c4_i32_137 = arith.constant 4 : i32
    %734 = arith.muli %c0_i32_136, %c4_i32_137 : i32
    %735 = tpu.assume_multiple %734, 4 : i32
    %c0_138 = arith.constant 0 : index
    %736 = arith.index_cast %735 : i32 to index
    %c0_139 = arith.constant 0 : index
    %737 = vector.load %arg2[%c0_138, %736, %c0_139] : memref<2x4x256xf32, #tpu.memory_space<vmem>>, vector<1x4x256xf32>
    %738 = vector.shape_cast %737 : vector<1x4x256xf32> to vector<4x256xf32>
    %739 = vector.broadcast %733 : vector<1x256xf32> to vector<4x256xf32>
    %740 = arith.mulf %738, %739 : vector<4x256xf32>
    %c0_140 = arith.constant 0 : index
    %741 = arith.index_cast %735 : i32 to index
    %c0_141 = arith.constant 0 : index
    %742 = vector.load %arg3[%c0_140, %741, %c0_141] : memref<2x4x256xf32, #tpu.memory_space<vmem>>, vector<1x4x256xf32>
    %743 = vector.shape_cast %742 : vector<1x4x256xf32> to vector<4x256xf32>
    %744 = vector.shape_cast %740 : vector<4x256xf32> to vector<1x4x256xf32>
    tpu.vector_store %arg3[%c0_140, %741, %c0_141], %744 {strides = array<i32>} : memref<2x4x256xf32, #tpu.memory_space<vmem>>, vector<1x4x256xf32>,
    %c1_i32_142 = arith.constant 1 : i32
    %cst_143 = arith.constant 0.000000e+00 : f32
    %745 = vector.broadcast %cst_143 : f32 to vector<1x256xf32>
    %cst_144 = arith.constant 0xFF800000 : f32
    %746 = vector.broadcast %cst_144 : f32 to vector<1x256xf32>
    %c0_i32_145 = arith.constant 0 : i32
    %c4_i32_146 = arith.constant 4 : i32
    %747 = arith.muli %c0_i32_145, %c4_i32_146 : i32
    %748 = tpu.assume_multiple %747, 4 : i32
    %c1_147 = arith.constant 1 : index
    %749 = arith.index_cast %748 : i32 to index
    %c0_148 = arith.constant 0 : index
    %750 = vector.load %arg2[%c1_147, %749, %c0_148] : memref<2x4x256xf32, #tpu.memory_space<vmem>>, vector<1x4x256xf32>
    %751 = vector.shape_cast %750 : vector<1x4x256xf32> to vector<4x256xf32>
    %cst_149 = arith.constant dense<0.000000e+00> : vector<256xf32>
    %752 = vector.multi_reduction <add>, %751, %cst_149 [0] : vector<4x256xf32> to vector<256xf32>
    %753 = vector.shape_cast %752 : vector<256xf32> to vector<1x256xf32>
    %754 = arith.addf %745, %753 : vector<1x256xf32>
    %cst_150 = arith.constant dense<0xFF800000> : vector<256xf32>
    %755 = vector.multi_reduction <maximumf>, %751, %cst_150 [0] : vector<4x256xf32> to vector<256xf32>
    %756 = vector.shape_cast %755 : vector<256xf32> to vector<1x256xf32>
    %757 = arith.maximumf %746, %756 : vector<1x256xf32>
    %c1_i32_151 = arith.constant 1 : i32
    %cst_152 = arith.constant 2.500000e-01 : f32
    %758 = vector.broadcast %cst_152 : f32 to vector<1x256xf32>
    %759 = arith.mulf %754, %758 : vector<1x256xf32>
    %cst_153 = arith.constant 0.000000e+00 : f32
    %760 = vector.broadcast %cst_153 : f32 to vector<1x256xf32>
    %c51_i32_154 = arith.constant 51 : i32
    %761 = tpu.dynamic_rotate %759 by %c51_i32_154 dim 1 : vector<1x256xf32>, i32 -> vector<1x256xf32>
    %c51_i32_155 = arith.constant 51 : i32
    %762 = tpu.dynamic_rotate %757 by %c51_i32_155 dim 1 : vector<1x256xf32>, i32 -> vector<1x256xf32>
    %c0_156 = arith.constant 0 : index
    %763 = memref.load %arg1[%c0_156] : memref<98xf32, #tpu.memory_space<smem>>
    %c49_157 = arith.constant 49 : index
    %764 = memref.load %arg1[%c49_157] : memref<98xf32, #tpu.memory_space<smem>>
    %765 = vector.broadcast %763 : f32 to vector<1x256xf32>
    %766 = arith.mulf %765, %761 : vector<1x256xf32>
    %767 = vector.broadcast %764 : f32 to vector<1x256xf32>
    %768 = arith.mulf %767, %762 : vector<1x256xf32>
    %769 = arith.addf %766, %768 : vector<1x256xf32>
    %770 = arith.andi %12, %47 : vector<1x256xi1>
    %cst_158 = arith.constant 0.000000e+00 : f32
    %771 = vector.broadcast %cst_158 : f32 to vector<1x256xf32>
    %772 = arith.select %770, %769, %771 : vector<1x256xi1>, vector<1x256xf32>
    %773 = arith.addf %760, %772 : vector<1x256xf32>
    %c50_i32_159 = arith.constant 50 : i32
    %774 = tpu.dynamic_rotate %759 by %c50_i32_159 dim 1 : vector<1x256xf32>, i32 -> vector<1x256xf32>
    %c50_i32_160 = arith.constant 50 : i32
    %775 = tpu.dynamic_rotate %757 by %c50_i32_160 dim 1 : vector<1x256xf32>, i32 -> vector<1x256xf32>
    %c1_161 = arith.constant 1 : index
    %776 = memref.load %arg1[%c1_161] : memref<98xf32, #tpu.memory_space<smem>>
    %c50_162 = arith.constant 50 : index
    %777 = memref.load %arg1[%c50_162] : memref<98xf32, #tpu.memory_space<smem>>
    %778 = vector.broadcast %776 : f32 to vector<1x256xf32>
    %779 = arith.mulf %778, %774 : vector<1x256xf32>
    %780 = vector.broadcast %777 : f32 to vector<1x256xf32>
    %781 = arith.mulf %780, %775 : vector<1x256xf32>
    %782 = arith.addf %779, %781 : vector<1x256xf32>
    %783 = arith.andi %12, %52 : vector<1x256xi1>
    %cst_163 = arith.constant 0.000000e+00 : f32
    %784 = vector.broadcast %cst_163 : f32 to vector<1x256xf32>
    %785 = arith.select %783, %782, %784 : vector<1x256xi1>, vector<1x256xf32>
    %786 = arith.addf %773, %785 : vector<1x256xf32>
    %c49_i32_164 = arith.constant 49 : i32
    %787 = tpu.dynamic_rotate %759 by %c49_i32_164 dim 1 : vector<1x256xf32>, i32 -> vector<1x256xf32>
    %c49_i32_165 = arith.constant 49 : i32
    %788 = tpu.dynamic_rotate %757 by %c49_i32_165 dim 1 : vector<1x256xf32>, i32 -> vector<1x256xf32>
    %c2_166 = arith.constant 2 : index
    %789 = memref.load %arg1[%c2_166] : memref<98xf32, #tpu.memory_space<smem>>
    %c51_167 = arith.constant 51 : index
    %790 = memref.load %arg1[%c51_167] : memref<98xf32, #tpu.memory_space<smem>>
    %791 = vector.broadcast %789 : f32 to vector<1x256xf32>
    %792 = arith.mulf %791, %787 : vector<1x256xf32>
    %793 = vector.broadcast %790 : f32 to vector<1x256xf32>
    %794 = arith.mulf %793, %788 : vector<1x256xf32>
    %795 = arith.addf %792, %794 : vector<1x256xf32>
    %796 = arith.andi %12, %57 : vector<1x256xi1>
    %cst_168 = arith.constant 0.000000e+00 : f32
    %797 = vector.broadcast %cst_168 : f32 to vector<1x256xf32>
    %798 = arith.select %796, %795, %797 : vector<1x256xi1>, vector<1x256xf32>
    %799 = arith.addf %786, %798 : vector<1x256xf32>
    %c48_i32_169 = arith.constant 48 : i32
    %800 = tpu.dynamic_rotate %759 by %c48_i32_169 dim 1 : vector<1x256xf32>, i32 -> vector<1x256xf32>
    %c48_i32_170 = arith.constant 48 : i32
    %801 = tpu.dynamic_rotate %757 by %c48_i32_170 dim 1 : vector<1x256xf32>, i32 -> vector<1x256xf32>
    %c3_171 = arith.constant 3 : index
    %802 = memref.load %arg1[%c3_171] : memref<98xf32, #tpu.memory_space<smem>>
    %c52_172 = arith.constant 52 : index
    %803 = memref.load %arg1[%c52_172] : memref<98xf32, #tpu.memory_space<smem>>
    %804 = vector.broadcast %802 : f32 to vector<1x256xf32>
    %805 = arith.mulf %804, %800 : vector<1x256xf32>
    %806 = vector.broadcast %803 : f32 to vector<1x256xf32>
    %807 = arith.mulf %806, %801 : vector<1x256xf32>
    %808 = arith.addf %805, %807 : vector<1x256xf32>
    %809 = arith.andi %12, %62 : vector<1x256xi1>
    %cst_173 = arith.constant 0.000000e+00 : f32
    %810 = vector.broadcast %cst_173 : f32 to vector<1x256xf32>
    %811 = arith.select %809, %808, %810 : vector<1x256xi1>, vector<1x256xf32>
    %812 = arith.addf %799, %811 : vector<1x256xf32>
    %c47_i32_174 = arith.constant 47 : i32
    %813 = tpu.dynamic_rotate %759 by %c47_i32_174 dim 1 : vector<1x256xf32>, i32 -> vector<1x256xf32>
    %c47_i32_175 = arith.constant 47 : i32
    %814 = tpu.dynamic_rotate %757 by %c47_i32_175 dim 1 : vector<1x256xf32>, i32 -> vector<1x256xf32>
    %c4_176 = arith.constant 4 : index
    %815 = memref.load %arg1[%c4_176] : memref<98xf32, #tpu.memory_space<smem>>
    %c53_177 = arith.constant 53 : index
    %816 = memref.load %arg1[%c53_177] : memref<98xf32, #tpu.memory_space<smem>>
    %817 = vector.broadcast %815 : f32 to vector<1x256xf32>
    %818 = arith.mulf %817, %813 : vector<1x256xf32>
    %819 = vector.broadcast %816 : f32 to vector<1x256xf32>
    %820 = arith.mulf %819, %814 : vector<1x256xf32>
    %821 = arith.addf %818, %820 : vector<1x256xf32>
    %822 = arith.andi %12, %67 : vector<1x256xi1>
    %cst_178 = arith.constant 0.000000e+00 : f32
    %823 = vector.broadcast %cst_178 : f32 to vector<1x256xf32>
    %824 = arith.select %822, %821, %823 : vector<1x256xi1>, vector<1x256xf32>
    %825 = arith.addf %812, %824 : vector<1x256xf32>
    %c46_i32_179 = arith.constant 46 : i32
    %826 = tpu.dynamic_rotate %759 by %c46_i32_179 dim 1 : vector<1x256xf32>, i32 -> vector<1x256xf32>
    %c46_i32_180 = arith.constant 46 : i32
    %827 = tpu.dynamic_rotate %757 by %c46_i32_180 dim 1 : vector<1x256xf32>, i32 -> vector<1x256xf32>
    %c5_181 = arith.constant 5 : index
    %828 = memref.load %arg1[%c5_181] : memref<98xf32, #tpu.memory_space<smem>>
    %c54_182 = arith.constant 54 : index
    %829 = memref.load %arg1[%c54_182] : memref<98xf32, #tpu.memory_space<smem>>
    %830 = vector.broadcast %828 : f32 to vector<1x256xf32>
    %831 = arith.mulf %830, %826 : vector<1x256xf32>
    %832 = vector.broadcast %829 : f32 to vector<1x256xf32>
    %833 = arith.mulf %832, %827 : vector<1x256xf32>
    %834 = arith.addf %831, %833 : vector<1x256xf32>
    %835 = arith.andi %12, %72 : vector<1x256xi1>
    %cst_183 = arith.constant 0.000000e+00 : f32
    %836 = vector.broadcast %cst_183 : f32 to vector<1x256xf32>
    %837 = arith.select %835, %834, %836 : vector<1x256xi1>, vector<1x256xf32>
    %838 = arith.addf %825, %837 : vector<1x256xf32>
    %c45_i32_184 = arith.constant 45 : i32
    %839 = tpu.dynamic_rotate %759 by %c45_i32_184 dim 1 : vector<1x256xf32>, i32 -> vector<1x256xf32>
    %c45_i32_185 = arith.constant 45 : i32
    %840 = tpu.dynamic_rotate %757 by %c45_i32_185 dim 1 : vector<1x256xf32>, i32 -> vector<1x256xf32>
    %c6_186 = arith.constant 6 : index
    %841 = memref.load %arg1[%c6_186] : memref<98xf32, #tpu.memory_space<smem>>
    %c55_187 = arith.constant 55 : index
    %842 = memref.load %arg1[%c55_187] : memref<98xf32, #tpu.memory_space<smem>>
    %843 = vector.broadcast %841 : f32 to vector<1x256xf32>
    %844 = arith.mulf %843, %839 : vector<1x256xf32>
    %845 = vector.broadcast %842 : f32 to vector<1x256xf32>
    %846 = arith.mulf %845, %840 : vector<1x256xf32>
    %847 = arith.addf %844, %846 : vector<1x256xf32>
    %848 = arith.andi %12, %77 : vector<1x256xi1>
    %cst_188 = arith.constant 0.000000e+00 : f32
    %849 = vector.broadcast %cst_188 : f32 to vector<1x256xf32>
    %850 = arith.select %848, %847, %849 : vector<1x256xi1>, vector<1x256xf32>
    %851 = arith.addf %838, %850 : vector<1x256xf32>
    %c35_i32_189 = arith.constant 35 : i32
    %852 = tpu.dynamic_rotate %759 by %c35_i32_189 dim 1 : vector<1x256xf32>, i32 -> vector<1x256xf32>
    %c35_i32_190 = arith.constant 35 : i32
    %853 = tpu.dynamic_rotate %757 by %c35_i32_190 dim 1 : vector<1x256xf32>, i32 -> vector<1x256xf32>
    %c7_191 = arith.constant 7 : index
    %854 = memref.load %arg1[%c7_191] : memref<98xf32, #tpu.memory_space<smem>>
    %c56_192 = arith.constant 56 : index
    %855 = memref.load %arg1[%c56_192] : memref<98xf32, #tpu.memory_space<smem>>
    %856 = vector.broadcast %854 : f32 to vector<1x256xf32>
    %857 = arith.mulf %856, %852 : vector<1x256xf32>
    %858 = vector.broadcast %855 : f32 to vector<1x256xf32>
    %859 = arith.mulf %858, %853 : vector<1x256xf32>
    %860 = arith.addf %857, %859 : vector<1x256xf32>
    %861 = arith.andi %17, %47 : vector<1x256xi1>
    %cst_193 = arith.constant 0.000000e+00 : f32
    %862 = vector.broadcast %cst_193 : f32 to vector<1x256xf32>
    %863 = arith.select %861, %860, %862 : vector<1x256xi1>, vector<1x256xf32>
    %864 = arith.addf %851, %863 : vector<1x256xf32>
    %c34_i32_194 = arith.constant 34 : i32
    %865 = tpu.dynamic_rotate %759 by %c34_i32_194 dim 1 : vector<1x256xf32>, i32 -> vector<1x256xf32>
    %c34_i32_195 = arith.constant 34 : i32
    %866 = tpu.dynamic_rotate %757 by %c34_i32_195 dim 1 : vector<1x256xf32>, i32 -> vector<1x256xf32>
    %c8_196 = arith.constant 8 : index
    %867 = memref.load %arg1[%c8_196] : memref<98xf32, #tpu.memory_space<smem>>
    %c57_197 = arith.constant 57 : index
    %868 = memref.load %arg1[%c57_197] : memref<98xf32, #tpu.memory_space<smem>>
    %869 = vector.broadcast %867 : f32 to vector<1x256xf32>
    %870 = arith.mulf %869, %865 : vector<1x256xf32>
    %871 = vector.broadcast %868 : f32 to vector<1x256xf32>
    %872 = arith.mulf %871, %866 : vector<1x256xf32>
    %873 = arith.addf %870, %872 : vector<1x256xf32>
    %874 = arith.andi %17, %52 : vector<1x256xi1>
    %cst_198 = arith.constant 0.000000e+00 : f32
    %875 = vector.broadcast %cst_198 : f32 to vector<1x256xf32>
    %876 = arith.select %874, %873, %875 : vector<1x256xi1>, vector<1x256xf32>
    %877 = arith.addf %864, %876 : vector<1x256xf32>
    %c33_i32_199 = arith.constant 33 : i32
    %878 = tpu.dynamic_rotate %759 by %c33_i32_199 dim 1 : vector<1x256xf32>, i32 -> vector<1x256xf32>
    %c33_i32_200 = arith.constant 33 : i32
    %879 = tpu.dynamic_rotate %757 by %c33_i32_200 dim 1 : vector<1x256xf32>, i32 -> vector<1x256xf32>
    %c9_201 = arith.constant 9 : index
    %880 = memref.load %arg1[%c9_201] : memref<98xf32, #tpu.memory_space<smem>>
    %c58_202 = arith.constant 58 : index
    %881 = memref.load %arg1[%c58_202] : memref<98xf32, #tpu.memory_space<smem>>
    %882 = vector.broadcast %880 : f32 to vector<1x256xf32>
    %883 = arith.mulf %882, %878 : vector<1x256xf32>
    %884 = vector.broadcast %881 : f32 to vector<1x256xf32>
    %885 = arith.mulf %884, %879 : vector<1x256xf32>
    %886 = arith.addf %883, %885 : vector<1x256xf32>
    %887 = arith.andi %17, %57 : vector<1x256xi1>
    %cst_203 = arith.constant 0.000000e+00 : f32
    %888 = vector.broadcast %cst_203 : f32 to vector<1x256xf32>
    %889 = arith.select %887, %886, %888 : vector<1x256xi1>, vector<1x256xf32>
    %890 = arith.addf %877, %889 : vector<1x256xf32>
    %c32_i32_204 = arith.constant 32 : i32
    %891 = tpu.dynamic_rotate %759 by %c32_i32_204 dim 1 : vector<1x256xf32>, i32 -> vector<1x256xf32>
    %c32_i32_205 = arith.constant 32 : i32
    %892 = tpu.dynamic_rotate %757 by %c32_i32_205 dim 1 : vector<1x256xf32>, i32 -> vector<1x256xf32>
    %c10_206 = arith.constant 10 : index
    %893 = memref.load %arg1[%c10_206] : memref<98xf32, #tpu.memory_space<smem>>
    %c59_207 = arith.constant 59 : index
    %894 = memref.load %arg1[%c59_207] : memref<98xf32, #tpu.memory_space<smem>>
    %895 = vector.broadcast %893 : f32 to vector<1x256xf32>
    %896 = arith.mulf %895, %891 : vector<1x256xf32>
    %897 = vector.broadcast %894 : f32 to vector<1x256xf32>
    %898 = arith.mulf %897, %892 : vector<1x256xf32>
    %899 = arith.addf %896, %898 : vector<1x256xf32>
    %900 = arith.andi %17, %62 : vector<1x256xi1>
    %cst_208 = arith.constant 0.000000e+00 : f32
    %901 = vector.broadcast %cst_208 : f32 to vector<1x256xf32>
    %902 = arith.select %900, %899, %901 : vector<1x256xi1>, vector<1x256xf32>
    %903 = arith.addf %890, %902 : vector<1x256xf32>
    %c31_i32_209 = arith.constant 31 : i32
    %904 = tpu.dynamic_rotate %759 by %c31_i32_209 dim 1 : vector<1x256xf32>, i32 -> vector<1x256xf32>
    %c31_i32_210 = arith.constant 31 : i32
    %905 = tpu.dynamic_rotate %757 by %c31_i32_210 dim 1 : vector<1x256xf32>, i32 -> vector<1x256xf32>
    %c11_211 = arith.constant 11 : index
    %906 = memref.load %arg1[%c11_211] : memref<98xf32, #tpu.memory_space<smem>>
    %c60_212 = arith.constant 60 : index
    %907 = memref.load %arg1[%c60_212] : memref<98xf32, #tpu.memory_space<smem>>
    %908 = vector.broadcast %906 : f32 to vector<1x256xf32>
    %909 = arith.mulf %908, %904 : vector<1x256xf32>
    %910 = vector.broadcast %907 : f32 to vector<1x256xf32>
    %911 = arith.mulf %910, %905 : vector<1x256xf32>
    %912 = arith.addf %909, %911 : vector<1x256xf32>
    %913 = arith.andi %17, %67 : vector<1x256xi1>
    %cst_213 = arith.constant 0.000000e+00 : f32
    %914 = vector.broadcast %cst_213 : f32 to vector<1x256xf32>
    %915 = arith.select %913, %912, %914 : vector<1x256xi1>, vector<1x256xf32>
    %916 = arith.addf %903, %915 : vector<1x256xf32>
    %c30_i32_214 = arith.constant 30 : i32
    %917 = tpu.dynamic_rotate %759 by %c30_i32_214 dim 1 : vector<1x256xf32>, i32 -> vector<1x256xf32>
    %c30_i32_215 = arith.constant 30 : i32
    %918 = tpu.dynamic_rotate %757 by %c30_i32_215 dim 1 : vector<1x256xf32>, i32 -> vector<1x256xf32>
    %c12_216 = arith.constant 12 : index
    %919 = memref.load %arg1[%c12_216] : memref<98xf32, #tpu.memory_space<smem>>
    %c61_217 = arith.constant 61 : index
    %920 = memref.load %arg1[%c61_217] : memref<98xf32, #tpu.memory_space<smem>>
    %921 = vector.broadcast %919 : f32 to vector<1x256xf32>
    %922 = arith.mulf %921, %917 : vector<1x256xf32>
    %923 = vector.broadcast %920 : f32 to vector<1x256xf32>
    %924 = arith.mulf %923, %918 : vector<1x256xf32>
    %925 = arith.addf %922, %924 : vector<1x256xf32>
    %926 = arith.andi %17, %72 : vector<1x256xi1>
    %cst_218 = arith.constant 0.000000e+00 : f32
    %927 = vector.broadcast %cst_218 : f32 to vector<1x256xf32>
    %928 = arith.select %926, %925, %927 : vector<1x256xi1>, vector<1x256xf32>
    %929 = arith.addf %916, %928 : vector<1x256xf32>
    %c29_i32_219 = arith.constant 29 : i32
    %930 = tpu.dynamic_rotate %759 by %c29_i32_219 dim 1 : vector<1x256xf32>, i32 -> vector<1x256xf32>
    %c29_i32_220 = arith.constant 29 : i32
    %931 = tpu.dynamic_rotate %757 by %c29_i32_220 dim 1 : vector<1x256xf32>, i32 -> vector<1x256xf32>
    %c13_221 = arith.constant 13 : index
    %932 = memref.load %arg1[%c13_221] : memref<98xf32, #tpu.memory_space<smem>>
    %c62_222 = arith.constant 62 : index
    %933 = memref.load %arg1[%c62_222] : memref<98xf32, #tpu.memory_space<smem>>
    %934 = vector.broadcast %932 : f32 to vector<1x256xf32>
    %935 = arith.mulf %934, %930 : vector<1x256xf32>
    %936 = vector.broadcast %933 : f32 to vector<1x256xf32>
    %937 = arith.mulf %936, %931 : vector<1x256xf32>
    %938 = arith.addf %935, %937 : vector<1x256xf32>
    %939 = arith.andi %17, %77 : vector<1x256xi1>
    %cst_223 = arith.constant 0.000000e+00 : f32
    %940 = vector.broadcast %cst_223 : f32 to vector<1x256xf32>
    %941 = arith.select %939, %938, %940 : vector<1x256xi1>, vector<1x256xf32>
    %942 = arith.addf %929, %941 : vector<1x256xf32>
    %c19_i32_224 = arith.constant 19 : i32
    %943 = tpu.dynamic_rotate %759 by %c19_i32_224 dim 1 : vector<1x256xf32>, i32 -> vector<1x256xf32>
    %c19_i32_225 = arith.constant 19 : i32
    %944 = tpu.dynamic_rotate %757 by %c19_i32_225 dim 1 : vector<1x256xf32>, i32 -> vector<1x256xf32>
    %c14_226 = arith.constant 14 : index
    %945 = memref.load %arg1[%c14_226] : memref<98xf32, #tpu.memory_space<smem>>
    %c63_227 = arith.constant 63 : index
    %946 = memref.load %arg1[%c63_227] : memref<98xf32, #tpu.memory_space<smem>>
    %947 = vector.broadcast %945 : f32 to vector<1x256xf32>
    %948 = arith.mulf %947, %943 : vector<1x256xf32>
    %949 = vector.broadcast %946 : f32 to vector<1x256xf32>
    %950 = arith.mulf %949, %944 : vector<1x256xf32>
    %951 = arith.addf %948, %950 : vector<1x256xf32>
    %952 = arith.andi %22, %47 : vector<1x256xi1>
    %cst_228 = arith.constant 0.000000e+00 : f32
    %953 = vector.broadcast %cst_228 : f32 to vector<1x256xf32>
    %954 = arith.select %952, %951, %953 : vector<1x256xi1>, vector<1x256xf32>
    %955 = arith.addf %942, %954 : vector<1x256xf32>
    %c18_i32_229 = arith.constant 18 : i32
    %956 = tpu.dynamic_rotate %759 by %c18_i32_229 dim 1 : vector<1x256xf32>, i32 -> vector<1x256xf32>
    %c18_i32_230 = arith.constant 18 : i32
    %957 = tpu.dynamic_rotate %757 by %c18_i32_230 dim 1 : vector<1x256xf32>, i32 -> vector<1x256xf32>
    %c15_231 = arith.constant 15 : index
    %958 = memref.load %arg1[%c15_231] : memref<98xf32, #tpu.memory_space<smem>>
    %c64_232 = arith.constant 64 : index
    %959 = memref.load %arg1[%c64_232] : memref<98xf32, #tpu.memory_space<smem>>
    %960 = vector.broadcast %958 : f32 to vector<1x256xf32>
    %961 = arith.mulf %960, %956 : vector<1x256xf32>
    %962 = vector.broadcast %959 : f32 to vector<1x256xf32>
    %963 = arith.mulf %962, %957 : vector<1x256xf32>
    %964 = arith.addf %961, %963 : vector<1x256xf32>
    %965 = arith.andi %22, %52 : vector<1x256xi1>
    %cst_233 = arith.constant 0.000000e+00 : f32
    %966 = vector.broadcast %cst_233 : f32 to vector<1x256xf32>
    %967 = arith.select %965, %964, %966 : vector<1x256xi1>, vector<1x256xf32>
    %968 = arith.addf %955, %967 : vector<1x256xf32>
    %c17_i32_234 = arith.constant 17 : i32
    %969 = tpu.dynamic_rotate %759 by %c17_i32_234 dim 1 : vector<1x256xf32>, i32 -> vector<1x256xf32>
    %c17_i32_235 = arith.constant 17 : i32
    %970 = tpu.dynamic_rotate %757 by %c17_i32_235 dim 1 : vector<1x256xf32>, i32 -> vector<1x256xf32>
    %c16_236 = arith.constant 16 : index
    %971 = memref.load %arg1[%c16_236] : memref<98xf32, #tpu.memory_space<smem>>
    %c65_237 = arith.constant 65 : index
    %972 = memref.load %arg1[%c65_237] : memref<98xf32, #tpu.memory_space<smem>>
    %973 = vector.broadcast %971 : f32 to vector<1x256xf32>
    %974 = arith.mulf %973, %969 : vector<1x256xf32>
    %975 = vector.broadcast %972 : f32 to vector<1x256xf32>
    %976 = arith.mulf %975, %970 : vector<1x256xf32>
    %977 = arith.addf %974, %976 : vector<1x256xf32>
    %978 = arith.andi %22, %57 : vector<1x256xi1>
    %cst_238 = arith.constant 0.000000e+00 : f32
    %979 = vector.broadcast %cst_238 : f32 to vector<1x256xf32>
    %980 = arith.select %978, %977, %979 : vector<1x256xi1>, vector<1x256xf32>
    %981 = arith.addf %968, %980 : vector<1x256xf32>
    %c16_i32_239 = arith.constant 16 : i32
    %982 = tpu.dynamic_rotate %759 by %c16_i32_239 dim 1 : vector<1x256xf32>, i32 -> vector<1x256xf32>
    %c16_i32_240 = arith.constant 16 : i32
    %983 = tpu.dynamic_rotate %757 by %c16_i32_240 dim 1 : vector<1x256xf32>, i32 -> vector<1x256xf32>
    %c17_241 = arith.constant 17 : index
    %984 = memref.load %arg1[%c17_241] : memref<98xf32, #tpu.memory_space<smem>>
    %c66_242 = arith.constant 66 : index
    %985 = memref.load %arg1[%c66_242] : memref<98xf32, #tpu.memory_space<smem>>
    %986 = vector.broadcast %984 : f32 to vector<1x256xf32>
    %987 = arith.mulf %986, %982 : vector<1x256xf32>
    %988 = vector.broadcast %985 : f32 to vector<1x256xf32>
    %989 = arith.mulf %988, %983 : vector<1x256xf32>
    %990 = arith.addf %987, %989 : vector<1x256xf32>
    %991 = arith.andi %22, %62 : vector<1x256xi1>
    %cst_243 = arith.constant 0.000000e+00 : f32
    %992 = vector.broadcast %cst_243 : f32 to vector<1x256xf32>
    %993 = arith.select %991, %990, %992 : vector<1x256xi1>, vector<1x256xf32>
    %994 = arith.addf %981, %993 : vector<1x256xf32>
    %c15_i32_244 = arith.constant 15 : i32
    %995 = tpu.dynamic_rotate %759 by %c15_i32_244 dim 1 : vector<1x256xf32>, i32 -> vector<1x256xf32>
    %c15_i32_245 = arith.constant 15 : i32
    %996 = tpu.dynamic_rotate %757 by %c15_i32_245 dim 1 : vector<1x256xf32>, i32 -> vector<1x256xf32>
    %c18_246 = arith.constant 18 : index
    %997 = memref.load %arg1[%c18_246] : memref<98xf32, #tpu.memory_space<smem>>
    %c67_247 = arith.constant 67 : index
    %998 = memref.load %arg1[%c67_247] : memref<98xf32, #tpu.memory_space<smem>>
    %999 = vector.broadcast %997 : f32 to vector<1x256xf32>
    %1000 = arith.mulf %999, %995 : vector<1x256xf32>
    %1001 = vector.broadcast %998 : f32 to vector<1x256xf32>
    %1002 = arith.mulf %1001, %996 : vector<1x256xf32>
    %1003 = arith.addf %1000, %1002 : vector<1x256xf32>
    %1004 = arith.andi %22, %67 : vector<1x256xi1>
    %cst_248 = arith.constant 0.000000e+00 : f32
    %1005 = vector.broadcast %cst_248 : f32 to vector<1x256xf32>
    %1006 = arith.select %1004, %1003, %1005 : vector<1x256xi1>, vector<1x256xf32>
    %1007 = arith.addf %994, %1006 : vector<1x256xf32>
    %c14_i32_249 = arith.constant 14 : i32
    %1008 = tpu.dynamic_rotate %759 by %c14_i32_249 dim 1 : vector<1x256xf32>, i32 -> vector<1x256xf32>
    %c14_i32_250 = arith.constant 14 : i32
    %1009 = tpu.dynamic_rotate %757 by %c14_i32_250 dim 1 : vector<1x256xf32>, i32 -> vector<1x256xf32>
    %c19_251 = arith.constant 19 : index
    %1010 = memref.load %arg1[%c19_251] : memref<98xf32, #tpu.memory_space<smem>>
    %c68_252 = arith.constant 68 : index
    %1011 = memref.load %arg1[%c68_252] : memref<98xf32, #tpu.memory_space<smem>>
    %1012 = vector.broadcast %1010 : f32 to vector<1x256xf32>
    %1013 = arith.mulf %1012, %1008 : vector<1x256xf32>
    %1014 = vector.broadcast %1011 : f32 to vector<1x256xf32>
    %1015 = arith.mulf %1014, %1009 : vector<1x256xf32>
    %1016 = arith.addf %1013, %1015 : vector<1x256xf32>
    %1017 = arith.andi %22, %72 : vector<1x256xi1>
    %cst_253 = arith.constant 0.000000e+00 : f32
    %1018 = vector.broadcast %cst_253 : f32 to vector<1x256xf32>
    %1019 = arith.select %1017, %1016, %1018 : vector<1x256xi1>, vector<1x256xf32>
    %1020 = arith.addf %1007, %1019 : vector<1x256xf32>
    %c13_i32_254 = arith.constant 13 : i32
    %1021 = tpu.dynamic_rotate %759 by %c13_i32_254 dim 1 : vector<1x256xf32>, i32 -> vector<1x256xf32>
    %c13_i32_255 = arith.constant 13 : i32
    %1022 = tpu.dynamic_rotate %757 by %c13_i32_255 dim 1 : vector<1x256xf32>, i32 -> vector<1x256xf32>
    %c20_256 = arith.constant 20 : index
    %1023 = memref.load %arg1[%c20_256] : memref<98xf32, #tpu.memory_space<smem>>
    %c69_257 = arith.constant 69 : index
    %1024 = memref.load %arg1[%c69_257] : memref<98xf32, #tpu.memory_space<smem>>
    %1025 = vector.broadcast %1023 : f32 to vector<1x256xf32>
    %1026 = arith.mulf %1025, %1021 : vector<1x256xf32>
    %1027 = vector.broadcast %1024 : f32 to vector<1x256xf32>
    %1028 = arith.mulf %1027, %1022 : vector<1x256xf32>
    %1029 = arith.addf %1026, %1028 : vector<1x256xf32>
    %1030 = arith.andi %22, %77 : vector<1x256xi1>
    %cst_258 = arith.constant 0.000000e+00 : f32
    %1031 = vector.broadcast %cst_258 : f32 to vector<1x256xf32>
    %1032 = arith.select %1030, %1029, %1031 : vector<1x256xi1>, vector<1x256xf32>
    %1033 = arith.addf %1020, %1032 : vector<1x256xf32>
    %c3_i32_259 = arith.constant 3 : i32
    %1034 = tpu.dynamic_rotate %759 by %c3_i32_259 dim 1 : vector<1x256xf32>, i32 -> vector<1x256xf32>
    %c3_i32_260 = arith.constant 3 : i32
    %1035 = tpu.dynamic_rotate %757 by %c3_i32_260 dim 1 : vector<1x256xf32>, i32 -> vector<1x256xf32>
    %c21_261 = arith.constant 21 : index
    %1036 = memref.load %arg1[%c21_261] : memref<98xf32, #tpu.memory_space<smem>>
    %c70_262 = arith.constant 70 : index
    %1037 = memref.load %arg1[%c70_262] : memref<98xf32, #tpu.memory_space<smem>>
    %1038 = vector.broadcast %1036 : f32 to vector<1x256xf32>
    %1039 = arith.mulf %1038, %1034 : vector<1x256xf32>
    %1040 = vector.broadcast %1037 : f32 to vector<1x256xf32>
    %1041 = arith.mulf %1040, %1035 : vector<1x256xf32>
    %1042 = arith.addf %1039, %1041 : vector<1x256xf32>
    %1043 = arith.andi %27, %47 : vector<1x256xi1>
    %cst_263 = arith.constant 0.000000e+00 : f32
    %1044 = vector.broadcast %cst_263 : f32 to vector<1x256xf32>
    %1045 = arith.select %1043, %1042, %1044 : vector<1x256xi1>, vector<1x256xf32>
    %1046 = arith.addf %1033, %1045 : vector<1x256xf32>
    %c2_i32_264 = arith.constant 2 : i32
    %1047 = tpu.dynamic_rotate %759 by %c2_i32_264 dim 1 : vector<1x256xf32>, i32 -> vector<1x256xf32>
    %c2_i32_265 = arith.constant 2 : i32
    %1048 = tpu.dynamic_rotate %757 by %c2_i32_265 dim 1 : vector<1x256xf32>, i32 -> vector<1x256xf32>
    %c22_266 = arith.constant 22 : index
    %1049 = memref.load %arg1[%c22_266] : memref<98xf32, #tpu.memory_space<smem>>
    %c71_267 = arith.constant 71 : index
    %1050 = memref.load %arg1[%c71_267] : memref<98xf32, #tpu.memory_space<smem>>
    %1051 = vector.broadcast %1049 : f32 to vector<1x256xf32>
    %1052 = arith.mulf %1051, %1047 : vector<1x256xf32>
    %1053 = vector.broadcast %1050 : f32 to vector<1x256xf32>
    %1054 = arith.mulf %1053, %1048 : vector<1x256xf32>
    %1055 = arith.addf %1052, %1054 : vector<1x256xf32>
    %1056 = arith.andi %27, %52 : vector<1x256xi1>
    %cst_268 = arith.constant 0.000000e+00 : f32
    %1057 = vector.broadcast %cst_268 : f32 to vector<1x256xf32>
    %1058 = arith.select %1056, %1055, %1057 : vector<1x256xi1>, vector<1x256xf32>
    %1059 = arith.addf %1046, %1058 : vector<1x256xf32>
    %c1_i32_269 = arith.constant 1 : i32
    %1060 = tpu.dynamic_rotate %759 by %c1_i32_269 dim 1 : vector<1x256xf32>, i32 -> vector<1x256xf32>
    %c1_i32_270 = arith.constant 1 : i32
    %1061 = tpu.dynamic_rotate %757 by %c1_i32_270 dim 1 : vector<1x256xf32>, i32 -> vector<1x256xf32>
    %c23_271 = arith.constant 23 : index
    %1062 = memref.load %arg1[%c23_271] : memref<98xf32, #tpu.memory_space<smem>>
    %c72_272 = arith.constant 72 : index
    %1063 = memref.load %arg1[%c72_272] : memref<98xf32, #tpu.memory_space<smem>>
    %1064 = vector.broadcast %1062 : f32 to vector<1x256xf32>
    %1065 = arith.mulf %1064, %1060 : vector<1x256xf32>
    %1066 = vector.broadcast %1063 : f32 to vector<1x256xf32>
    %1067 = arith.mulf %1066, %1061 : vector<1x256xf32>
    %1068 = arith.addf %1065, %1067 : vector<1x256xf32>
    %1069 = arith.andi %27, %57 : vector<1x256xi1>
    %cst_273 = arith.constant 0.000000e+00 : f32
    %1070 = vector.broadcast %cst_273 : f32 to vector<1x256xf32>
    %1071 = arith.select %1069, %1068, %1070 : vector<1x256xi1>, vector<1x256xf32>
    %1072 = arith.addf %1059, %1071 : vector<1x256xf32>
    %c24_274 = arith.constant 24 : index
    %1073 = memref.load %arg1[%c24_274] : memref<98xf32, #tpu.memory_space<smem>>
    %c73_275 = arith.constant 73 : index
    %1074 = memref.load %arg1[%c73_275] : memref<98xf32, #tpu.memory_space<smem>>
    %1075 = vector.broadcast %1073 : f32 to vector<1x256xf32>
    %1076 = arith.mulf %1075, %759 : vector<1x256xf32>
    %1077 = vector.broadcast %1074 : f32 to vector<1x256xf32>
    %1078 = arith.mulf %1077, %757 : vector<1x256xf32>
    %1079 = arith.addf %1076, %1078 : vector<1x256xf32>
    %1080 = arith.andi %27, %62 : vector<1x256xi1>
    %cst_276 = arith.constant 0.000000e+00 : f32
    %1081 = vector.broadcast %cst_276 : f32 to vector<1x256xf32>
    %1082 = arith.select %1080, %1079, %1081 : vector<1x256xi1>, vector<1x256xf32>
    %1083 = arith.addf %1072, %1082 : vector<1x256xf32>
    %c255_i32_277 = arith.constant 255 : i32
    %1084 = tpu.dynamic_rotate %759 by %c255_i32_277 dim 1 : vector<1x256xf32>, i32 -> vector<1x256xf32>
    %c255_i32_278 = arith.constant 255 : i32
    %1085 = tpu.dynamic_rotate %757 by %c255_i32_278 dim 1 : vector<1x256xf32>, i32 -> vector<1x256xf32>
    %c25_279 = arith.constant 25 : index
    %1086 = memref.load %arg1[%c25_279] : memref<98xf32, #tpu.memory_space<smem>>
    %c74_280 = arith.constant 74 : index
    %1087 = memref.load %arg1[%c74_280] : memref<98xf32, #tpu.memory_space<smem>>
    %1088 = vector.broadcast %1086 : f32 to vector<1x256xf32>
    %1089 = arith.mulf %1088, %1084 : vector<1x256xf32>
    %1090 = vector.broadcast %1087 : f32 to vector<1x256xf32>
    %1091 = arith.mulf %1090, %1085 : vector<1x256xf32>
    %1092 = arith.addf %1089, %1091 : vector<1x256xf32>
    %1093 = arith.andi %27, %67 : vector<1x256xi1>
    %cst_281 = arith.constant 0.000000e+00 : f32
    %1094 = vector.broadcast %cst_281 : f32 to vector<1x256xf32>
    %1095 = arith.select %1093, %1092, %1094 : vector<1x256xi1>, vector<1x256xf32>
    %1096 = arith.addf %1083, %1095 : vector<1x256xf32>
    %c254_i32_282 = arith.constant 254 : i32
    %1097 = tpu.dynamic_rotate %759 by %c254_i32_282 dim 1 : vector<1x256xf32>, i32 -> vector<1x256xf32>
    %c254_i32_283 = arith.constant 254 : i32
    %1098 = tpu.dynamic_rotate %757 by %c254_i32_283 dim 1 : vector<1x256xf32>, i32 -> vector<1x256xf32>
    %c26_284 = arith.constant 26 : index
    %1099 = memref.load %arg1[%c26_284] : memref<98xf32, #tpu.memory_space<smem>>
    %c75_285 = arith.constant 75 : index
    %1100 = memref.load %arg1[%c75_285] : memref<98xf32, #tpu.memory_space<smem>>
    %1101 = vector.broadcast %1099 : f32 to vector<1x256xf32>
    %1102 = arith.mulf %1101, %1097 : vector<1x256xf32>
    %1103 = vector.broadcast %1100 : f32 to vector<1x256xf32>
    %1104 = arith.mulf %1103, %1098 : vector<1x256xf32>
    %1105 = arith.addf %1102, %1104 : vector<1x256xf32>
    %1106 = arith.andi %27, %72 : vector<1x256xi1>
    %cst_286 = arith.constant 0.000000e+00 : f32
    %1107 = vector.broadcast %cst_286 : f32 to vector<1x256xf32>
    %1108 = arith.select %1106, %1105, %1107 : vector<1x256xi1>, vector<1x256xf32>
    %1109 = arith.addf %1096, %1108 : vector<1x256xf32>
    %c253_i32_287 = arith.constant 253 : i32
    %1110 = tpu.dynamic_rotate %759 by %c253_i32_287 dim 1 : vector<1x256xf32>, i32 -> vector<1x256xf32>
    %c253_i32_288 = arith.constant 253 : i32
    %1111 = tpu.dynamic_rotate %757 by %c253_i32_288 dim 1 : vector<1x256xf32>, i32 -> vector<1x256xf32>
    %c27_289 = arith.constant 27 : index
    %1112 = memref.load %arg1[%c27_289] : memref<98xf32, #tpu.memory_space<smem>>
    %c76_290 = arith.constant 76 : index
    %1113 = memref.load %arg1[%c76_290] : memref<98xf32, #tpu.memory_space<smem>>
    %1114 = vector.broadcast %1112 : f32 to vector<1x256xf32>
    %1115 = arith.mulf %1114, %1110 : vector<1x256xf32>
    %1116 = vector.broadcast %1113 : f32 to vector<1x256xf32>
    %1117 = arith.mulf %1116, %1111 : vector<1x256xf32>
    %1118 = arith.addf %1115, %1117 : vector<1x256xf32>
    %1119 = arith.andi %27, %77 : vector<1x256xi1>
    %cst_291 = arith.constant 0.000000e+00 : f32
    %1120 = vector.broadcast %cst_291 : f32 to vector<1x256xf32>
    %1121 = arith.select %1119, %1118, %1120 : vector<1x256xi1>, vector<1x256xf32>
    %1122 = arith.addf %1109, %1121 : vector<1x256xf32>
    %c243_i32_292 = arith.constant 243 : i32
    %1123 = tpu.dynamic_rotate %759 by %c243_i32_292 dim 1 : vector<1x256xf32>, i32 -> vector<1x256xf32>
    %c243_i32_293 = arith.constant 243 : i32
    %1124 = tpu.dynamic_rotate %757 by %c243_i32_293 dim 1 : vector<1x256xf32>, i32 -> vector<1x256xf32>
    %c28_294 = arith.constant 28 : index
    %1125 = memref.load %arg1[%c28_294] : memref<98xf32, #tpu.memory_space<smem>>
    %c77_295 = arith.constant 77 : index
    %1126 = memref.load %arg1[%c77_295] : memref<98xf32, #tpu.memory_space<smem>>
    %1127 = vector.broadcast %1125 : f32 to vector<1x256xf32>
    %1128 = arith.mulf %1127, %1123 : vector<1x256xf32>
    %1129 = vector.broadcast %1126 : f32 to vector<1x256xf32>
    %1130 = arith.mulf %1129, %1124 : vector<1x256xf32>
    %1131 = arith.addf %1128, %1130 : vector<1x256xf32>
    %1132 = arith.andi %32, %47 : vector<1x256xi1>
    %cst_296 = arith.constant 0.000000e+00 : f32
    %1133 = vector.broadcast %cst_296 : f32 to vector<1x256xf32>
    %1134 = arith.select %1132, %1131, %1133 : vector<1x256xi1>, vector<1x256xf32>
    %1135 = arith.addf %1122, %1134 : vector<1x256xf32>
    %c242_i32_297 = arith.constant 242 : i32
    %1136 = tpu.dynamic_rotate %759 by %c242_i32_297 dim 1 : vector<1x256xf32>, i32 -> vector<1x256xf32>
    %c242_i32_298 = arith.constant 242 : i32
    %1137 = tpu.dynamic_rotate %757 by %c242_i32_298 dim 1 : vector<1x256xf32>, i32 -> vector<1x256xf32>
    %c29_299 = arith.constant 29 : index
    %1138 = memref.load %arg1[%c29_299] : memref<98xf32, #tpu.memory_space<smem>>
    %c78_300 = arith.constant 78 : index
    %1139 = memref.load %arg1[%c78_300] : memref<98xf32, #tpu.memory_space<smem>>
    %1140 = vector.broadcast %1138 : f32 to vector<1x256xf32>
    %1141 = arith.mulf %1140, %1136 : vector<1x256xf32>
    %1142 = vector.broadcast %1139 : f32 to vector<1x256xf32>
    %1143 = arith.mulf %1142, %1137 : vector<1x256xf32>
    %1144 = arith.addf %1141, %1143 : vector<1x256xf32>
    %1145 = arith.andi %32, %52 : vector<1x256xi1>
    %cst_301 = arith.constant 0.000000e+00 : f32
    %1146 = vector.broadcast %cst_301 : f32 to vector<1x256xf32>
    %1147 = arith.select %1145, %1144, %1146 : vector<1x256xi1>, vector<1x256xf32>
    %1148 = arith.addf %1135, %1147 : vector<1x256xf32>
    %c241_i32_302 = arith.constant 241 : i32
    %1149 = tpu.dynamic_rotate %759 by %c241_i32_302 dim 1 : vector<1x256xf32>, i32 -> vector<1x256xf32>
    %c241_i32_303 = arith.constant 241 : i32
    %1150 = tpu.dynamic_rotate %757 by %c241_i32_303 dim 1 : vector<1x256xf32>, i32 -> vector<1x256xf32>
    %c30_304 = arith.constant 30 : index
    %1151 = memref.load %arg1[%c30_304] : memref<98xf32, #tpu.memory_space<smem>>
    %c79_305 = arith.constant 79 : index
    %1152 = memref.load %arg1[%c79_305] : memref<98xf32, #tpu.memory_space<smem>>
    %1153 = vector.broadcast %1151 : f32 to vector<1x256xf32>
    %1154 = arith.mulf %1153, %1149 : vector<1x256xf32>
    %1155 = vector.broadcast %1152 : f32 to vector<1x256xf32>
    %1156 = arith.mulf %1155, %1150 : vector<1x256xf32>
    %1157 = arith.addf %1154, %1156 : vector<1x256xf32>
    %1158 = arith.andi %32, %57 : vector<1x256xi1>
    %cst_306 = arith.constant 0.000000e+00 : f32
    %1159 = vector.broadcast %cst_306 : f32 to vector<1x256xf32>
    %1160 = arith.select %1158, %1157, %1159 : vector<1x256xi1>, vector<1x256xf32>
    %1161 = arith.addf %1148, %1160 : vector<1x256xf32>
    %c240_i32_307 = arith.constant 240 : i32
    %1162 = tpu.dynamic_rotate %759 by %c240_i32_307 dim 1 : vector<1x256xf32>, i32 -> vector<1x256xf32>
    %c240_i32_308 = arith.constant 240 : i32
    %1163 = tpu.dynamic_rotate %757 by %c240_i32_308 dim 1 : vector<1x256xf32>, i32 -> vector<1x256xf32>
    %c31_309 = arith.constant 31 : index
    %1164 = memref.load %arg1[%c31_309] : memref<98xf32, #tpu.memory_space<smem>>
    %c80_310 = arith.constant 80 : index
    %1165 = memref.load %arg1[%c80_310] : memref<98xf32, #tpu.memory_space<smem>>
    %1166 = vector.broadcast %1164 : f32 to vector<1x256xf32>
    %1167 = arith.mulf %1166, %1162 : vector<1x256xf32>
    %1168 = vector.broadcast %1165 : f32 to vector<1x256xf32>
    %1169 = arith.mulf %1168, %1163 : vector<1x256xf32>
    %1170 = arith.addf %1167, %1169 : vector<1x256xf32>
    %1171 = arith.andi %32, %62 : vector<1x256xi1>
    %cst_311 = arith.constant 0.000000e+00 : f32
    %1172 = vector.broadcast %cst_311 : f32 to vector<1x256xf32>
    %1173 = arith.select %1171, %1170, %1172 : vector<1x256xi1>, vector<1x256xf32>
    %1174 = arith.addf %1161, %1173 : vector<1x256xf32>
    %c239_i32_312 = arith.constant 239 : i32
    %1175 = tpu.dynamic_rotate %759 by %c239_i32_312 dim 1 : vector<1x256xf32>, i32 -> vector<1x256xf32>
    %c239_i32_313 = arith.constant 239 : i32
    %1176 = tpu.dynamic_rotate %757 by %c239_i32_313 dim 1 : vector<1x256xf32>, i32 -> vector<1x256xf32>
    %c32_314 = arith.constant 32 : index
    %1177 = memref.load %arg1[%c32_314] : memref<98xf32, #tpu.memory_space<smem>>
    %c81_315 = arith.constant 81 : index
    %1178 = memref.load %arg1[%c81_315] : memref<98xf32, #tpu.memory_space<smem>>
    %1179 = vector.broadcast %1177 : f32 to vector<1x256xf32>
    %1180 = arith.mulf %1179, %1175 : vector<1x256xf32>
    %1181 = vector.broadcast %1178 : f32 to vector<1x256xf32>
    %1182 = arith.mulf %1181, %1176 : vector<1x256xf32>
    %1183 = arith.addf %1180, %1182 : vector<1x256xf32>
    %1184 = arith.andi %32, %67 : vector<1x256xi1>
    %cst_316 = arith.constant 0.000000e+00 : f32
    %1185 = vector.broadcast %cst_316 : f32 to vector<1x256xf32>
    %1186 = arith.select %1184, %1183, %1185 : vector<1x256xi1>, vector<1x256xf32>
    %1187 = arith.addf %1174, %1186 : vector<1x256xf32>
    %c238_i32_317 = arith.constant 238 : i32
    %1188 = tpu.dynamic_rotate %759 by %c238_i32_317 dim 1 : vector<1x256xf32>, i32 -> vector<1x256xf32>
    %c238_i32_318 = arith.constant 238 : i32
    %1189 = tpu.dynamic_rotate %757 by %c238_i32_318 dim 1 : vector<1x256xf32>, i32 -> vector<1x256xf32>
    %c33_319 = arith.constant 33 : index
    %1190 = memref.load %arg1[%c33_319] : memref<98xf32, #tpu.memory_space<smem>>
    %c82_320 = arith.constant 82 : index
    %1191 = memref.load %arg1[%c82_320] : memref<98xf32, #tpu.memory_space<smem>>
    %1192 = vector.broadcast %1190 : f32 to vector<1x256xf32>
    %1193 = arith.mulf %1192, %1188 : vector<1x256xf32>
    %1194 = vector.broadcast %1191 : f32 to vector<1x256xf32>
    %1195 = arith.mulf %1194, %1189 : vector<1x256xf32>
    %1196 = arith.addf %1193, %1195 : vector<1x256xf32>
    %1197 = arith.andi %32, %72 : vector<1x256xi1>
    %cst_321 = arith.constant 0.000000e+00 : f32
    %1198 = vector.broadcast %cst_321 : f32 to vector<1x256xf32>
    %1199 = arith.select %1197, %1196, %1198 : vector<1x256xi1>, vector<1x256xf32>
    %1200 = arith.addf %1187, %1199 : vector<1x256xf32>
    %c237_i32_322 = arith.constant 237 : i32
    %1201 = tpu.dynamic_rotate %759 by %c237_i32_322 dim 1 : vector<1x256xf32>, i32 -> vector<1x256xf32>
    %c237_i32_323 = arith.constant 237 : i32
    %1202 = tpu.dynamic_rotate %757 by %c237_i32_323 dim 1 : vector<1x256xf32>, i32 -> vector<1x256xf32>
    %c34_324 = arith.constant 34 : index
    %1203 = memref.load %arg1[%c34_324] : memref<98xf32, #tpu.memory_space<smem>>
    %c83_325 = arith.constant 83 : index
    %1204 = memref.load %arg1[%c83_325] : memref<98xf32, #tpu.memory_space<smem>>
    %1205 = vector.broadcast %1203 : f32 to vector<1x256xf32>
    %1206 = arith.mulf %1205, %1201 : vector<1x256xf32>
    %1207 = vector.broadcast %1204 : f32 to vector<1x256xf32>
    %1208 = arith.mulf %1207, %1202 : vector<1x256xf32>
    %1209 = arith.addf %1206, %1208 : vector<1x256xf32>
    %1210 = arith.andi %32, %77 : vector<1x256xi1>
    %cst_326 = arith.constant 0.000000e+00 : f32
    %1211 = vector.broadcast %cst_326 : f32 to vector<1x256xf32>
    %1212 = arith.select %1210, %1209, %1211 : vector<1x256xi1>, vector<1x256xf32>
    %1213 = arith.addf %1200, %1212 : vector<1x256xf32>
    %c227_i32_327 = arith.constant 227 : i32
    %1214 = tpu.dynamic_rotate %759 by %c227_i32_327 dim 1 : vector<1x256xf32>, i32 -> vector<1x256xf32>
    %c227_i32_328 = arith.constant 227 : i32
    %1215 = tpu.dynamic_rotate %757 by %c227_i32_328 dim 1 : vector<1x256xf32>, i32 -> vector<1x256xf32>
    %c35_329 = arith.constant 35 : index
    %1216 = memref.load %arg1[%c35_329] : memref<98xf32, #tpu.memory_space<smem>>
    %c84_330 = arith.constant 84 : index
    %1217 = memref.load %arg1[%c84_330] : memref<98xf32, #tpu.memory_space<smem>>
    %1218 = vector.broadcast %1216 : f32 to vector<1x256xf32>
    %1219 = arith.mulf %1218, %1214 : vector<1x256xf32>
    %1220 = vector.broadcast %1217 : f32 to vector<1x256xf32>
    %1221 = arith.mulf %1220, %1215 : vector<1x256xf32>
    %1222 = arith.addf %1219, %1221 : vector<1x256xf32>
    %1223 = arith.andi %37, %47 : vector<1x256xi1>
    %cst_331 = arith.constant 0.000000e+00 : f32
    %1224 = vector.broadcast %cst_331 : f32 to vector<1x256xf32>
    %1225 = arith.select %1223, %1222, %1224 : vector<1x256xi1>, vector<1x256xf32>
    %1226 = arith.addf %1213, %1225 : vector<1x256xf32>
    %c226_i32_332 = arith.constant 226 : i32
    %1227 = tpu.dynamic_rotate %759 by %c226_i32_332 dim 1 : vector<1x256xf32>, i32 -> vector<1x256xf32>
    %c226_i32_333 = arith.constant 226 : i32
    %1228 = tpu.dynamic_rotate %757 by %c226_i32_333 dim 1 : vector<1x256xf32>, i32 -> vector<1x256xf32>
    %c36_334 = arith.constant 36 : index
    %1229 = memref.load %arg1[%c36_334] : memref<98xf32, #tpu.memory_space<smem>>
    %c85_335 = arith.constant 85 : index
    %1230 = memref.load %arg1[%c85_335] : memref<98xf32, #tpu.memory_space<smem>>
    %1231 = vector.broadcast %1229 : f32 to vector<1x256xf32>
    %1232 = arith.mulf %1231, %1227 : vector<1x256xf32>
    %1233 = vector.broadcast %1230 : f32 to vector<1x256xf32>
    %1234 = arith.mulf %1233, %1228 : vector<1x256xf32>
    %1235 = arith.addf %1232, %1234 : vector<1x256xf32>
    %1236 = arith.andi %37, %52 : vector<1x256xi1>
    %cst_336 = arith.constant 0.000000e+00 : f32
    %1237 = vector.broadcast %cst_336 : f32 to vector<1x256xf32>
    %1238 = arith.select %1236, %1235, %1237 : vector<1x256xi1>, vector<1x256xf32>
    %1239 = arith.addf %1226, %1238 : vector<1x256xf32>
    %c225_i32_337 = arith.constant 225 : i32
    %1240 = tpu.dynamic_rotate %759 by %c225_i32_337 dim 1 : vector<1x256xf32>, i32 -> vector<1x256xf32>
    %c225_i32_338 = arith.constant 225 : i32
    %1241 = tpu.dynamic_rotate %757 by %c225_i32_338 dim 1 : vector<1x256xf32>, i32 -> vector<1x256xf32>
    %c37_339 = arith.constant 37 : index
    %1242 = memref.load %arg1[%c37_339] : memref<98xf32, #tpu.memory_space<smem>>
    %c86_340 = arith.constant 86 : index
    %1243 = memref.load %arg1[%c86_340] : memref<98xf32, #tpu.memory_space<smem>>
    %1244 = vector.broadcast %1242 : f32 to vector<1x256xf32>
    %1245 = arith.mulf %1244, %1240 : vector<1x256xf32>
    %1246 = vector.broadcast %1243 : f32 to vector<1x256xf32>
    %1247 = arith.mulf %1246, %1241 : vector<1x256xf32>
    %1248 = arith.addf %1245, %1247 : vector<1x256xf32>
    %1249 = arith.andi %37, %57 : vector<1x256xi1>
    %cst_341 = arith.constant 0.000000e+00 : f32
    %1250 = vector.broadcast %cst_341 : f32 to vector<1x256xf32>
    %1251 = arith.select %1249, %1248, %1250 : vector<1x256xi1>, vector<1x256xf32>
    %1252 = arith.addf %1239, %1251 : vector<1x256xf32>
    %c224_i32_342 = arith.constant 224 : i32
    %1253 = tpu.dynamic_rotate %759 by %c224_i32_342 dim 1 : vector<1x256xf32>, i32 -> vector<1x256xf32>
    %c224_i32_343 = arith.constant 224 : i32
    %1254 = tpu.dynamic_rotate %757 by %c224_i32_343 dim 1 : vector<1x256xf32>, i32 -> vector<1x256xf32>
    %c38_344 = arith.constant 38 : index
    %1255 = memref.load %arg1[%c38_344] : memref<98xf32, #tpu.memory_space<smem>>
    %c87_345 = arith.constant 87 : index
    %1256 = memref.load %arg1[%c87_345] : memref<98xf32, #tpu.memory_space<smem>>
    %1257 = vector.broadcast %1255 : f32 to vector<1x256xf32>
    %1258 = arith.mulf %1257, %1253 : vector<1x256xf32>
    %1259 = vector.broadcast %1256 : f32 to vector<1x256xf32>
    %1260 = arith.mulf %1259, %1254 : vector<1x256xf32>
    %1261 = arith.addf %1258, %1260 : vector<1x256xf32>
    %1262 = arith.andi %37, %62 : vector<1x256xi1>
    %cst_346 = arith.constant 0.000000e+00 : f32
    %1263 = vector.broadcast %cst_346 : f32 to vector<1x256xf32>
    %1264 = arith.select %1262, %1261, %1263 : vector<1x256xi1>, vector<1x256xf32>
    %1265 = arith.addf %1252, %1264 : vector<1x256xf32>
    %c223_i32_347 = arith.constant 223 : i32
    %1266 = tpu.dynamic_rotate %759 by %c223_i32_347 dim 1 : vector<1x256xf32>, i32 -> vector<1x256xf32>
    %c223_i32_348 = arith.constant 223 : i32
    %1267 = tpu.dynamic_rotate %757 by %c223_i32_348 dim 1 : vector<1x256xf32>, i32 -> vector<1x256xf32>
    %c39_349 = arith.constant 39 : index
    %1268 = memref.load %arg1[%c39_349] : memref<98xf32, #tpu.memory_space<smem>>
    %c88_350 = arith.constant 88 : index
    %1269 = memref.load %arg1[%c88_350] : memref<98xf32, #tpu.memory_space<smem>>
    %1270 = vector.broadcast %1268 : f32 to vector<1x256xf32>
    %1271 = arith.mulf %1270, %1266 : vector<1x256xf32>
    %1272 = vector.broadcast %1269 : f32 to vector<1x256xf32>
    %1273 = arith.mulf %1272, %1267 : vector<1x256xf32>
    %1274 = arith.addf %1271, %1273 : vector<1x256xf32>
    %1275 = arith.andi %37, %67 : vector<1x256xi1>
    %cst_351 = arith.constant 0.000000e+00 : f32
    %1276 = vector.broadcast %cst_351 : f32 to vector<1x256xf32>
    %1277 = arith.select %1275, %1274, %1276 : vector<1x256xi1>, vector<1x256xf32>
    %1278 = arith.addf %1265, %1277 : vector<1x256xf32>
    %c222_i32_352 = arith.constant 222 : i32
    %1279 = tpu.dynamic_rotate %759 by %c222_i32_352 dim 1 : vector<1x256xf32>, i32 -> vector<1x256xf32>
    %c222_i32_353 = arith.constant 222 : i32
    %1280 = tpu.dynamic_rotate %757 by %c222_i32_353 dim 1 : vector<1x256xf32>, i32 -> vector<1x256xf32>
    %c40_354 = arith.constant 40 : index
    %1281 = memref.load %arg1[%c40_354] : memref<98xf32, #tpu.memory_space<smem>>
    %c89_355 = arith.constant 89 : index
    %1282 = memref.load %arg1[%c89_355] : memref<98xf32, #tpu.memory_space<smem>>
    %1283 = vector.broadcast %1281 : f32 to vector<1x256xf32>
    %1284 = arith.mulf %1283, %1279 : vector<1x256xf32>
    %1285 = vector.broadcast %1282 : f32 to vector<1x256xf32>
    %1286 = arith.mulf %1285, %1280 : vector<1x256xf32>
    %1287 = arith.addf %1284, %1286 : vector<1x256xf32>
    %1288 = arith.andi %37, %72 : vector<1x256xi1>
    %cst_356 = arith.constant 0.000000e+00 : f32
    %1289 = vector.broadcast %cst_356 : f32 to vector<1x256xf32>
    %1290 = arith.select %1288, %1287, %1289 : vector<1x256xi1>, vector<1x256xf32>
    %1291 = arith.addf %1278, %1290 : vector<1x256xf32>
    %c221_i32_357 = arith.constant 221 : i32
    %1292 = tpu.dynamic_rotate %759 by %c221_i32_357 dim 1 : vector<1x256xf32>, i32 -> vector<1x256xf32>
    %c221_i32_358 = arith.constant 221 : i32
    %1293 = tpu.dynamic_rotate %757 by %c221_i32_358 dim 1 : vector<1x256xf32>, i32 -> vector<1x256xf32>
    %c41_359 = arith.constant 41 : index
    %1294 = memref.load %arg1[%c41_359] : memref<98xf32, #tpu.memory_space<smem>>
    %c90_360 = arith.constant 90 : index
    %1295 = memref.load %arg1[%c90_360] : memref<98xf32, #tpu.memory_space<smem>>
    %1296 = vector.broadcast %1294 : f32 to vector<1x256xf32>
    %1297 = arith.mulf %1296, %1292 : vector<1x256xf32>
    %1298 = vector.broadcast %1295 : f32 to vector<1x256xf32>
    %1299 = arith.mulf %1298, %1293 : vector<1x256xf32>
    %1300 = arith.addf %1297, %1299 : vector<1x256xf32>
    %1301 = arith.andi %37, %77 : vector<1x256xi1>
    %cst_361 = arith.constant 0.000000e+00 : f32
    %1302 = vector.broadcast %cst_361 : f32 to vector<1x256xf32>
    %1303 = arith.select %1301, %1300, %1302 : vector<1x256xi1>, vector<1x256xf32>
    %1304 = arith.addf %1291, %1303 : vector<1x256xf32>
    %c211_i32_362 = arith.constant 211 : i32
    %1305 = tpu.dynamic_rotate %759 by %c211_i32_362 dim 1 : vector<1x256xf32>, i32 -> vector<1x256xf32>
    %c211_i32_363 = arith.constant 211 : i32
    %1306 = tpu.dynamic_rotate %757 by %c211_i32_363 dim 1 : vector<1x256xf32>, i32 -> vector<1x256xf32>
    %c42_364 = arith.constant 42 : index
    %1307 = memref.load %arg1[%c42_364] : memref<98xf32, #tpu.memory_space<smem>>
    %c91_365 = arith.constant 91 : index
    %1308 = memref.load %arg1[%c91_365] : memref<98xf32, #tpu.memory_space<smem>>
    %1309 = vector.broadcast %1307 : f32 to vector<1x256xf32>
    %1310 = arith.mulf %1309, %1305 : vector<1x256xf32>
    %1311 = vector.broadcast %1308 : f32 to vector<1x256xf32>
    %1312 = arith.mulf %1311, %1306 : vector<1x256xf32>
    %1313 = arith.addf %1310, %1312 : vector<1x256xf32>
    %1314 = arith.andi %42, %47 : vector<1x256xi1>
    %cst_366 = arith.constant 0.000000e+00 : f32
    %1315 = vector.broadcast %cst_366 : f32 to vector<1x256xf32>
    %1316 = arith.select %1314, %1313, %1315 : vector<1x256xi1>, vector<1x256xf32>
    %1317 = arith.addf %1304, %1316 : vector<1x256xf32>
    %c210_i32_367 = arith.constant 210 : i32
    %1318 = tpu.dynamic_rotate %759 by %c210_i32_367 dim 1 : vector<1x256xf32>, i32 -> vector<1x256xf32>
    %c210_i32_368 = arith.constant 210 : i32
    %1319 = tpu.dynamic_rotate %757 by %c210_i32_368 dim 1 : vector<1x256xf32>, i32 -> vector<1x256xf32>
    %c43_369 = arith.constant 43 : index
    %1320 = memref.load %arg1[%c43_369] : memref<98xf32, #tpu.memory_space<smem>>
    %c92_370 = arith.constant 92 : index
    %1321 = memref.load %arg1[%c92_370] : memref<98xf32, #tpu.memory_space<smem>>
    %1322 = vector.broadcast %1320 : f32 to vector<1x256xf32>
    %1323 = arith.mulf %1322, %1318 : vector<1x256xf32>
    %1324 = vector.broadcast %1321 : f32 to vector<1x256xf32>
    %1325 = arith.mulf %1324, %1319 : vector<1x256xf32>
    %1326 = arith.addf %1323, %1325 : vector<1x256xf32>
    %1327 = arith.andi %42, %52 : vector<1x256xi1>
    %cst_371 = arith.constant 0.000000e+00 : f32
    %1328 = vector.broadcast %cst_371 : f32 to vector<1x256xf32>
    %1329 = arith.select %1327, %1326, %1328 : vector<1x256xi1>, vector<1x256xf32>
    %1330 = arith.addf %1317, %1329 : vector<1x256xf32>
    %c209_i32_372 = arith.constant 209 : i32
    %1331 = tpu.dynamic_rotate %759 by %c209_i32_372 dim 1 : vector<1x256xf32>, i32 -> vector<1x256xf32>
    %c209_i32_373 = arith.constant 209 : i32
    %1332 = tpu.dynamic_rotate %757 by %c209_i32_373 dim 1 : vector<1x256xf32>, i32 -> vector<1x256xf32>
    %c44_374 = arith.constant 44 : index
    %1333 = memref.load %arg1[%c44_374] : memref<98xf32, #tpu.memory_space<smem>>
    %c93_375 = arith.constant 93 : index
    %1334 = memref.load %arg1[%c93_375] : memref<98xf32, #tpu.memory_space<smem>>
    %1335 = vector.broadcast %1333 : f32 to vector<1x256xf32>
    %1336 = arith.mulf %1335, %1331 : vector<1x256xf32>
    %1337 = vector.broadcast %1334 : f32 to vector<1x256xf32>
    %1338 = arith.mulf %1337, %1332 : vector<1x256xf32>
    %1339 = arith.addf %1336, %1338 : vector<1x256xf32>
    %1340 = arith.andi %42, %57 : vector<1x256xi1>
    %cst_376 = arith.constant 0.000000e+00 : f32
    %1341 = vector.broadcast %cst_376 : f32 to vector<1x256xf32>
    %1342 = arith.select %1340, %1339, %1341 : vector<1x256xi1>, vector<1x256xf32>
    %1343 = arith.addf %1330, %1342 : vector<1x256xf32>
    %c208_i32_377 = arith.constant 208 : i32
    %1344 = tpu.dynamic_rotate %759 by %c208_i32_377 dim 1 : vector<1x256xf32>, i32 -> vector<1x256xf32>
    %c208_i32_378 = arith.constant 208 : i32
    %1345 = tpu.dynamic_rotate %757 by %c208_i32_378 dim 1 : vector<1x256xf32>, i32 -> vector<1x256xf32>
    %c45_379 = arith.constant 45 : index
    %1346 = memref.load %arg1[%c45_379] : memref<98xf32, #tpu.memory_space<smem>>
    %c94_380 = arith.constant 94 : index
    %1347 = memref.load %arg1[%c94_380] : memref<98xf32, #tpu.memory_space<smem>>
    %1348 = vector.broadcast %1346 : f32 to vector<1x256xf32>
    %1349 = arith.mulf %1348, %1344 : vector<1x256xf32>
    %1350 = vector.broadcast %1347 : f32 to vector<1x256xf32>
    %1351 = arith.mulf %1350, %1345 : vector<1x256xf32>
    %1352 = arith.addf %1349, %1351 : vector<1x256xf32>
    %1353 = arith.andi %42, %62 : vector<1x256xi1>
    %cst_381 = arith.constant 0.000000e+00 : f32
    %1354 = vector.broadcast %cst_381 : f32 to vector<1x256xf32>
    %1355 = arith.select %1353, %1352, %1354 : vector<1x256xi1>, vector<1x256xf32>
    %1356 = arith.addf %1343, %1355 : vector<1x256xf32>
    %c207_i32_382 = arith.constant 207 : i32
    %1357 = tpu.dynamic_rotate %759 by %c207_i32_382 dim 1 : vector<1x256xf32>, i32 -> vector<1x256xf32>
    %c207_i32_383 = arith.constant 207 : i32
    %1358 = tpu.dynamic_rotate %757 by %c207_i32_383 dim 1 : vector<1x256xf32>, i32 -> vector<1x256xf32>
    %c46_384 = arith.constant 46 : index
    %1359 = memref.load %arg1[%c46_384] : memref<98xf32, #tpu.memory_space<smem>>
    %c95_385 = arith.constant 95 : index
    %1360 = memref.load %arg1[%c95_385] : memref<98xf32, #tpu.memory_space<smem>>
    %1361 = vector.broadcast %1359 : f32 to vector<1x256xf32>
    %1362 = arith.mulf %1361, %1357 : vector<1x256xf32>
    %1363 = vector.broadcast %1360 : f32 to vector<1x256xf32>
    %1364 = arith.mulf %1363, %1358 : vector<1x256xf32>
    %1365 = arith.addf %1362, %1364 : vector<1x256xf32>
    %1366 = arith.andi %42, %67 : vector<1x256xi1>
    %cst_386 = arith.constant 0.000000e+00 : f32
    %1367 = vector.broadcast %cst_386 : f32 to vector<1x256xf32>
    %1368 = arith.select %1366, %1365, %1367 : vector<1x256xi1>, vector<1x256xf32>
    %1369 = arith.addf %1356, %1368 : vector<1x256xf32>
    %c206_i32_387 = arith.constant 206 : i32
    %1370 = tpu.dynamic_rotate %759 by %c206_i32_387 dim 1 : vector<1x256xf32>, i32 -> vector<1x256xf32>
    %c206_i32_388 = arith.constant 206 : i32
    %1371 = tpu.dynamic_rotate %757 by %c206_i32_388 dim 1 : vector<1x256xf32>, i32 -> vector<1x256xf32>
    %c47_389 = arith.constant 47 : index
    %1372 = memref.load %arg1[%c47_389] : memref<98xf32, #tpu.memory_space<smem>>
    %c96_390 = arith.constant 96 : index
    %1373 = memref.load %arg1[%c96_390] : memref<98xf32, #tpu.memory_space<smem>>
    %1374 = vector.broadcast %1372 : f32 to vector<1x256xf32>
    %1375 = arith.mulf %1374, %1370 : vector<1x256xf32>
    %1376 = vector.broadcast %1373 : f32 to vector<1x256xf32>
    %1377 = arith.mulf %1376, %1371 : vector<1x256xf32>
    %1378 = arith.addf %1375, %1377 : vector<1x256xf32>
    %1379 = arith.andi %42, %72 : vector<1x256xi1>
    %cst_391 = arith.constant 0.000000e+00 : f32
    %1380 = vector.broadcast %cst_391 : f32 to vector<1x256xf32>
    %1381 = arith.select %1379, %1378, %1380 : vector<1x256xi1>, vector<1x256xf32>
    %1382 = arith.addf %1369, %1381 : vector<1x256xf32>
    %c205_i32_392 = arith.constant 205 : i32
    %1383 = tpu.dynamic_rotate %759 by %c205_i32_392 dim 1 : vector<1x256xf32>, i32 -> vector<1x256xf32>
    %c205_i32_393 = arith.constant 205 : i32
    %1384 = tpu.dynamic_rotate %757 by %c205_i32_393 dim 1 : vector<1x256xf32>, i32 -> vector<1x256xf32>
    %c48_394 = arith.constant 48 : index
    %1385 = memref.load %arg1[%c48_394] : memref<98xf32, #tpu.memory_space<smem>>
    %c97_395 = arith.constant 97 : index
    %1386 = memref.load %arg1[%c97_395] : memref<98xf32, #tpu.memory_space<smem>>
    %1387 = vector.broadcast %1385 : f32 to vector<1x256xf32>
    %1388 = arith.mulf %1387, %1383 : vector<1x256xf32>
    %1389 = vector.broadcast %1386 : f32 to vector<1x256xf32>
    %1390 = arith.mulf %1389, %1384 : vector<1x256xf32>
    %1391 = arith.addf %1388, %1390 : vector<1x256xf32>
    %1392 = arith.andi %42, %77 : vector<1x256xi1>
    %cst_396 = arith.constant 0.000000e+00 : f32
    %1393 = vector.broadcast %cst_396 : f32 to vector<1x256xf32>
    %1394 = arith.select %1392, %1391, %1393 : vector<1x256xi1>, vector<1x256xf32>
    %1395 = arith.addf %1382, %1394 : vector<1x256xf32>
    %1396 = arith.negf %1395 : vector<1x256xf32>
    %1397 = math.exp %1396 : vector<1x256xf32>
    %cst_397 = arith.constant 1.000000e+00 : f32
    %1398 = vector.broadcast %cst_397 : f32 to vector<1x256xf32>
    %1399 = arith.addf %1398, %1397 : vector<1x256xf32>
    %1400 = arith.divf %1398, %1399 : vector<1x256xf32>
    %c0_i32_398 = arith.constant 0 : i32
    %c4_i32_399 = arith.constant 4 : i32
    %1401 = arith.muli %c0_i32_398, %c4_i32_399 : i32
    %1402 = tpu.assume_multiple %1401, 4 : i32
    %c1_400 = arith.constant 1 : index
    %1403 = arith.index_cast %1402 : i32 to index
    %c0_401 = arith.constant 0 : index
    %1404 = vector.load %arg2[%c1_400, %1403, %c0_401] : memref<2x4x256xf32, #tpu.memory_space<vmem>>, vector<1x4x256xf32>
    %1405 = vector.shape_cast %1404 : vector<1x4x256xf32> to vector<4x256xf32>
    %1406 = vector.broadcast %1400 : vector<1x256xf32> to vector<4x256xf32>
    %1407 = arith.mulf %1405, %1406 : vector<4x256xf32>
    %c1_402 = arith.constant 1 : index
    %1408 = arith.index_cast %1402 : i32 to index
    %c0_403 = arith.constant 0 : index
    %1409 = vector.load %arg3[%c1_402, %1408, %c0_403] : memref<2x4x256xf32, #tpu.memory_space<vmem>>, vector<1x4x256xf32>
    %1410 = vector.shape_cast %1409 : vector<1x4x256xf32> to vector<4x256xf32>
    %1411 = vector.shape_cast %1407 : vector<4x256xf32> to vector<1x4x256xf32>
    tpu.vector_store %arg3[%c1_402, %1408, %c0_403], %1411 {strides = array<i32>} : memref<2x4x256xf32, #tpu.memory_space<vmem>>, vector<1x4x256xf32>,
    %c1_i32_404 = arith.constant 1 : i32
    return
  }
  func.func @transform_0(%arg0: i32) -> i32 {
    %c0_i32 = arith.constant 0 : i32
    %c0_i32_0 = arith.constant 0 : i32
    return %c0_i32 : i32
  }
  func.func @transform_1(%arg0: i32) -> (i32, i32, i32) {
    %c0_i32 = arith.constant 0 : i32
    %c0_i32_0 = arith.constant 0 : i32
    %c0_i32_1 = arith.constant 0 : i32
    return %arg0, %c0_i32, %c0_i32_0 : i32, i32, i32
  }
  func.func @transform_2(%arg0: i32) -> (i32, i32, i32) {
    %c0_i32 = arith.constant 0 : i32
    %c0_i32_0 = arith.constant 0 : i32
    %c0_i32_1 = arith.constant 0 : i32
    return %arg0, %c0_i32, %c0_i32_0 : i32, i32, i32
  }
}

</mosaic_0001>

<llo_original>
// kernel: tpu_custom_call.1
$region0: #{tpu_custom_call.1}
  #allocation0 [shape = 'u32[]', space=smem, size = 0x4, offset = 0x4, fixed_abs, tag = 'smem constant byte address 0x4 - core index']
  #allocation1 [shape = 'u32[144,128]{1,0:T(1,128)}', space=vmem, size = 0x12000, scoped, tag = 'internal scratch']
  %s0 = inlined_call_operand.hbm [shape: f32[98], index: 0, kind: input, shape index: {}]
  %s1 = inlined_call_operand.hbm [shape: f32[2,4,256], index: 1, kind: input, shape index: {}]
  %s2 = inlined_call_operand.hbm [shape: f32[2,4,256], index: 2, kind: output, shape index: {}]
  %s3 = sld [smem:[#allocation0]]
  $region26: #{tpu_custom_call.1} parent=0
    _
  %s5 = ssub.s32 1, %s3
  %s6 = scalar_select 0, %s5, %s3
  $region1: #{tpu_custom_call.1} parent=0
    #allocation2 [shape = 'u8[512]{0}', space=smem, size = 0x200, scoped, tag = 'input window, operand 0, single buffered']
    #allocation3 [shape = 's32[1]{0}', space=sflag, size = 0x4, scoped, tag = 'scoped memory for tpu_custom_call.1']
    #allocation4 [shape = 's32[1]{0}', space=sflag, size = 0x4, scoped, tag = 'scoped memory for tpu_custom_call.1']
    #allocation5 [shape = 's32[1]{0}', space=sflag, size = 0x4, scoped, tag = 'scoped memory for tpu_custom_call.1']
    #allocation6 [shape = 'u8[8192]{0}', space=vmem, size = 0x2000, scoped, tag = 'input window, operand 1, single buffered']
    #allocation7 [shape = 'u8[8192]{0}', space=vmem, size = 0x2000, scoped, tag = 'output window, operand 0, single buffered']
    %7 = vsyncpa [#allocation5], 0
    %8 = vsyncpa [#allocation3], 0
    %9 = vsyncpa [#allocation4], 0
    // Predicated region
    $region2: #{tpu_custom_call.1} parent=1 // pred_check
      _
    $region3: #{tpu_custom_call.1} parent=1 // pred_check_branch
      %11 = sbr.rel (0) target = $region5
    $region4: #{tpu_custom_call.1} parent=1 // pred_region
      %s13 = ssub.s32 16, 16
      %14 = vsyncadd [#allocation5], %s13
      %17 = dma.hbm_to_smem %s0, 16, [#allocation2], [#allocation5]
    $region5: #{tpu_custom_call.1} parent=1 // pred_fallthru
      _
    // Predicated region
    $region6: #{tpu_custom_call.1} parent=1 // pred_check
      _
    $region7: #{tpu_custom_call.1} parent=1 // pred_check_branch
      %19 = sbr.rel (0) target = $region9
    $region8: #{tpu_custom_call.1} parent=1 // pred_region
      %s21 = ssub.s32 256, 256
      %22 = vsyncadd [#allocation3], %s21
      %s23 = sshll.u32 [#allocation6], 4
      %s24 = int_to_ptr.vmem [resolvable:$true] %s23
      %29 = dma.hbm_to_vmem [thread:$0]  %s1, 256, %s24, [#allocation3], 128, 128, 8
    $region9: #{tpu_custom_call.1} parent=1 // pred_fallthru
      _
    // Predicated region
    $region10: #{tpu_custom_call.1} parent=1 // pred_check
      _
    $region11: #{tpu_custom_call.1} parent=1 // pred_check_branch
      %31 = sbr.rel (0) target = $region13
    $region12: #{tpu_custom_call.1} parent=1 // pred_region
      %32 = dma.done [#allocation5], 16
    $region13: #{tpu_custom_call.1} parent=1 // pred_fallthru
      _
    // Predicated region
    $region14: #{tpu_custom_call.1} parent=1 // pred_check
      _
    $region15: #{tpu_custom_call.1} parent=1 // pred_check_branch
      %34 = sbr.rel (0) target = $region17
    $region16: #{tpu_custom_call.1} parent=1 // pred_region
      %35 = dma.done [#allocation3], 256
    $region17: #{tpu_custom_call.1} parent=1 // pred_fallthru
      _
    %36 = sfence
    %v37 = vlaneseq
    %v38 = vand.u32 %v37, 127
    %v39 = vadd.s32 %v38, 128
    %v40 = vcvt.s32.f32 %v38
    %v41 = vcvt.s32.f32 %v39
    %v42 = vrcp.pop 16.0
    %v43 = vmul.f32 %v40, %v42
    %v44 = vmul.f32 %v41, %v42
    %v45 = vfloor.f32 %v43
    %v46 = vfloor.f32 %v44
    %v47 = vmul.f32 %v45, 16.0
    %v48 = vmul.f32 %v46, 16.0
    %v49 = vsub.f32 %v40, %v47
    %v50 = vsub.f32 %v41, %v48
    %vm51 = vcmp.ge.f32.partialorder %v45, 3.0
    %vm52 = vcmp.ge.f32.partialorder %v46, 3.0
    %vm53 = vcmp.lt.f32.partialorder %v45, 19.0
    %vm54 = vcmp.lt.f32.partialorder %v46, 19.0
    %vm55 = vmand %vm51, %vm53
    %vm56 = vmand %vm52, %vm54
    %vm57 = vcmp.ge.f32.partialorder %v45, 2.0
    %vm58 = vcmp.ge.f32.partialorder %v46, 2.0
    %vm59 = vcmp.lt.f32.partialorder %v45, 18.0
    %vm60 = vcmp.lt.f32.partialorder %v46, 18.0
    %vm61 = vmand %vm57, %vm59
    %vm62 = vmand %vm58, %vm60
    %vm63 = vcmp.ge.f32.partialorder %v45, 1.0
    %vm64 = vcmp.ge.f32.partialorder %v46, 1.0
    %vm65 = vcmp.lt.f32.partialorder %v45, 17.0
    %vm66 = vcmp.lt.f32.partialorder %v46, 17.0
    %vm67 = vmand %vm63, %vm65
    %vm68 = vmand %vm64, %vm66
    %vm69 = vcmp.ge.f32.partialorder %v45, 0.0
    %vm70 = vcmp.ge.f32.partialorder %v46, 0.0
    %vm71 = vcmp.lt.f32.partialorder %v45, 16.0
    %vm72 = vcmp.lt.f32.partialorder %v46, 16.0
    %vm73 = vmand %vm69, %vm71
    %vm74 = vmand %vm70, %vm72
    %vm75 = vcmp.ge.f32.partialorder %v45, -1.0
    %vm76 = vcmp.ge.f32.partialorder %v46, -1.0
    %vm77 = vcmp.lt.f32.partialorder %v45, 15.0
    %vm78 = vcmp.lt.f32.partialorder %v46, 15.0
    %vm79 = vmand %vm75, %vm77
    %vm80 = vmand %vm76, %vm78
    %vm81 = vcmp.ge.f32.partialorder %v45, -2.0
    %vm82 = vcmp.ge.f32.partialorder %v46, -2.0
    %vm83 = vcmp.lt.f32.partialorder %v45, 14.0
    %vm84 = vcmp.lt.f32.partialorder %v46, 14.0
    %vm85 = vmand %vm81, %vm83
    %vm86 = vmand %vm82, %vm84
    %vm87 = vcmp.ge.f32.partialorder %v45, -3.0
    %vm88 = vcmp.ge.f32.partialorder %v46, -3.0
    %vm89 = vcmp.lt.f32.partialorder %v45, 13.0
    %vm90 = vcmp.lt.f32.partialorder %v46, 13.0
    %vm91 = vmand %vm87, %vm89
    %vm92 = vmand %vm88, %vm90
    %vm93 = vcmp.ge.f32.partialorder %v49, 3.0
    %vm94 = vcmp.ge.f32.partialorder %v50, 3.0
    %vm95 = vcmp.lt.f32.partialorder %v49, 19.0
    %vm96 = vcmp.lt.f32.partialorder %v50, 19.0
    %vm97 = vmand %vm93, %vm95
    %vm98 = vmand %vm94, %vm96
    %vm99 = vcmp.ge.f32.partialorder %v49, 2.0
    %vm100 = vcmp.ge.f32.partialorder %v50, 2.0
    %vm101 = vcmp.lt.f32.partialorder %v49, 18.0
    %vm102 = vcmp.lt.f32.partialorder %v50, 18.0
    %vm103 = vmand %vm99, %vm101
    %vm104 = vmand %vm100, %vm102
    %vm105 = vcmp.ge.f32.partialorder %v49, 1.0
    %vm106 = vcmp.ge.f32.partialorder %v50, 1.0
    %vm107 = vcmp.lt.f32.partialorder %v49, 17.0
    %vm108 = vcmp.lt.f32.partialorder %v50, 17.0
    %vm109 = vmand %vm105, %vm107
    %vm110 = vmand %vm106, %vm108
    %vm111 = vcmp.ge.f32.partialorder %v49, 0.0
    %vm112 = vcmp.ge.f32.partialorder %v50, 0.0
    %vm113 = vcmp.lt.f32.partialorder %v49, 16.0
    %vm114 = vcmp.lt.f32.partialorder %v50, 16.0
    %vm115 = vmand %vm111, %vm113
    %vm116 = vmand %vm112, %vm114
    %vm117 = vcmp.ge.f32.partialorder %v49, -1.0
    %vm118 = vcmp.ge.f32.partialorder %v50, -1.0
    %vm119 = vcmp.lt.f32.partialorder %v49, 15.0
    %vm120 = vcmp.lt.f32.partialorder %v50, 15.0
    %vm121 = vmand %vm117, %vm119
    %vm122 = vmand %vm118, %vm120
    %vm123 = vcmp.ge.f32.partialorder %v49, -2.0
    %vm124 = vcmp.ge.f32.partialorder %v50, -2.0
    %vm125 = vcmp.lt.f32.partialorder %v49, 14.0
    %vm126 = vcmp.lt.f32.partialorder %v50, 14.0
    %vm127 = vmand %vm123, %vm125
    %vm128 = vmand %vm124, %vm126
    %vm129 = vcmp.ge.f32.partialorder %v49, -3.0
    %vm130 = vcmp.ge.f32.partialorder %v50, -3.0
    %vm131 = vcmp.lt.f32.partialorder %v49, 13.0
    %vm132 = vcmp.lt.f32.partialorder %v50, 13.0
    %vm133 = vmand %vm129, %vm131
    %vm134 = vmand %vm130, %vm132
    %s135 = smul.u32 0, 2
    %s136 = smul.addr %s135, 4
    %s137 = scalar_lea.vmem [#allocation6], %s136
    %v138 = vld [vmem:[%s137] sm:$0xff]
    %v140 = vcombine.high %v138, %v138
    %vm142 = vcmask 1043456
    %v143 = vsel %vm142, %v138, 0.0
    %v144 = vrot.slane %v143, 4
    %v145 = vadd.f32 %v143, %v144
    %v146 = vrot.slane %v145, 2
    %v147 = vadd.f32 %v145, %v146
    %v148 = vrot.slane %v147, 1
    %v149 = vadd.f32 %v147, %v148
    %v150 = vsel %vm142, %v140, 0.0
    %v151 = vrot.slane %v150, 4
    %v152 = vadd.f32 %v150, %v151
    %v153 = vrot.slane %v152, 2
    %v154 = vadd.f32 %v152, %v153
    %v155 = vrot.slane %v154, 1
    %v156 = vadd.f32 %v154, %v155
    %v157 = vadd.f32 %v149, 0.0
    %v158 = vadd.f32 %v156, 0.0
    %v159 = vsel %vm142, %v138, -inf
    %v160 = vrot.slane %v159, 4
    %v161 = vmax.f32 %v159, %v160
    %v162 = vrot.slane %v161, 2
    %v163 = vmax.f32 %v161, %v162
    %v164 = vrot.slane %v163, 1
    %v165 = vmax.f32 %v163, %v164
    %v166 = vsel %vm142, %v140, -inf
    %v167 = vrot.slane %v166, 4
    %v168 = vmax.f32 %v166, %v167
    %v169 = vrot.slane %v168, 2
    %v170 = vmax.f32 %v168, %v169
    %v171 = vrot.slane %v170, 1
    %v172 = vmax.f32 %v170, %v171
    %v173 = vmul.f32 %v157, 0.25
    %v174 = vmul.f32 %v158, 0.25
    %175 = vrot.lane.b32.xlu0 %v173, 51
    %v176 = vpop.permute.xlu0 %175
    %177 = vrot.lane.b32.xlu0 %v174, 51
    %v178 = vpop.permute.xlu0 %177
    %vm179 = vcmp.lt.s32.totalorder %v38, 51
    %v180 = vsel %vm179, %v176, %v178
    %v181 = vsel %vm179, %v178, %v176
    %182 = vrot.lane.b32.xlu0 %v165, 51
    %v183 = vpop.permute.xlu0 %182
    %184 = vrot.lane.b32.xlu0 %v172, 51
    %v185 = vpop.permute.xlu0 %184
    %v186 = vsel %vm179, %v183, %v185
    %v187 = vsel %vm179, %v185, %v183
    %s188 = sld [smem:[#allocation2]]
    %s189 = sld [smem:[#allocation2 + $0x31]]
    %v190 = vstv %s188
    %v191 = vmul.f32 %v190, %v181
    %v192 = vmul.f32 %v190, %v180
    %v193 = vstv %s189
    %v194 = vmul.f32 %v193, %v187
    %v195 = vmul.f32 %v193, %v186
    %v196 = vadd.f32 %v191, %v194
    %v197 = vadd.f32 %v192, %v195
    %vm198 = vmand %vm55, %vm97
    %vm199 = vmand %vm56, %vm98
    %v200 = vsel %vm198, %v196, 0.0
    %v201 = vsel %vm199, %v197, 0.0
    %v202 = vadd.f32 %v200, 0.0
    %v203 = vadd.f32 %v201, 0.0
    %204 = vrot.lane.b32.xlu0 %v173, 50
    %v205 = vpop.permute.xlu0 %204
    %206 = vrot.lane.b32.xlu0 %v174, 50
    %v207 = vpop.permute.xlu0 %206
    %vm208 = vcmp.lt.s32.totalorder %v38, 50
    %v209 = vsel %vm208, %v205, %v207
    %v210 = vsel %vm208, %v207, %v205
    %211 = vrot.lane.b32.xlu0 %v165, 50
    %v212 = vpop.permute.xlu0 %211
    %213 = vrot.lane.b32.xlu0 %v172, 50
    %v214 = vpop.permute.xlu0 %213
    %v215 = vsel %vm208, %v212, %v214
    %v216 = vsel %vm208, %v214, %v212
    %s217 = sld [smem:[#allocation2 + $0x1]]
    %s218 = sld [smem:[#allocation2 + $0x32]]
    %v219 = vstv %s217
    %v220 = vmul.f32 %v219, %v210
    %v221 = vmul.f32 %v219, %v209
    %v222 = vstv %s218
    %v223 = vmul.f32 %v222, %v216
    %v224 = vmul.f32 %v222, %v215
    %v225 = vadd.f32 %v220, %v223
    %v226 = vadd.f32 %v221, %v224
    %vm227 = vmand %vm55, %vm103
    %vm228 = vmand %vm56, %vm104
    %v229 = vsel %vm227, %v225, 0.0
    %v230 = vsel %vm228, %v226, 0.0
    %v231 = vadd.f32 %v202, %v229
    %v232 = vadd.f32 %v203, %v230
    %233 = vrot.lane.b32.xlu0 %v173, 49
    %v234 = vpop.permute.xlu0 %233
    %235 = vrot.lane.b32.xlu0 %v174, 49
    %v236 = vpop.permute.xlu0 %235
    %vm237 = vcmp.lt.s32.totalorder %v38, 49
    %v238 = vsel %vm237, %v234, %v236
    %v239 = vsel %vm237, %v236, %v234
    %240 = vrot.lane.b32.xlu0 %v165, 49
    %v241 = vpop.permute.xlu0 %240
    %242 = vrot.lane.b32.xlu0 %v172, 49
    %v243 = vpop.permute.xlu0 %242
    %v244 = vsel %vm237, %v241, %v243
    %v245 = vsel %vm237, %v243, %v241
    %s246 = sld [smem:[#allocation2 + $0x2]]
    %s247 = sld [smem:[#allocation2 + $0x33]]
    %v248 = vstv %s246
    %v249 = vmul.f32 %v248, %v239
    %v250 = vmul.f32 %v248, %v238
    %v251 = vstv %s247
    %v252 = vmul.f32 %v251, %v245
    %v253 = vmul.f32 %v251, %v244
    %v254 = vadd.f32 %v249, %v252
    %v255 = vadd.f32 %v250, %v253
    %vm256 = vmand %vm55, %vm109
    %vm257 = vmand %vm56, %vm110
    %v258 = vsel %vm256, %v254, 0.0
    %v259 = vsel %vm257, %v255, 0.0
    %v260 = vadd.f32 %v231, %v258
    %v261 = vadd.f32 %v232, %v259
    %262 = vrot.lane.b32.xlu0 %v173, 48
    %v263 = vpop.permute.xlu0 %262
    %264 = vrot.lane.b32.xlu0 %v174, 48
    %v265 = vpop.permute.xlu0 %264
    %vm266 = vcmp.lt.s32.totalorder %v38, 48
    %v267 = vsel %vm266, %v263, %v265
    %v268 = vsel %vm266, %v265, %v263
    %269 = vrot.lane.b32.xlu0 %v165, 48
    %v270 = vpop.permute.xlu0 %269
    %271 = vrot.lane.b32.xlu0 %v172, 48
    %v272 = vpop.permute.xlu0 %271
    %v273 = vsel %vm266, %v270, %v272
    %v274 = vsel %vm266, %v272, %v270
    %s275 = sld [smem:[#allocation2 + $0x3]]
    %s276 = sld [smem:[#allocation2 + $0x34]]
    %v277 = vstv %s275
    %v278 = vmul.f32 %v277, %v268
    %v279 = vmul.f32 %v277, %v267
    %v280 = vstv %s276
    %v281 = vmul.f32 %v280, %v274
    %v282 = vmul.f32 %v280, %v273
    %v283 = vadd.f32 %v278, %v281
    %v284 = vadd.f32 %v279, %v282
    %vm285 = vmand %vm55, %vm115
    %vm286 = vmand %vm56, %vm116
    %v287 = vsel %vm285, %v283, 0.0
    %v288 = vsel %vm286, %v284, 0.0
    %v289 = vadd.f32 %v260, %v287
    %v290 = vadd.f32 %v261, %v288
    %291 = vrot.lane.b32.xlu0 %v173, 47
    %v292 = vpop.permute.xlu0 %291
    %293 = vrot.lane.b32.xlu0 %v174, 47
    %v294 = vpop.permute.xlu0 %293
    %vm295 = vcmp.lt.s32.totalorder %v38, 47
    %v296 = vsel %vm295, %v292, %v294
    %v297 = vsel %vm295, %v294, %v292
    %298 = vrot.lane.b32.xlu0 %v165, 47
    %v299 = vpop.permute.xlu0 %298
    %300 = vrot.lane.b32.xlu0 %v172, 47
    %v301 = vpop.permute.xlu0 %300
    %v302 = vsel %vm295, %v299, %v301
    %v303 = vsel %vm295, %v301, %v299
    %s304 = sld [smem:[#allocation2 + $0x4]]
    %s305 = sld [smem:[#allocation2 + $0x35]]
    %v306 = vstv %s304
    %v307 = vmul.f32 %v306, %v297
    %v308 = vmul.f32 %v306, %v296
    %v309 = vstv %s305
    %v310 = vmul.f32 %v309, %v303
    %v311 = vmul.f32 %v309, %v302
    %v312 = vadd.f32 %v307, %v310
    %v313 = vadd.f32 %v308, %v311
    %vm314 = vmand %vm55, %vm121
    %vm315 = vmand %vm56, %vm122
    %v316 = vsel %vm314, %v312, 0.0
    %v317 = vsel %vm315, %v313, 0.0
    %v318 = vadd.f32 %v289, %v316
    %v319 = vadd.f32 %v290, %v317
    %320 = vrot.lane.b32.xlu0 %v173, 46
    %v321 = vpop.permute.xlu0 %320
    %322 = vrot.lane.b32.xlu0 %v174, 46
    %v323 = vpop.permute.xlu0 %322
    %vm324 = vcmp.lt.s32.totalorder %v38, 46
    %v325 = vsel %vm324, %v321, %v323
    %v326 = vsel %vm324, %v323, %v321
    %327 = vrot.lane.b32.xlu0 %v165, 46
    %v328 = vpop.permute.xlu0 %327
    %329 = vrot.lane.b32.xlu0 %v172, 46
    %v330 = vpop.permute.xlu0 %329
    %v331 = vsel %vm324, %v328, %v330
    %v332 = vsel %vm324, %v330, %v328
    %s333 = sld [smem:[#allocation2 + $0x5]]
    %s334 = sld [smem:[#allocation2 + $0x36]]
    %v335 = vstv %s333
    %v336 = vmul.f32 %v335, %v326
    %v337 = vmul.f32 %v335, %v325
    %v338 = vstv %s334
    %v339 = vmul.f32 %v338, %v332
    %v340 = vmul.f32 %v338, %v331
    %v341 = vadd.f32 %v336, %v339
    %v342 = vadd.f32 %v337, %v340
    %vm343 = vmand %vm55, %vm127
    %vm344 = vmand %vm56, %vm128
    %v345 = vsel %vm343, %v341, 0.0
    %v346 = vsel %vm344, %v342, 0.0
    %v347 = vadd.f32 %v318, %v345
    %v348 = vadd.f32 %v319, %v346
    %349 = vrot.lane.b32.xlu0 %v173, 45
    %v350 = vpop.permute.xlu0 %349
    %351 = vrot.lane.b32.xlu0 %v174, 45
    %v352 = vpop.permute.xlu0 %351
    %vm353 = vcmp.lt.s32.totalorder %v38, 45
    %v354 = vsel %vm353, %v350, %v352
    %v355 = vsel %vm353, %v352, %v350
    %356 = vrot.lane.b32.xlu0 %v165, 45
    %v357 = vpop.permute.xlu0 %356
    %358 = vrot.lane.b32.xlu0 %v172, 45
    %v359 = vpop.permute.xlu0 %358
    %v360 = vsel %vm353, %v357, %v359
    %v361 = vsel %vm353, %v359, %v357
    %s362 = sld [smem:[#allocation2 + $0x6]]
    %s363 = sld [smem:[#allocation2 + $0x37]]
    %v364 = vstv %s362
    %v365 = vmul.f32 %v364, %v355
    %v366 = vmul.f32 %v364, %v354
    %v367 = vstv %s363
    %v368 = vmul.f32 %v367, %v361
    %v369 = vmul.f32 %v367, %v360
    %v370 = vadd.f32 %v365, %v368
    %v371 = vadd.f32 %v366, %v369
    %vm372 = vmand %vm55, %vm133
    %vm373 = vmand %vm56, %vm134
    %v374 = vsel %vm372, %v370, 0.0
    %v375 = vsel %vm373, %v371, 0.0
    %v376 = vadd.f32 %v347, %v374
    %v377 = vadd.f32 %v348, %v375
    %378 = vrot.lane.b32.xlu0 %v173, 35
    %v379 = vpop.permute.xlu0 %378
    %380 = vrot.lane.b32.xlu0 %v174, 35
    %v381 = vpop.permute.xlu0 %380
    %vm382 = vcmp.lt.s32.totalorder %v38, 35
    %v383 = vsel %vm382, %v379, %v381
    %v384 = vsel %vm382, %v381, %v379
    %385 = vrot.lane.b32.xlu0 %v165, 35
    %v386 = vpop.permute.xlu0 %385
    %387 = vrot.lane.b32.xlu0 %v172, 35
    %v388 = vpop.permute.xlu0 %387
    %v389 = vsel %vm382, %v386, %v388
    %v390 = vsel %vm382, %v388, %v386
    %s391 = sld [smem:[#allocation2 + $0x7]]
    %s392 = sld [smem:[#allocation2 + $0x38]]
    %v393 = vstv %s391
    %v394 = vmul.f32 %v393, %v384
    %v395 = vmul.f32 %v393, %v383
    %v396 = vstv %s392
    %v397 = vmul.f32 %v396, %v390
    %v398 = vmul.f32 %v396, %v389
    %v399 = vadd.f32 %v394, %v397
    %v400 = vadd.f32 %v395, %v398
    %vm401 = vmand %vm61, %vm97
    %vm402 = vmand %vm62, %vm98
    %v403 = vsel %vm401, %v399, 0.0
    %v404 = vsel %vm402, %v400, 0.0
    %v405 = vadd.f32 %v376, %v403
    %v406 = vadd.f32 %v377, %v404
    %407 = vrot.lane.b32.xlu0 %v173, 34
    %v408 = vpop.permute.xlu0 %407
    %409 = vrot.lane.b32.xlu0 %v174, 34
    %v410 = vpop.permute.xlu0 %409
    %vm411 = vcmp.lt.s32.totalorder %v38, 34
    %v412 = vsel %vm411, %v408, %v410
    %v413 = vsel %vm411, %v410, %v408
    %414 = vrot.lane.b32.xlu0 %v165, 34
    %v415 = vpop.permute.xlu0 %414
    %416 = vrot.lane.b32.xlu0 %v172, 34
    %v417 = vpop.permute.xlu0 %416
    %v418 = vsel %vm411, %v415, %v417
    %v419 = vsel %vm411, %v417, %v415
    %s420 = sld [smem:[#allocation2 + $0x8]]
    %s421 = sld [smem:[#allocation2 + $0x39]]
    %v422 = vstv %s420
    %v423 = vmul.f32 %v422, %v413
    %v424 = vmul.f32 %v422, %v412
    %v425 = vstv %s421
    %v426 = vmul.f32 %v425, %v419
    %v427 = vmul.f32 %v425, %v418
    %v428 = vadd.f32 %v423, %v426
    %v429 = vadd.f32 %v424, %v427
    %vm430 = vmand %vm61, %vm103
    %vm431 = vmand %vm62, %vm104
    %v432 = vsel %vm430, %v428, 0.0
    %v433 = vsel %vm431, %v429, 0.0
    %v434 = vadd.f32 %v405, %v432
    %v435 = vadd.f32 %v406, %v433
    %436 = vrot.lane.b32.xlu0 %v173, 33
    %v437 = vpop.permute.xlu0 %436
    %438 = vrot.lane.b32.xlu0 %v174, 33
    %v439 = vpop.permute.xlu0 %438
    %vm440 = vcmp.lt.s32.totalorder %v38, 33
    %v441 = vsel %vm440, %v437, %v439
    %v442 = vsel %vm440, %v439, %v437
    %443 = vrot.lane.b32.xlu0 %v165, 33
    %v444 = vpop.permute.xlu0 %443
    %445 = vrot.lane.b32.xlu0 %v172, 33
    %v446 = vpop.permute.xlu0 %445
    %v447 = vsel %vm440, %v444, %v446
    %v448 = vsel %vm440, %v446, %v444
    %s449 = sld [smem:[#allocation2 + $0x9]]
    %s450 = sld [smem:[#allocation2 + $0x3a]]
    %v451 = vstv %s449
    %v452 = vmul.f32 %v451, %v442
    %v453 = vmul.f32 %v451, %v441
    %v454 = vstv %s450
    %v455 = vmul.f32 %v454, %v448
    %v456 = vmul.f32 %v454, %v447
    %v457 = vadd.f32 %v452, %v455
    %v458 = vadd.f32 %v453, %v456
    %vm459 = vmand %vm61, %vm109
    %vm460 = vmand %vm62, %vm110
    %v461 = vsel %vm459, %v457, 0.0
    %v462 = vsel %vm460, %v458, 0.0
    %v463 = vadd.f32 %v434, %v461
    %v464 = vadd.f32 %v435, %v462
    %465 = vrot.lane.b32.xlu0 %v173, 32
    %v466 = vpop.permute.xlu0 %465
    %467 = vrot.lane.b32.xlu0 %v174, 32
    %v468 = vpop.permute.xlu0 %467
    %vm469 = vcmp.lt.s32.totalorder %v38, 32
    %v470 = vsel %vm469, %v466, %v468
    %v471 = vsel %vm469, %v468, %v466
    %472 = vrot.lane.b32.xlu0 %v165, 32
    %v473 = vpop.permute.xlu0 %472
    %474 = vrot.lane.b32.xlu0 %v172, 32
    %v475 = vpop.permute.xlu0 %474
    %v476 = vsel %vm469, %v473, %v475
    %v477 = vsel %vm469, %v475, %v473
    %s478 = sld [smem:[#allocation2 + $0xa]]
    %s479 = sld [smem:[#allocation2 + $0x3b]]
    %v480 = vstv %s478
    %v481 = vmul.f32 %v480, %v471
    %v482 = vmul.f32 %v480, %v470
    %v483 = vstv %s479
    %v484 = vmul.f32 %v483, %v477
    %v485 = vmul.f32 %v483, %v476
    %v486 = vadd.f32 %v481, %v484
    %v487 = vadd.f32 %v482, %v485
    %vm488 = vmand %vm61, %vm115
    %vm489 = vmand %vm62, %vm116
    %v490 = vsel %vm488, %v486, 0.0
    %v491 = vsel %vm489, %v487, 0.0
    %v492 = vadd.f32 %v463, %v490
    %v493 = vadd.f32 %v464, %v491
    %494 = vrot.lane.b32.xlu0 %v173, 31
    %v495 = vpop.permute.xlu0 %494
    %496 = vrot.lane.b32.xlu0 %v174, 31
    %v497 = vpop.permute.xlu0 %496
    %vm498 = vcmp.lt.s32.totalorder %v38, 31
    %v499 = vsel %vm498, %v495, %v497
    %v500 = vsel %vm498, %v497, %v495
    %501 = vrot.lane.b32.xlu0 %v165, 31
    %v502 = vpop.permute.xlu0 %501
    %503 = vrot.lane.b32.xlu0 %v172, 31
    %v504 = vpop.permute.xlu0 %503
    %v505 = vsel %vm498, %v502, %v504
    %v506 = vsel %vm498, %v504, %v502
    %s507 = sld [smem:[#allocation2 + $0xb]]
    %s508 = sld [smem:[#allocation2 + $0x3c]]
    %v509 = vstv %s507
    %v510 = vmul.f32 %v509, %v500
    %v511 = vmul.f32 %v509, %v499
    %v512 = vstv %s508
    %v513 = vmul.f32 %v512, %v506
    %v514 = vmul.f32 %v512, %v505
    %v515 = vadd.f32 %v510, %v513
    %v516 = vadd.f32 %v511, %v514
    %vm517 = vmand %vm61, %vm121
    %vm518 = vmand %vm62, %vm122
    %v519 = vsel %vm517, %v515, 0.0
    %v520 = vsel %vm518, %v516, 0.0
    %v521 = vadd.f32 %v492, %v519
    %v522 = vadd.f32 %v493, %v520
    %523 = vrot.lane.b32.xlu0 %v173, 30
    %v524 = vpop.permute.xlu0 %523
    %525 = vrot.lane.b32.xlu0 %v174, 30
    %v526 = vpop.permute.xlu0 %525
    %vm527 = vcmp.lt.s32.totalorder %v38, 30
    %v528 = vsel %vm527, %v524, %v526
    %v529 = vsel %vm527, %v526, %v524
    %530 = vrot.lane.b32.xlu0 %v165, 30
    %v531 = vpop.permute.xlu0 %530
    %532 = vrot.lane.b32.xlu0 %v172, 30
    %v533 = vpop.permute.xlu0 %532
    %v534 = vsel %vm527, %v531, %v533
    %v535 = vsel %vm527, %v533, %v531
    %s536 = sld [smem:[#allocation2 + $0xc]]
    %s537 = sld [smem:[#allocation2 + $0x3d]]
    %v538 = vstv %s536
    %v539 = vmul.f32 %v538, %v529
    %v540 = vmul.f32 %v538, %v528
    %v541 = vstv %s537
    %v542 = vmul.f32 %v541, %v535
    %v543 = vmul.f32 %v541, %v534
    %v544 = vadd.f32 %v539, %v542
    %v545 = vadd.f32 %v540, %v543
    %vm546 = vmand %vm61, %vm127
    %vm547 = vmand %vm62, %vm128
    %v548 = vsel %vm546, %v544, 0.0
    %v549 = vsel %vm547, %v545, 0.0
    %v550 = vadd.f32 %v521, %v548
    %v551 = vadd.f32 %v522, %v549
    %552 = vrot.lane.b32.xlu0 %v173, 29
    %v553 = vpop.permute.xlu0 %552
    %554 = vrot.lane.b32.xlu0 %v174, 29
    %v555 = vpop.permute.xlu0 %554
    %vm556 = vcmp.lt.s32.totalorder %v38, 29
    %v557 = vsel %vm556, %v553, %v555
    %v558 = vsel %vm556, %v555, %v553
    %559 = vrot.lane.b32.xlu0 %v165, 29
    %v560 = vpop.permute.xlu0 %559
    %561 = vrot.lane.b32.xlu0 %v172, 29
    %v562 = vpop.permute.xlu0 %561
    %v563 = vsel %vm556, %v560, %v562
    %v564 = vsel %vm556, %v562, %v560
    %s565 = sld [smem:[#allocation2 + $0xd]]
    %s566 = sld [smem:[#allocation2 + $0x3e]]
    %v567 = vstv %s565
    %v568 = vmul.f32 %v567, %v558
    %v569 = vmul.f32 %v567, %v557
    %v570 = vstv %s566
    %v571 = vmul.f32 %v570, %v564
    %v572 = vmul.f32 %v570, %v563
    %v573 = vadd.f32 %v568, %v571
    %v574 = vadd.f32 %v569, %v572
    %vm575 = vmand %vm61, %vm133
    %vm576 = vmand %vm62, %vm134
    %v577 = vsel %vm575, %v573, 0.0
    %v578 = vsel %vm576, %v574, 0.0
    %v579 = vadd.f32 %v550, %v577
    %v580 = vadd.f32 %v551, %v578
    %581 = vrot.lane.b32.xlu0 %v173, 19
    %v582 = vpop.permute.xlu0 %581
    %583 = vrot.lane.b32.xlu0 %v174, 19
    %v584 = vpop.permute.xlu0 %583
    %vm585 = vcmp.lt.s32.totalorder %v38, 19
    %v586 = vsel %vm585, %v582, %v584
    %v587 = vsel %vm585, %v584, %v582
    %588 = vrot.lane.b32.xlu0 %v165, 19
    %v589 = vpop.permute.xlu0 %588
    %590 = vrot.lane.b32.xlu0 %v172, 19
    %v591 = vpop.permute.xlu0 %590
    %v592 = vsel %vm585, %v589, %v591
    %v593 = vsel %vm585, %v591, %v589
    %s594 = sld [smem:[#allocation2 + $0xe]]
    %s595 = sld [smem:[#allocation2 + $0x3f]]
    %v596 = vstv %s594
    %v597 = vmul.f32 %v596, %v587
    %v598 = vmul.f32 %v596, %v586
    %v599 = vstv %s595
    %v600 = vmul.f32 %v599, %v593
    %v601 = vmul.f32 %v599, %v592
    %v602 = vadd.f32 %v597, %v600
    %v603 = vadd.f32 %v598, %v601
    %vm604 = vmand %vm67, %vm97
    %vm605 = vmand %vm68, %vm98
    %v606 = vsel %vm604, %v602, 0.0
    %v607 = vsel %vm605, %v603, 0.0
    %v608 = vadd.f32 %v579, %v606
    %v609 = vadd.f32 %v580, %v607
    %610 = vrot.lane.b32.xlu0 %v173, 18
    %v611 = vpop.permute.xlu0 %610
    %612 = vrot.lane.b32.xlu0 %v174, 18
    %v613 = vpop.permute.xlu0 %612
    %vm614 = vcmp.lt.s32.totalorder %v38, 18
    %v615 = vsel %vm614, %v611, %v613
    %v616 = vsel %vm614, %v613, %v611
    %617 = vrot.lane.b32.xlu0 %v165, 18
    %v618 = vpop.permute.xlu0 %617
    %619 = vrot.lane.b32.xlu0 %v172, 18
    %v620 = vpop.permute.xlu0 %619
    %v621 = vsel %vm614, %v618, %v620
    %v622 = vsel %vm614, %v620, %v618
    %s623 = sld [smem:[#allocation2 + $0xf]]
    %s624 = sld [smem:[#allocation2 + $0x40]]
    %v625 = vstv %s623
    %v626 = vmul.f32 %v625, %v616
    %v627 = vmul.f32 %v625, %v615
    %v628 = vstv %s624
    %v629 = vmul.f32 %v628, %v622
    %v630 = vmul.f32 %v628, %v621
    %v631 = vadd.f32 %v626, %v629
    %v632 = vadd.f32 %v627, %v630
    %vm633 = vmand %vm67, %vm103
    %vm634 = vmand %vm68, %vm104
    %v635 = vsel %vm633, %v631, 0.0
    %v636 = vsel %vm634, %v632, 0.0
    %v637 = vadd.f32 %v608, %v635
    %v638 = vadd.f32 %v609, %v636
    %639 = vrot.lane.b32.xlu0 %v173, 17
    %v640 = vpop.permute.xlu0 %639
    %641 = vrot.lane.b32.xlu0 %v174, 17
    %v642 = vpop.permute.xlu0 %641
    %vm643 = vcmp.lt.s32.totalorder %v38, 17
    %v644 = vsel %vm643, %v640, %v642
    %v645 = vsel %vm643, %v642, %v640
    %646 = vrot.lane.b32.xlu0 %v165, 17
    %v647 = vpop.permute.xlu0 %646
    %648 = vrot.lane.b32.xlu0 %v172, 17
    %v649 = vpop.permute.xlu0 %648
    %v650 = vsel %vm643, %v647, %v649
    %v651 = vsel %vm643, %v649, %v647
    %s652 = sld [smem:[#allocation2 + $0x10]]
    %s653 = sld [smem:[#allocation2 + $0x41]]
    %v654 = vstv %s652
    %v655 = vmul.f32 %v654, %v645
    %v656 = vmul.f32 %v654, %v644
    %v657 = vstv %s653
    %v658 = vmul.f32 %v657, %v651
    %v659 = vmul.f32 %v657, %v650
    %v660 = vadd.f32 %v655, %v658
    %v661 = vadd.f32 %v656, %v659
    %vm662 = vmand %vm67, %vm109
    %vm663 = vmand %vm68, %vm110
    %v664 = vsel %vm662, %v660, 0.0
    %v665 = vsel %vm663, %v661, 0.0
    %v666 = vadd.f32 %v637, %v664
    %v667 = vadd.f32 %v638, %v665
    %668 = vrot.lane.b32.xlu0 %v173, 16
    %v669 = vpop.permute.xlu0 %668
    %670 = vrot.lane.b32.xlu0 %v174, 16
    %v671 = vpop.permute.xlu0 %670
    %vm672 = vcmp.lt.s32.totalorder %v38, 16
    %v673 = vsel %vm672, %v669, %v671
    %v674 = vsel %vm672, %v671, %v669
    %675 = vrot.lane.b32.xlu0 %v165, 16
    %v676 = vpop.permute.xlu0 %675
    %677 = vrot.lane.b32.xlu0 %v172, 16
    %v678 = vpop.permute.xlu0 %677
    %v679 = vsel %vm672, %v676, %v678
    %v680 = vsel %vm672, %v678, %v676
    %s681 = sld [smem:[#allocation2 + $0x11]]
    %s682 = sld [smem:[#allocation2 + $0x42]]
    %v683 = vstv %s681
    %v684 = vmul.f32 %v683, %v674
    %v685 = vmul.f32 %v683, %v673
    %v686 = vstv %s682
    %v687 = vmul.f32 %v686, %v680
    %v688 = vmul.f32 %v686, %v679
    %v689 = vadd.f32 %v684, %v687
    %v690 = vadd.f32 %v685, %v688
    %vm691 = vmand %vm67, %vm115
    %vm692 = vmand %vm68, %vm116
    %v693 = vsel %vm691, %v689, 0.0
    %v694 = vsel %vm692, %v690, 0.0
    %v695 = vadd.f32 %v666, %v693
    %v696 = vadd.f32 %v667, %v694
    %697 = vrot.lane.b32.xlu0 %v173, 15
    %v698 = vpop.permute.xlu0 %697
    %699 = vrot.lane.b32.xlu0 %v174, 15
    %v700 = vpop.permute.xlu0 %699
    %vm701 = vcmp.lt.s32.totalorder %v38, 15
    %v702 = vsel %vm701, %v698, %v700
    %v703 = vsel %vm701, %v700, %v698
    %704 = vrot.lane.b32.xlu0 %v165, 15
    %v705 = vpop.permute.xlu0 %704
    %706 = vrot.lane.b32.xlu0 %v172, 15
    %v707 = vpop.permute.xlu0 %706
    %v708 = vsel %vm701, %v705, %v707
    %v709 = vsel %vm701, %v707, %v705
    %s710 = sld [smem:[#allocation2 + $0x12]]
    %s711 = sld [smem:[#allocation2 + $0x43]]
    %v712 = vstv %s710
    %v713 = vmul.f32 %v712, %v703
    %v714 = vmul.f32 %v712, %v702
    %v715 = vstv %s711
    %v716 = vmul.f32 %v715, %v709
    %v717 = vmul.f32 %v715, %v708
    %v718 = vadd.f32 %v713, %v716
    %v719 = vadd.f32 %v714, %v717
    %vm720 = vmand %vm67, %vm121
    %vm721 = vmand %vm68, %vm122
    %v722 = vsel %vm720, %v718, 0.0
    %v723 = vsel %vm721, %v719, 0.0
    %v724 = vadd.f32 %v695, %v722
    %v725 = vadd.f32 %v696, %v723
    %726 = vrot.lane.b32.xlu0 %v173, 14
    %v727 = vpop.permute.xlu0 %726
    %728 = vrot.lane.b32.xlu0 %v174, 14
    %v729 = vpop.permute.xlu0 %728
    %vm730 = vcmp.lt.s32.totalorder %v38, 14
    %v731 = vsel %vm730, %v727, %v729
    %v732 = vsel %vm730, %v729, %v727
    %733 = vrot.lane.b32.xlu0 %v165, 14
    %v734 = vpop.permute.xlu0 %733
    %735 = vrot.lane.b32.xlu0 %v172, 14
    %v736 = vpop.permute.xlu0 %735
    %v737 = vsel %vm730, %v734, %v736
    %v738 = vsel %vm730, %v736, %v734
    %s739 = sld [smem:[#allocation2 + $0x13]]
    %s740 = sld [smem:[#allocation2 + $0x44]]
    %v741 = vstv %s739
    %v742 = vmul.f32 %v741, %v732
    %v743 = vmul.f32 %v741, %v731
    %v744 = vstv %s740
    %v745 = vmul.f32 %v744, %v738
    %v746 = vmul.f32 %v744, %v737
    %v747 = vadd.f32 %v742, %v745
    %v748 = vadd.f32 %v743, %v746
    %vm749 = vmand %vm67, %vm127
    %vm750 = vmand %vm68, %vm128
    %v751 = vsel %vm749, %v747, 0.0
    %v752 = vsel %vm750, %v748, 0.0
    %v753 = vadd.f32 %v724, %v751
    %v754 = vadd.f32 %v725, %v752
    %755 = vrot.lane.b32.xlu0 %v173, 13
    %v756 = vpop.permute.xlu0 %755
    %757 = vrot.lane.b32.xlu0 %v174, 13
    %v758 = vpop.permute.xlu0 %757
    %vm759 = vcmp.lt.s32.totalorder %v38, 13
    %v760 = vsel %vm759, %v756, %v758
    %v761 = vsel %vm759, %v758, %v756
    %762 = vrot.lane.b32.xlu0 %v165, 13
    %v763 = vpop.permute.xlu0 %762
    %764 = vrot.lane.b32.xlu0 %v172, 13
    %v765 = vpop.permute.xlu0 %764
    %v766 = vsel %vm759, %v763, %v765
    %v767 = vsel %vm759, %v765, %v763
    %s768 = sld [smem:[#allocation2 + $0x14]]
    %s769 = sld [smem:[#allocation2 + $0x45]]
    %v770 = vstv %s768
    %v771 = vmul.f32 %v770, %v761
    %v772 = vmul.f32 %v770, %v760
    %v773 = vstv %s769
    %v774 = vmul.f32 %v773, %v767
    %v775 = vmul.f32 %v773, %v766
    %v776 = vadd.f32 %v771, %v774
    %v777 = vadd.f32 %v772, %v775
    %vm778 = vmand %vm67, %vm133
    %vm779 = vmand %vm68, %vm134
    %v780 = vsel %vm778, %v776, 0.0
    %v781 = vsel %vm779, %v777, 0.0
    %v782 = vadd.f32 %v753, %v780
    %v783 = vadd.f32 %v754, %v781
    %784 = vrot.lane.b32.xlu0 %v173, 3
    %v785 = vpop.permute.xlu0 %784
    %786 = vrot.lane.b32.xlu0 %v174, 3
    %v787 = vpop.permute.xlu0 %786
    %vm788 = vcmp.lt.s32.totalorder %v38, 3
    %v789 = vsel %vm788, %v785, %v787
    %v790 = vsel %vm788, %v787, %v785
    %791 = vrot.lane.b32.xlu0 %v165, 3
    %v792 = vpop.permute.xlu0 %791
    %793 = vrot.lane.b32.xlu0 %v172, 3
    %v794 = vpop.permute.xlu0 %793
    %v795 = vsel %vm788, %v792, %v794
    %v796 = vsel %vm788, %v794, %v792
    %s797 = sld [smem:[#allocation2 + $0x15]]
    %s798 = sld [smem:[#allocation2 + $0x46]]
    %v799 = vstv %s797
    %v800 = vmul.f32 %v799, %v790
    %v801 = vmul.f32 %v799, %v789
    %v802 = vstv %s798
    %v803 = vmul.f32 %v802, %v796
    %v804 = vmul.f32 %v802, %v795
    %v805 = vadd.f32 %v800, %v803
    %v806 = vadd.f32 %v801, %v804
    %vm807 = vmand %vm73, %vm97
    %vm808 = vmand %vm74, %vm98
    %v809 = vsel %vm807, %v805, 0.0
    %v810 = vsel %vm808, %v806, 0.0
    %v811 = vadd.f32 %v782, %v809
    %v812 = vadd.f32 %v783, %v810
    %813 = vrot.lane.b32.xlu0 %v173, 2
    %v814 = vpop.permute.xlu0 %813
    %815 = vrot.lane.b32.xlu0 %v174, 2
    %v816 = vpop.permute.xlu0 %815
    %vm817 = vcmp.lt.s32.totalorder %v38, 2
    %v818 = vsel %vm817, %v814, %v816
    %v819 = vsel %vm817, %v816, %v814
    %820 = vrot.lane.b32.xlu0 %v165, 2
    %v821 = vpop.permute.xlu0 %820
    %822 = vrot.lane.b32.xlu0 %v172, 2
    %v823 = vpop.permute.xlu0 %822
    %v824 = vsel %vm817, %v821, %v823
    %v825 = vsel %vm817, %v823, %v821
    %s826 = sld [smem:[#allocation2 + $0x16]]
    %s827 = sld [smem:[#allocation2 + $0x47]]
    %v828 = vstv %s826
    %v829 = vmul.f32 %v828, %v819
    %v830 = vmul.f32 %v828, %v818
    %v831 = vstv %s827
    %v832 = vmul.f32 %v831, %v825
    %v833 = vmul.f32 %v831, %v824
    %v834 = vadd.f32 %v829, %v832
    %v835 = vadd.f32 %v830, %v833
    %vm836 = vmand %vm73, %vm103
    %vm837 = vmand %vm74, %vm104
    %v838 = vsel %vm836, %v834, 0.0
    %v839 = vsel %vm837, %v835, 0.0
    %v840 = vadd.f32 %v811, %v838
    %v841 = vadd.f32 %v812, %v839
    %842 = vrot.lane.b32.xlu0 %v173, 1
    %v843 = vpop.permute.xlu0 %842
    %844 = vrot.lane.b32.xlu0 %v174, 1
    %v845 = vpop.permute.xlu0 %844
    %vm846 = vcmp.lt.s32.totalorder %v38, 1
    %v847 = vsel %vm846, %v843, %v845
    %v848 = vsel %vm846, %v845, %v843
    %849 = vrot.lane.b32.xlu0 %v165, 1
    %v850 = vpop.permute.xlu0 %849
    %851 = vrot.lane.b32.xlu0 %v172, 1
    %v852 = vpop.permute.xlu0 %851
    %v853 = vsel %vm846, %v850, %v852
    %v854 = vsel %vm846, %v852, %v850
    %s855 = sld [smem:[#allocation2 + $0x17]]
    %s856 = sld [smem:[#allocation2 + $0x48]]
    %v857 = vstv %s855
    %v858 = vmul.f32 %v857, %v848
    %v859 = vmul.f32 %v857, %v847
    %v860 = vstv %s856
    %v861 = vmul.f32 %v860, %v854
    %v862 = vmul.f32 %v860, %v853
    %v863 = vadd.f32 %v858, %v861
    %v864 = vadd.f32 %v859, %v862
    %vm865 = vmand %vm73, %vm109
    %vm866 = vmand %vm74, %vm110
    %v867 = vsel %vm865, %v863, 0.0
    %v868 = vsel %vm866, %v864, 0.0
    %v869 = vadd.f32 %v840, %v867
    %v870 = vadd.f32 %v841, %v868
    %s871 = sld [smem:[#allocation2 + $0x18]]
    %s872 = sld [smem:[#allocation2 + $0x49]]
    %v873 = vstv %s871
    %v874 = vmul.f32 %v873, %v173
    %v875 = vmul.f32 %v873, %v174
    %v876 = vstv %s872
    %v877 = vmul.f32 %v876, %v165
    %v878 = vmul.f32 %v876, %v172
    %v879 = vadd.f32 %v874, %v877
    %v880 = vadd.f32 %v875, %v878
    %vm881 = vmand %vm73, %vm115
    %vm882 = vmand %vm74, %vm116
    %v883 = vsel %vm881, %v879, 0.0
    %v884 = vsel %vm882, %v880, 0.0
    %v885 = vadd.f32 %v869, %v883
    %v886 = vadd.f32 %v870, %v884
    %887 = vrot.lane.b32.xlu0 %v173, 127
    %v888 = vpop.permute.xlu0 %887
    %889 = vrot.lane.b32.xlu0 %v174, 127
    %v890 = vpop.permute.xlu0 %889
    %vm891 = vcmp.lt.s32.totalorder %v38, 127
    %v892 = vsel %vm891, %v888, %v890
    %v893 = vsel %vm891, %v890, %v888
    %894 = vrot.lane.b32.xlu0 %v165, 127
    %v895 = vpop.permute.xlu0 %894
    %896 = vrot.lane.b32.xlu0 %v172, 127
    %v897 = vpop.permute.xlu0 %896
    %v898 = vsel %vm891, %v895, %v897
    %v899 = vsel %vm891, %v897, %v895
    %s900 = sld [smem:[#allocation2 + $0x19]]
    %s901 = sld [smem:[#allocation2 + $0x4a]]
    %v902 = vstv %s900
    %v903 = vmul.f32 %v902, %v892
    %v904 = vmul.f32 %v902, %v893
    %v905 = vstv %s901
    %v906 = vmul.f32 %v905, %v898
    %v907 = vmul.f32 %v905, %v899
    %v908 = vadd.f32 %v903, %v906
    %v909 = vadd.f32 %v904, %v907
    %vm910 = vmand %vm73, %vm121
    %vm911 = vmand %vm74, %vm122
    %v912 = vsel %vm910, %v908, 0.0
    %v913 = vsel %vm911, %v909, 0.0
    %v914 = vadd.f32 %v885, %v912
    %v915 = vadd.f32 %v886, %v913
    %916 = vrot.lane.b32.xlu0 %v173, 126
    %v917 = vpop.permute.xlu0 %916
    %918 = vrot.lane.b32.xlu0 %v174, 126
    %v919 = vpop.permute.xlu0 %918
    %vm920 = vcmp.lt.s32.totalorder %v38, 126
    %v921 = vsel %vm920, %v917, %v919
    %v922 = vsel %vm920, %v919, %v917
    %923 = vrot.lane.b32.xlu0 %v165, 126
    %v924 = vpop.permute.xlu0 %923
    %925 = vrot.lane.b32.xlu0 %v172, 126
    %v926 = vpop.permute.xlu0 %925
    %v927 = vsel %vm920, %v924, %v926
    %v928 = vsel %vm920, %v926, %v924
    %s929 = sld [smem:[#allocation2 + $0x1a]]
    %s930 = sld [smem:[#allocation2 + $0x4b]]
    %v931 = vstv %s929
    %v932 = vmul.f32 %v931, %v921
    %v933 = vmul.f32 %v931, %v922
    %v934 = vstv %s930
    %v935 = vmul.f32 %v934, %v927
    %v936 = vmul.f32 %v934, %v928
    %v937 = vadd.f32 %v932, %v935
    %v938 = vadd.f32 %v933, %v936
    %vm939 = vmand %vm73, %vm127
    %vm940 = vmand %vm74, %vm128
    %v941 = vsel %vm939, %v937, 0.0
    %v942 = vsel %vm940, %v938, 0.0
    %v943 = vadd.f32 %v914, %v941
    %v944 = vadd.f32 %v915, %v942
    %945 = vrot.lane.b32.xlu0 %v173, 125
    %v946 = vpop.permute.xlu0 %945
    %947 = vrot.lane.b32.xlu0 %v174, 125
    %v948 = vpop.permute.xlu0 %947
    %vm949 = vcmp.lt.s32.totalorder %v38, 125
    %v950 = vsel %vm949, %v946, %v948
    %v951 = vsel %vm949, %v948, %v946
    %952 = vrot.lane.b32.xlu0 %v165, 125
    %v953 = vpop.permute.xlu0 %952
    %954 = vrot.lane.b32.xlu0 %v172, 125
    %v955 = vpop.permute.xlu0 %954
    %v956 = vsel %vm949, %v953, %v955
    %v957 = vsel %vm949, %v955, %v953
    %s958 = sld [smem:[#allocation2 + $0x1b]]
    %s959 = sld [smem:[#allocation2 + $0x4c]]
    %v960 = vstv %s958
    %v961 = vmul.f32 %v960, %v950
    %v962 = vmul.f32 %v960, %v951
    %v963 = vstv %s959
    %v964 = vmul.f32 %v963, %v956
    %v965 = vmul.f32 %v963, %v957
    %v966 = vadd.f32 %v961, %v964
    %v967 = vadd.f32 %v962, %v965
    %vm968 = vmand %vm73, %vm133
    %vm969 = vmand %vm74, %vm134
    %v970 = vsel %vm968, %v966, 0.0
    %v971 = vsel %vm969, %v967, 0.0
    %v972 = vadd.f32 %v943, %v970
    %v973 = vadd.f32 %v944, %v971
    %974 = vrot.lane.b32.xlu0 %v173, 115
    %v975 = vpop.permute.xlu0 %974
    %976 = vrot.lane.b32.xlu0 %v174, 115
    %v977 = vpop.permute.xlu0 %976
    %vm978 = vcmp.lt.s32.totalorder %v38, 115
    %v979 = vsel %vm978, %v975, %v977
    %v980 = vsel %vm978, %v977, %v975
    %981 = vrot.lane.b32.xlu0 %v165, 115
    %v982 = vpop.permute.xlu0 %981
    %983 = vrot.lane.b32.xlu0 %v172, 115
    %v984 = vpop.permute.xlu0 %983
    %v985 = vsel %vm978, %v982, %v984
    %v986 = vsel %vm978, %v984, %v982
    %s987 = sld [smem:[#allocation2 + $0x1c]]
    %s988 = sld [smem:[#allocation2 + $0x4d]]
    %v989 = vstv %s987
    %v990 = vmul.f32 %v989, %v979
    %v991 = vmul.f32 %v989, %v980
    %v992 = vstv %s988
    %v993 = vmul.f32 %v992, %v985
    %v994 = vmul.f32 %v992, %v986
    %v995 = vadd.f32 %v990, %v993
    %v996 = vadd.f32 %v991, %v994
    %vm997 = vmand %vm79, %vm97
    %vm998 = vmand %vm80, %vm98
    %v999 = vsel %vm997, %v995, 0.0
    %v1000 = vsel %vm998, %v996, 0.0
    %v1001 = vadd.f32 %v972, %v999
    %v1002 = vadd.f32 %v973, %v1000
    %1003 = vrot.lane.b32.xlu0 %v173, 114
    %v1004 = vpop.permute.xlu0 %1003
    %1005 = vrot.lane.b32.xlu0 %v174, 114
    %v1006 = vpop.permute.xlu0 %1005
    %vm1007 = vcmp.lt.s32.totalorder %v38, 114
    %v1008 = vsel %vm1007, %v1004, %v1006
    %v1009 = vsel %vm1007, %v1006, %v1004
    %1010 = vrot.lane.b32.xlu0 %v165, 114
    %v1011 = vpop.permute.xlu0 %1010
    %1012 = vrot.lane.b32.xlu0 %v172, 114
    %v1013 = vpop.permute.xlu0 %1012
    %v1014 = vsel %vm1007, %v1011, %v1013
    %v1015 = vsel %vm1007, %v1013, %v1011
    %s1016 = sld [smem:[#allocation2 + $0x1d]]
    %s1017 = sld [smem:[#allocation2 + $0x4e]]
    %v1018 = vstv %s1016
    %v1019 = vmul.f32 %v1018, %v1008
    %v1020 = vmul.f32 %v1018, %v1009
    %v1021 = vstv %s1017
    %v1022 = vmul.f32 %v1021, %v1014
    %v1023 = vmul.f32 %v1021, %v1015
    %v1024 = vadd.f32 %v1019, %v1022
    %v1025 = vadd.f32 %v1020, %v1023
    %vm1026 = vmand %vm79, %vm103
    %vm1027 = vmand %vm80, %vm104
    %v1028 = vsel %vm1026, %v1024, 0.0
    %v1029 = vsel %vm1027, %v1025, 0.0
    %v1030 = vadd.f32 %v1001, %v1028
    %v1031 = vadd.f32 %v1002, %v1029
    %1032 = vrot.lane.b32.xlu0 %v173, 113
    %v1033 = vpop.permute.xlu0 %1032
    %1034 = vrot.lane.b32.xlu0 %v174, 113
    %v1035 = vpop.permute.xlu0 %1034
    %vm1036 = vcmp.lt.s32.totalorder %v38, 113
    %v1037 = vsel %vm1036, %v1033, %v1035
    %v1038 = vsel %vm1036, %v1035, %v1033
    %1039 = vrot.lane.b32.xlu0 %v165, 113
    %v1040 = vpop.permute.xlu0 %1039
    %1041 = vrot.lane.b32.xlu0 %v172, 113
    %v1042 = vpop.permute.xlu0 %1041
    %v1043 = vsel %vm1036, %v1040, %v1042
    %v1044 = vsel %vm1036, %v1042, %v1040
    %s1045 = sld [smem:[#allocation2 + $0x1e]]
    %s1046 = sld [smem:[#allocation2 + $0x4f]]
    %v1047 = vstv %s1045
    %v1048 = vmul.f32 %v1047, %v1037
    %v1049 = vmul.f32 %v1047, %v1038
    %v1050 = vstv %s1046
    %v1051 = vmul.f32 %v1050, %v1043
    %v1052 = vmul.f32 %v1050, %v1044
    %v1053 = vadd.f32 %v1048, %v1051
    %v1054 = vadd.f32 %v1049, %v1052
    %vm1055 = vmand %vm79, %vm109
    %vm1056 = vmand %vm80, %vm110
    %v1057 = vsel %vm1055, %v1053, 0.0
    %v1058 = vsel %vm1056, %v1054, 0.0
    %v1059 = vadd.f32 %v1030, %v1057
    %v1060 = vadd.f32 %v1031, %v1058
    %1061 = vrot.lane.b32.xlu0 %v173, 112
    %v1062 = vpop.permute.xlu0 %1061
    %1063 = vrot.lane.b32.xlu0 %v174, 112
    %v1064 = vpop.permute.xlu0 %1063
    %vm1065 = vcmp.lt.s32.totalorder %v38, 112
    %v1066 = vsel %vm1065, %v1062, %v1064
    %v1067 = vsel %vm1065, %v1064, %v1062
    %1068 = vrot.lane.b32.xlu0 %v165, 112
    %v1069 = vpop.permute.xlu0 %1068
    %1070 = vrot.lane.b32.xlu0 %v172, 112
    %v1071 = vpop.permute.xlu0 %1070
    %v1072 = vsel %vm1065, %v1069, %v1071
    %v1073 = vsel %vm1065, %v1071, %v1069
    %s1074 = sld [smem:[#allocation2 + $0x1f]]
    %s1075 = sld [smem:[#allocation2 + $0x50]]
    %v1076 = vstv %s1074
    %v1077 = vmul.f32 %v1076, %v1066
    %v1078 = vmul.f32 %v1076, %v1067
    %v1079 = vstv %s1075
    %v1080 = vmul.f32 %v1079, %v1072
    %v1081 = vmul.f32 %v1079, %v1073
    %v1082 = vadd.f32 %v1077, %v1080
    %v1083 = vadd.f32 %v1078, %v1081
    %vm1084 = vmand %vm79, %vm115
    %vm1085 = vmand %vm80, %vm116
    %v1086 = vsel %vm1084, %v1082, 0.0
    %v1087 = vsel %vm1085, %v1083, 0.0
    %v1088 = vadd.f32 %v1059, %v1086
    %v1089 = vadd.f32 %v1060, %v1087
    %1090 = vrot.lane.b32.xlu0 %v173, 111
    %v1091 = vpop.permute.xlu0 %1090
    %1092 = vrot.lane.b32.xlu0 %v174, 111
    %v1093 = vpop.permute.xlu0 %1092
    %vm1094 = vcmp.lt.s32.totalorder %v38, 111
    %v1095 = vsel %vm1094, %v1091, %v1093
    %v1096 = vsel %vm1094, %v1093, %v1091
    %1097 = vrot.lane.b32.xlu0 %v165, 111
    %v1098 = vpop.permute.xlu0 %1097
    %1099 = vrot.lane.b32.xlu0 %v172, 111
    %v1100 = vpop.permute.xlu0 %1099
    %v1101 = vsel %vm1094, %v1098, %v1100
    %v1102 = vsel %vm1094, %v1100, %v1098
    %s1103 = sld [smem:[#allocation2 + $0x20]]
    %s1104 = sld [smem:[#allocation2 + $0x51]]
    %v1105 = vstv %s1103
    %v1106 = vmul.f32 %v1105, %v1095
    %v1107 = vmul.f32 %v1105, %v1096
    %v1108 = vstv %s1104
    %v1109 = vmul.f32 %v1108, %v1101
    %v1110 = vmul.f32 %v1108, %v1102
    %v1111 = vadd.f32 %v1106, %v1109
    %v1112 = vadd.f32 %v1107, %v1110
    %vm1113 = vmand %vm79, %vm121
    %vm1114 = vmand %vm80, %vm122
    %v1115 = vsel %vm1113, %v1111, 0.0
    %v1116 = vsel %vm1114, %v1112, 0.0
    %v1117 = vadd.f32 %v1088, %v1115
    %v1118 = vadd.f32 %v1089, %v1116
    %1119 = vrot.lane.b32.xlu0 %v173, 110
    %v1120 = vpop.permute.xlu0 %1119
    %1121 = vrot.lane.b32.xlu0 %v174, 110
    %v1122 = vpop.permute.xlu0 %1121
    %vm1123 = vcmp.lt.s32.totalorder %v38, 110
    %v1124 = vsel %vm1123, %v1120, %v1122
    %v1125 = vsel %vm1123, %v1122, %v1120
    %1126 = vrot.lane.b32.xlu0 %v165, 110
    %v1127 = vpop.permute.xlu0 %1126
    %1128 = vrot.lane.b32.xlu0 %v172, 110
    %v1129 = vpop.permute.xlu0 %1128
    %v1130 = vsel %vm1123, %v1127, %v1129
    %v1131 = vsel %vm1123, %v1129, %v1127
    %s1132 = sld [smem:[#allocation2 + $0x21]]
    %s1133 = sld [smem:[#allocation2 + $0x52]]
    %v1134 = vstv %s1132
    %v1135 = vmul.f32 %v1134, %v1124
    %v1136 = vmul.f32 %v1134, %v1125
    %v1137 = vstv %s1133
    %v1138 = vmul.f32 %v1137, %v1130
    %v1139 = vmul.f32 %v1137, %v1131
    %v1140 = vadd.f32 %v1135, %v1138
    %v1141 = vadd.f32 %v1136, %v1139
    %vm1142 = vmand %vm79, %vm127
    %vm1143 = vmand %vm80, %vm128
    %v1144 = vsel %vm1142, %v1140, 0.0
    %v1145 = vsel %vm1143, %v1141, 0.0
    %v1146 = vadd.f32 %v1117, %v1144
    %v1147 = vadd.f32 %v1118, %v1145
    %1148 = vrot.lane.b32.xlu0 %v173, 109
    %v1149 = vpop.permute.xlu0 %1148
    %1150 = vrot.lane.b32.xlu0 %v174, 109
    %v1151 = vpop.permute.xlu0 %1150
    %vm1152 = vcmp.lt.s32.totalorder %v38, 109
    %v1153 = vsel %vm1152, %v1149, %v1151
    %v1154 = vsel %vm1152, %v1151, %v1149
    %1155 = vrot.lane.b32.xlu0 %v165, 109
    %v1156 = vpop.permute.xlu0 %1155
    %1157 = vrot.lane.b32.xlu0 %v172, 109
    %v1158 = vpop.permute.xlu0 %1157
    %v1159 = vsel %vm1152, %v1156, %v1158
    %v1160 = vsel %vm1152, %v1158, %v1156
    %s1161 = sld [smem:[#allocation2 + $0x22]]
    %s1162 = sld [smem:[#allocation2 + $0x53]]
    %v1163 = vstv %s1161
    %v1164 = vmul.f32 %v1163, %v1153
    %v1165 = vmul.f32 %v1163, %v1154
    %v1166 = vstv %s1162
    %v1167 = vmul.f32 %v1166, %v1159
    %v1168 = vmul.f32 %v1166, %v1160
    %v1169 = vadd.f32 %v1164, %v1167
    %v1170 = vadd.f32 %v1165, %v1168
    %vm1171 = vmand %vm79, %vm133
    %vm1172 = vmand %vm80, %vm134
    %v1173 = vsel %vm1171, %v1169, 0.0
    %v1174 = vsel %vm1172, %v1170, 0.0
    %v1175 = vadd.f32 %v1146, %v1173
    %v1176 = vadd.f32 %v1147, %v1174
    %1177 = vrot.lane.b32.xlu0 %v173, 99
    %v1178 = vpop.permute.xlu0 %1177
    %1179 = vrot.lane.b32.xlu0 %v174, 99
    %v1180 = vpop.permute.xlu0 %1179
    %vm1181 = vcmp.lt.s32.totalorder %v38, 99
    %v1182 = vsel %vm1181, %v1178, %v1180
    %v1183 = vsel %vm1181, %v1180, %v1178
    %1184 = vrot.lane.b32.xlu0 %v165, 99
    %v1185 = vpop.permute.xlu0 %1184
    %1186 = vrot.lane.b32.xlu0 %v172, 99
    %v1187 = vpop.permute.xlu0 %1186
    %v1188 = vsel %vm1181, %v1185, %v1187
    %v1189 = vsel %vm1181, %v1187, %v1185
    %s1190 = sld [smem:[#allocation2 + $0x23]]
    %s1191 = sld [smem:[#allocation2 + $0x54]]
    %v1192 = vstv %s1190
    %v1193 = vmul.f32 %v1192, %v1182
    %v1194 = vmul.f32 %v1192, %v1183
    %v1195 = vstv %s1191
    %v1196 = vmul.f32 %v1195, %v1188
    %v1197 = vmul.f32 %v1195, %v1189
    %v1198 = vadd.f32 %v1193, %v1196
    %v1199 = vadd.f32 %v1194, %v1197
    %vm1200 = vmand %vm85, %vm97
    %vm1201 = vmand %vm86, %vm98
    %v1202 = vsel %vm1200, %v1198, 0.0
    %v1203 = vsel %vm1201, %v1199, 0.0
    %v1204 = vadd.f32 %v1175, %v1202
    %v1205 = vadd.f32 %v1176, %v1203
    %1206 = vrot.lane.b32.xlu0 %v173, 98
    %v1207 = vpop.permute.xlu0 %1206
    %1208 = vrot.lane.b32.xlu0 %v174, 98
    %v1209 = vpop.permute.xlu0 %1208
    %vm1210 = vcmp.lt.s32.totalorder %v38, 98
    %v1211 = vsel %vm1210, %v1207, %v1209
    %v1212 = vsel %vm1210, %v1209, %v1207
    %1213 = vrot.lane.b32.xlu0 %v165, 98
    %v1214 = vpop.permute.xlu0 %1213
    %1215 = vrot.lane.b32.xlu0 %v172, 98
    %v1216 = vpop.permute.xlu0 %1215
    %v1217 = vsel %vm1210, %v1214, %v1216
    %v1218 = vsel %vm1210, %v1216, %v1214
    %s1219 = sld [smem:[#allocation2 + $0x24]]
    %s1220 = sld [smem:[#allocation2 + $0x55]]
    %v1221 = vstv %s1219
    %v1222 = vmul.f32 %v1221, %v1211
    %v1223 = vmul.f32 %v1221, %v1212
    %v1224 = vstv %s1220
    %v1225 = vmul.f32 %v1224, %v1217
    %v1226 = vmul.f32 %v1224, %v1218
    %v1227 = vadd.f32 %v1222, %v1225
    %v1228 = vadd.f32 %v1223, %v1226
    %vm1229 = vmand %vm85, %vm103
    %vm1230 = vmand %vm86, %vm104
    %v1231 = vsel %vm1229, %v1227, 0.0
    %v1232 = vsel %vm1230, %v1228, 0.0
    %v1233 = vadd.f32 %v1204, %v1231
    %v1234 = vadd.f32 %v1205, %v1232
    %1235 = vrot.lane.b32.xlu0 %v173, 97
    %v1236 = vpop.permute.xlu0 %1235
    %1237 = vrot.lane.b32.xlu0 %v174, 97
    %v1238 = vpop.permute.xlu0 %1237
    %vm1239 = vcmp.lt.s32.totalorder %v38, 97
    %v1240 = vsel %vm1239, %v1236, %v1238
    %v1241 = vsel %vm1239, %v1238, %v1236
    %1242 = vrot.lane.b32.xlu0 %v165, 97
    %v1243 = vpop.permute.xlu0 %1242
    %1244 = vrot.lane.b32.xlu0 %v172, 97
    %v1245 = vpop.permute.xlu0 %1244
    %v1246 = vsel %vm1239, %v1243, %v1245
    %v1247 = vsel %vm1239, %v1245, %v1243
    %s1248 = sld [smem:[#allocation2 + $0x25]]
    %s1249 = sld [smem:[#allocation2 + $0x56]]
    %v1250 = vstv %s1248
    %v1251 = vmul.f32 %v1250, %v1240
    %v1252 = vmul.f32 %v1250, %v1241
    %v1253 = vstv %s1249
    %v1254 = vmul.f32 %v1253, %v1246
    %v1255 = vmul.f32 %v1253, %v1247
    %v1256 = vadd.f32 %v1251, %v1254
    %v1257 = vadd.f32 %v1252, %v1255
    %vm1258 = vmand %vm85, %vm109
    %vm1259 = vmand %vm86, %vm110
    %v1260 = vsel %vm1258, %v1256, 0.0
    %v1261 = vsel %vm1259, %v1257, 0.0
    %v1262 = vadd.f32 %v1233, %v1260
    %v1263 = vadd.f32 %v1234, %v1261
    %1264 = vrot.lane.b32.xlu0 %v173, 96
    %v1265 = vpop.permute.xlu0 %1264
    %1266 = vrot.lane.b32.xlu0 %v174, 96
    %v1267 = vpop.permute.xlu0 %1266
    %vm1268 = vcmp.lt.s32.totalorder %v38, 96
    %v1269 = vsel %vm1268, %v1265, %v1267
    %v1270 = vsel %vm1268, %v1267, %v1265
    %1271 = vrot.lane.b32.xlu0 %v165, 96
    %v1272 = vpop.permute.xlu0 %1271
    %1273 = vrot.lane.b32.xlu0 %v172, 96
    %v1274 = vpop.permute.xlu0 %1273
    %v1275 = vsel %vm1268, %v1272, %v1274
    %v1276 = vsel %vm1268, %v1274, %v1272
    %s1277 = sld [smem:[#allocation2 + $0x26]]
    %s1278 = sld [smem:[#allocation2 + $0x57]]
    %v1279 = vstv %s1277
    %v1280 = vmul.f32 %v1279, %v1269
    %v1281 = vmul.f32 %v1279, %v1270
    %v1282 = vstv %s1278
    %v1283 = vmul.f32 %v1282, %v1275
    %v1284 = vmul.f32 %v1282, %v1276
    %v1285 = vadd.f32 %v1280, %v1283
    %v1286 = vadd.f32 %v1281, %v1284
    %vm1287 = vmand %vm85, %vm115
    %vm1288 = vmand %vm86, %vm116
    %v1289 = vsel %vm1287, %v1285, 0.0
    %v1290 = vsel %vm1288, %v1286, 0.0
    %v1291 = vadd.f32 %v1262, %v1289
    %v1292 = vadd.f32 %v1263, %v1290
    %1293 = vrot.lane.b32.xlu0 %v173, 95
    %v1294 = vpop.permute.xlu0 %1293
    %1295 = vrot.lane.b32.xlu0 %v174, 95
    %v1296 = vpop.permute.xlu0 %1295
    %vm1297 = vcmp.lt.s32.totalorder %v38, 95
    %v1298 = vsel %vm1297, %v1294, %v1296
    %v1299 = vsel %vm1297, %v1296, %v1294
    %1300 = vrot.lane.b32.xlu0 %v165, 95
    %v1301 = vpop.permute.xlu0 %1300
    %1302 = vrot.lane.b32.xlu0 %v172, 95
    %v1303 = vpop.permute.xlu0 %1302
    %v1304 = vsel %vm1297, %v1301, %v1303
    %v1305 = vsel %vm1297, %v1303, %v1301
    %s1306 = sld [smem:[#allocation2 + $0x27]]
    %s1307 = sld [smem:[#allocation2 + $0x58]]
    %v1308 = vstv %s1306
    %v1309 = vmul.f32 %v1308, %v1298
    %v1310 = vmul.f32 %v1308, %v1299
    %v1311 = vstv %s1307
    %v1312 = vmul.f32 %v1311, %v1304
    %v1313 = vmul.f32 %v1311, %v1305
    %v1314 = vadd.f32 %v1309, %v1312
    %v1315 = vadd.f32 %v1310, %v1313
    %vm1316 = vmand %vm85, %vm121
    %vm1317 = vmand %vm86, %vm122
    %v1318 = vsel %vm1316, %v1314, 0.0
    %v1319 = vsel %vm1317, %v1315, 0.0
    %v1320 = vadd.f32 %v1291, %v1318
    %v1321 = vadd.f32 %v1292, %v1319
    %1322 = vrot.lane.b32.xlu0 %v173, 94
    %v1323 = vpop.permute.xlu0 %1322
    %1324 = vrot.lane.b32.xlu0 %v174, 94
    %v1325 = vpop.permute.xlu0 %1324
    %vm1326 = vcmp.lt.s32.totalorder %v38, 94
    %v1327 = vsel %vm1326, %v1323, %v1325
    %v1328 = vsel %vm1326, %v1325, %v1323
    %1329 = vrot.lane.b32.xlu0 %v165, 94
    %v1330 = vpop.permute.xlu0 %1329
    %1331 = vrot.lane.b32.xlu0 %v172, 94
    %v1332 = vpop.permute.xlu0 %1331
    %v1333 = vsel %vm1326, %v1330, %v1332
    %v1334 = vsel %vm1326, %v1332, %v1330
    %s1335 = sld [smem:[#allocation2 + $0x28]]
    %s1336 = sld [smem:[#allocation2 + $0x59]]
    %v1337 = vstv %s1335
    %v1338 = vmul.f32 %v1337, %v1327
    %v1339 = vmul.f32 %v1337, %v1328
    %v1340 = vstv %s1336
    %v1341 = vmul.f32 %v1340, %v1333
    %v1342 = vmul.f32 %v1340, %v1334
    %v1343 = vadd.f32 %v1338, %v1341
    %v1344 = vadd.f32 %v1339, %v1342
    %vm1345 = vmand %vm85, %vm127
    %vm1346 = vmand %vm86, %vm128
    %v1347 = vsel %vm1345, %v1343, 0.0
    %v1348 = vsel %vm1346, %v1344, 0.0
    %v1349 = vadd.f32 %v1320, %v1347
    %v1350 = vadd.f32 %v1321, %v1348
    %1351 = vrot.lane.b32.xlu0 %v173, 93
    %v1352 = vpop.permute.xlu0 %1351
    %1353 = vrot.lane.b32.xlu0 %v174, 93
    %v1354 = vpop.permute.xlu0 %1353
    %vm1355 = vcmp.lt.s32.totalorder %v38, 93
    %v1356 = vsel %vm1355, %v1352, %v1354
    %v1357 = vsel %vm1355, %v1354, %v1352
    %1358 = vrot.lane.b32.xlu0 %v165, 93
    %v1359 = vpop.permute.xlu0 %1358
    %1360 = vrot.lane.b32.xlu0 %v172, 93
    %v1361 = vpop.permute.xlu0 %1360
    %v1362 = vsel %vm1355, %v1359, %v1361
    %v1363 = vsel %vm1355, %v1361, %v1359
    %s1364 = sld [smem:[#allocation2 + $0x29]]
    %s1365 = sld [smem:[#allocation2 + $0x5a]]
    %v1366 = vstv %s1364
    %v1367 = vmul.f32 %v1366, %v1356
    %v1368 = vmul.f32 %v1366, %v1357
    %v1369 = vstv %s1365
    %v1370 = vmul.f32 %v1369, %v1362
    %v1371 = vmul.f32 %v1369, %v1363
    %v1372 = vadd.f32 %v1367, %v1370
    %v1373 = vadd.f32 %v1368, %v1371
    %vm1374 = vmand %vm85, %vm133
    %vm1375 = vmand %vm86, %vm134
    %v1376 = vsel %vm1374, %v1372, 0.0
    %v1377 = vsel %vm1375, %v1373, 0.0
    %v1378 = vadd.f32 %v1349, %v1376
    %v1379 = vadd.f32 %v1350, %v1377
    %1380 = vrot.lane.b32.xlu0 %v173, 83
    %v1381 = vpop.permute.xlu0 %1380
    %1382 = vrot.lane.b32.xlu0 %v174, 83
    %v1383 = vpop.permute.xlu0 %1382
    %vm1384 = vcmp.lt.s32.totalorder %v38, 83
    %v1385 = vsel %vm1384, %v1381, %v1383
    %v1386 = vsel %vm1384, %v1383, %v1381
    %1387 = vrot.lane.b32.xlu0 %v165, 83
    %v1388 = vpop.permute.xlu0 %1387
    %1389 = vrot.lane.b32.xlu0 %v172, 83
    %v1390 = vpop.permute.xlu0 %1389
    %v1391 = vsel %vm1384, %v1388, %v1390
    %v1392 = vsel %vm1384, %v1390, %v1388
    %s1393 = sld [smem:[#allocation2 + $0x2a]]
    %s1394 = sld [smem:[#allocation2 + $0x5b]]
    %v1395 = vstv %s1393
    %v1396 = vmul.f32 %v1395, %v1385
    %v1397 = vmul.f32 %v1395, %v1386
    %v1398 = vstv %s1394
    %v1399 = vmul.f32 %v1398, %v1391
    %v1400 = vmul.f32 %v1398, %v1392
    %v1401 = vadd.f32 %v1396, %v1399
    %v1402 = vadd.f32 %v1397, %v1400
    %vm1403 = vmand %vm91, %vm97
    %vm1404 = vmand %vm92, %vm98
    %v1405 = vsel %vm1403, %v1401, 0.0
    %v1406 = vsel %vm1404, %v1402, 0.0
    %v1407 = vadd.f32 %v1378, %v1405
    %v1408 = vadd.f32 %v1379, %v1406
    %1409 = vrot.lane.b32.xlu0 %v173, 82
    %v1410 = vpop.permute.xlu0 %1409
    %1411 = vrot.lane.b32.xlu0 %v174, 82
    %v1412 = vpop.permute.xlu0 %1411
    %vm1413 = vcmp.lt.s32.totalorder %v38, 82
    %v1414 = vsel %vm1413, %v1410, %v1412
    %v1415 = vsel %vm1413, %v1412, %v1410
    %1416 = vrot.lane.b32.xlu0 %v165, 82
    %v1417 = vpop.permute.xlu0 %1416
    %1418 = vrot.lane.b32.xlu0 %v172, 82
    %v1419 = vpop.permute.xlu0 %1418
    %v1420 = vsel %vm1413, %v1417, %v1419
    %v1421 = vsel %vm1413, %v1419, %v1417
    %s1422 = sld [smem:[#allocation2 + $0x2b]]
    %s1423 = sld [smem:[#allocation2 + $0x5c]]
    %v1424 = vstv %s1422
    %v1425 = vmul.f32 %v1424, %v1414
    %v1426 = vmul.f32 %v1424, %v1415
    %v1427 = vstv %s1423
    %v1428 = vmul.f32 %v1427, %v1420
    %v1429 = vmul.f32 %v1427, %v1421
    %v1430 = vadd.f32 %v1425, %v1428
    %v1431 = vadd.f32 %v1426, %v1429
    %vm1432 = vmand %vm91, %vm103
    %vm1433 = vmand %vm92, %vm104
    %v1434 = vsel %vm1432, %v1430, 0.0
    %v1435 = vsel %vm1433, %v1431, 0.0
    %v1436 = vadd.f32 %v1407, %v1434
    %v1437 = vadd.f32 %v1408, %v1435
    %1438 = vrot.lane.b32.xlu0 %v173, 81
    %v1439 = vpop.permute.xlu0 %1438
    %1440 = vrot.lane.b32.xlu0 %v174, 81
    %v1441 = vpop.permute.xlu0 %1440
    %vm1442 = vcmp.lt.s32.totalorder %v38, 81
    %v1443 = vsel %vm1442, %v1439, %v1441
    %v1444 = vsel %vm1442, %v1441, %v1439
    %1445 = vrot.lane.b32.xlu0 %v165, 81
    %v1446 = vpop.permute.xlu0 %1445
    %1447 = vrot.lane.b32.xlu0 %v172, 81
    %v1448 = vpop.permute.xlu0 %1447
    %v1449 = vsel %vm1442, %v1446, %v1448
    %v1450 = vsel %vm1442, %v1448, %v1446
    %s1451 = sld [smem:[#allocation2 + $0x2c]]
    %s1452 = sld [smem:[#allocation2 + $0x5d]]
    %v1453 = vstv %s1451
    %v1454 = vmul.f32 %v1453, %v1443
    %v1455 = vmul.f32 %v1453, %v1444
    %v1456 = vstv %s1452
    %v1457 = vmul.f32 %v1456, %v1449
    %v1458 = vmul.f32 %v1456, %v1450
    %v1459 = vadd.f32 %v1454, %v1457
    %v1460 = vadd.f32 %v1455, %v1458
    %vm1461 = vmand %vm91, %vm109
    %vm1462 = vmand %vm92, %vm110
    %v1463 = vsel %vm1461, %v1459, 0.0
    %v1464 = vsel %vm1462, %v1460, 0.0
    %v1465 = vadd.f32 %v1436, %v1463
    %v1466 = vadd.f32 %v1437, %v1464
    %1467 = vrot.lane.b32.xlu0 %v173, 80
    %v1468 = vpop.permute.xlu0 %1467
    %1469 = vrot.lane.b32.xlu0 %v174, 80
    %v1470 = vpop.permute.xlu0 %1469
    %vm1471 = vcmp.lt.s32.totalorder %v38, 80
    %v1472 = vsel %vm1471, %v1468, %v1470
    %v1473 = vsel %vm1471, %v1470, %v1468
    %1474 = vrot.lane.b32.xlu0 %v165, 80
    %v1475 = vpop.permute.xlu0 %1474
    %1476 = vrot.lane.b32.xlu0 %v172, 80
    %v1477 = vpop.permute.xlu0 %1476
    %v1478 = vsel %vm1471, %v1475, %v1477
    %v1479 = vsel %vm1471, %v1477, %v1475
    %s1480 = sld [smem:[#allocation2 + $0x2d]]
    %s1481 = sld [smem:[#allocation2 + $0x5e]]
    %v1482 = vstv %s1480
    %v1483 = vmul.f32 %v1482, %v1472
    %v1484 = vmul.f32 %v1482, %v1473
    %v1485 = vstv %s1481
    %v1486 = vmul.f32 %v1485, %v1478
    %v1487 = vmul.f32 %v1485, %v1479
    %v1488 = vadd.f32 %v1483, %v1486
    %v1489 = vadd.f32 %v1484, %v1487
    %vm1490 = vmand %vm91, %vm115
    %vm1491 = vmand %vm92, %vm116
    %v1492 = vsel %vm1490, %v1488, 0.0
    %v1493 = vsel %vm1491, %v1489, 0.0
    %v1494 = vadd.f32 %v1465, %v1492
    %v1495 = vadd.f32 %v1466, %v1493
    %1496 = vrot.lane.b32.xlu0 %v173, 79
    %v1497 = vpop.permute.xlu0 %1496
    %1498 = vrot.lane.b32.xlu0 %v174, 79
    %v1499 = vpop.permute.xlu0 %1498
    %vm1500 = vcmp.lt.s32.totalorder %v38, 79
    %v1501 = vsel %vm1500, %v1497, %v1499
    %v1502 = vsel %vm1500, %v1499, %v1497
    %1503 = vrot.lane.b32.xlu0 %v165, 79
    %v1504 = vpop.permute.xlu0 %1503
    %1505 = vrot.lane.b32.xlu0 %v172, 79
    %v1506 = vpop.permute.xlu0 %1505
    %v1507 = vsel %vm1500, %v1504, %v1506
    %v1508 = vsel %vm1500, %v1506, %v1504
    %s1509 = sld [smem:[#allocation2 + $0x2e]]
    %s1510 = sld [smem:[#allocation2 + $0x5f]]
    %v1511 = vstv %s1509
    %v1512 = vmul.f32 %v1511, %v1501
    %v1513 = vmul.f32 %v1511, %v1502
    %v1514 = vstv %s1510
    %v1515 = vmul.f32 %v1514, %v1507
    %v1516 = vmul.f32 %v1514, %v1508
    %v1517 = vadd.f32 %v1512, %v1515
    %v1518 = vadd.f32 %v1513, %v1516
    %vm1519 = vmand %vm91, %vm121
    %vm1520 = vmand %vm92, %vm122
    %v1521 = vsel %vm1519, %v1517, 0.0
    %v1522 = vsel %vm1520, %v1518, 0.0
    %v1523 = vadd.f32 %v1494, %v1521
    %v1524 = vadd.f32 %v1495, %v1522
    %1525 = vrot.lane.b32.xlu0 %v173, 78
    %v1526 = vpop.permute.xlu0 %1525
    %1527 = vrot.lane.b32.xlu0 %v174, 78
    %v1528 = vpop.permute.xlu0 %1527
    %vm1529 = vcmp.lt.s32.totalorder %v38, 78
    %v1530 = vsel %vm1529, %v1526, %v1528
    %v1531 = vsel %vm1529, %v1528, %v1526
    %1532 = vrot.lane.b32.xlu0 %v165, 78
    %v1533 = vpop.permute.xlu0 %1532
    %1534 = vrot.lane.b32.xlu0 %v172, 78
    %v1535 = vpop.permute.xlu0 %1534
    %v1536 = vsel %vm1529, %v1533, %v1535
    %v1537 = vsel %vm1529, %v1535, %v1533
    %s1538 = sld [smem:[#allocation2 + $0x2f]]
    %s1539 = sld [smem:[#allocation2 + $0x60]]
    %v1540 = vstv %s1538
    %v1541 = vmul.f32 %v1540, %v1530
    %v1542 = vmul.f32 %v1540, %v1531
    %v1543 = vstv %s1539
    %v1544 = vmul.f32 %v1543, %v1536
    %v1545 = vmul.f32 %v1543, %v1537
    %v1546 = vadd.f32 %v1541, %v1544
    %v1547 = vadd.f32 %v1542, %v1545
    %vm1548 = vmand %vm91, %vm127
    %vm1549 = vmand %vm92, %vm128
    %v1550 = vsel %vm1548, %v1546, 0.0
    %v1551 = vsel %vm1549, %v1547, 0.0
    %v1552 = vadd.f32 %v1523, %v1550
    %v1553 = vadd.f32 %v1524, %v1551
    %1554 = vrot.lane.b32.xlu0 %v173, 77
    %v1555 = vpop.permute.xlu0 %1554
    %1556 = vrot.lane.b32.xlu0 %v174, 77
    %v1557 = vpop.permute.xlu0 %1556
    %vm1558 = vcmp.lt.s32.totalorder %v38, 77
    %v1559 = vsel %vm1558, %v1555, %v1557
    %v1560 = vsel %vm1558, %v1557, %v1555
    %1561 = vrot.lane.b32.xlu0 %v165, 77
    %v1562 = vpop.permute.xlu0 %1561
    %1563 = vrot.lane.b32.xlu0 %v172, 77
    %v1564 = vpop.permute.xlu0 %1563
    %v1565 = vsel %vm1558, %v1562, %v1564
    %v1566 = vsel %vm1558, %v1564, %v1562
    %s1567 = sld [smem:[#allocation2 + $0x30]]
    %s1568 = sld [smem:[#allocation2 + $0x61]]
    %v1569 = vstv %s1567
    %v1570 = vmul.f32 %v1569, %v1559
    %v1571 = vmul.f32 %v1569, %v1560
    %v1572 = vstv %s1568
    %v1573 = vmul.f32 %v1572, %v1565
    %v1574 = vmul.f32 %v1572, %v1566
    %v1575 = vadd.f32 %v1570, %v1573
    %v1576 = vadd.f32 %v1571, %v1574
    %vm1577 = vmand %vm91, %vm133
    %vm1578 = vmand %vm92, %vm134
    %v1579 = vsel %vm1577, %v1575, 0.0
    %v1580 = vsel %vm1578, %v1576, 0.0
    %v1581 = vadd.f32 %v1552, %v1579
    %v1582 = vadd.f32 %v1553, %v1580
    %v1583 = vxor.u32 %v1581, 2147483648
    %v1584 = vxor.u32 %v1582, 2147483648
    %v1585 = vmul.f32 %v1583, 1.442695
    %v1586 = vpow.pop %v1585
    %v1587 = vmul.f32 %v1584, 1.442695
    %v1588 = vpow.pop %v1587
    %v1589 = vadd.f32 %v1586, 1.0
    %v1590 = vadd.f32 %v1588, 1.0
    %v1591 = vrcp.pop %v1589
    %v1592 = vmul.f32 1.0, %v1591
    %v1593 = vrcp.pop %v1590
    %v1594 = vmul.f32 1.0, %v1593
    %v1595 = vlaneseq
    %v1596 = vshrl.u32 %v1595, 7
    %v1597 = vsub.s32 0, %v1596
    %v1598 = vrot.slane %v1592, %v1597
    %v1599 = vlaneseq
    %v1600 = vshrl.u32 %v1599, 7
    %v1601 = vsub.s32 0, %v1600
    %v1602 = vrot.slane %v1594, %v1601
    %v1605 = vcombine.low %v1598, %v1602
    %v1607 = vmul.f32 %v138, %v1605
    %s1608 = smul.addr %s135, 4
    %s1609 = scalar_lea.vmem [#allocation7], %s1608
    %1610 = vst [vmem:[%s1609] sm:$0xff] %v1607
    %s1611 = sadd.s32 %s135, 2
    %s1612 = smul.addr %s1611, 4
    %s1613 = scalar_lea.vmem [#allocation6], %s1612
    %v1614 = vld [vmem:[%s1613] sm:$0xff]
    %v1616 = vcombine.high %v1614, %v1614
    %v1618 = vsel %vm142, %v1614, 0.0
    %v1619 = vrot.slane %v1618, 4
    %v1620 = vadd.f32 %v1618, %v1619
    %v1621 = vrot.slane %v1620, 2
    %v1622 = vadd.f32 %v1620, %v1621
    %v1623 = vrot.slane %v1622, 1
    %v1624 = vadd.f32 %v1622, %v1623
    %v1625 = vsel %vm142, %v1616, 0.0
    %v1626 = vrot.slane %v1625, 4
    %v1627 = vadd.f32 %v1625, %v1626
    %v1628 = vrot.slane %v1627, 2
    %v1629 = vadd.f32 %v1627, %v1628
    %v1630 = vrot.slane %v1629, 1
    %v1631 = vadd.f32 %v1629, %v1630
    %v1632 = vadd.f32 %v1624, 0.0
    %v1633 = vadd.f32 %v1631, 0.0
    %v1634 = vsel %vm142, %v1614, -inf
    %v1635 = vrot.slane %v1634, 4
    %v1636 = vmax.f32 %v1634, %v1635
    %v1637 = vrot.slane %v1636, 2
    %v1638 = vmax.f32 %v1636, %v1637
    %v1639 = vrot.slane %v1638, 1
    %v1640 = vmax.f32 %v1638, %v1639
    %v1641 = vsel %vm142, %v1616, -inf
    %v1642 = vrot.slane %v1641, 4
    %v1643 = vmax.f32 %v1641, %v1642
    %v1644 = vrot.slane %v1643, 2
    %v1645 = vmax.f32 %v1643, %v1644
    %v1646 = vrot.slane %v1645, 1
    %v1647 = vmax.f32 %v1645, %v1646
    %v1648 = vmul.f32 %v1632, 0.25
    %v1649 = vmul.f32 %v1633, 0.25
    %1650 = vrot.lane.b32.xlu0 %v1648, 51
    %v1651 = vpop.permute.xlu0 %1650
    %1652 = vrot.lane.b32.xlu0 %v1649, 51
    %v1653 = vpop.permute.xlu0 %1652
    %v1654 = vsel %vm179, %v1651, %v1653
    %v1655 = vsel %vm179, %v1653, %v1651
    %1656 = vrot.lane.b32.xlu0 %v1640, 51
    %v1657 = vpop.permute.xlu0 %1656
    %1658 = vrot.lane.b32.xlu0 %v1647, 51
    %v1659 = vpop.permute.xlu0 %1658
    %v1660 = vsel %vm179, %v1657, %v1659
    %v1661 = vsel %vm179, %v1659, %v1657
    %s1662 = sld [smem:[#allocation2]]
    %s1663 = sld [smem:[#allocation2 + $0x31]]
    %v1664 = vstv %s1662
    %v1665 = vmul.f32 %v1664, %v1655
    %v1666 = vmul.f32 %v1664, %v1654
    %v1667 = vstv %s1663
    %v1668 = vmul.f32 %v1667, %v1661
    %v1669 = vmul.f32 %v1667, %v1660
    %v1670 = vadd.f32 %v1665, %v1668
    %v1671 = vadd.f32 %v1666, %v1669
    %v1672 = vsel %vm198, %v1670, 0.0
    %v1673 = vsel %vm199, %v1671, 0.0
    %v1674 = vadd.f32 %v1672, 0.0
    %v1675 = vadd.f32 %v1673, 0.0
    %1676 = vrot.lane.b32.xlu0 %v1648, 50
    %v1677 = vpop.permute.xlu0 %1676
    %1678 = vrot.lane.b32.xlu0 %v1649, 50
    %v1679 = vpop.permute.xlu0 %1678
    %v1680 = vsel %vm208, %v1677, %v1679
    %v1681 = vsel %vm208, %v1679, %v1677
    %1682 = vrot.lane.b32.xlu0 %v1640, 50
    %v1683 = vpop.permute.xlu0 %1682
    %1684 = vrot.lane.b32.xlu0 %v1647, 50
    %v1685 = vpop.permute.xlu0 %1684
    %v1686 = vsel %vm208, %v1683, %v1685
    %v1687 = vsel %vm208, %v1685, %v1683
    %s1688 = sld [smem:[#allocation2 + $0x1]]
    %s1689 = sld [smem:[#allocation2 + $0x32]]
    %v1690 = vstv %s1688
    %v1691 = vmul.f32 %v1690, %v1681
    %v1692 = vmul.f32 %v1690, %v1680
    %v1693 = vstv %s1689
    %v1694 = vmul.f32 %v1693, %v1687
    %v1695 = vmul.f32 %v1693, %v1686
    %v1696 = vadd.f32 %v1691, %v1694
    %v1697 = vadd.f32 %v1692, %v1695
    %v1698 = vsel %vm227, %v1696, 0.0
    %v1699 = vsel %vm228, %v1697, 0.0
    %v1700 = vadd.f32 %v1674, %v1698
    %v1701 = vadd.f32 %v1675, %v1699
    %1702 = vrot.lane.b32.xlu0 %v1648, 49
    %v1703 = vpop.permute.xlu0 %1702
    %1704 = vrot.lane.b32.xlu0 %v1649, 49
    %v1705 = vpop.permute.xlu0 %1704
    %v1706 = vsel %vm237, %v1703, %v1705
    %v1707 = vsel %vm237, %v1705, %v1703
    %1708 = vrot.lane.b32.xlu0 %v1640, 49
    %v1709 = vpop.permute.xlu0 %1708
    %1710 = vrot.lane.b32.xlu0 %v1647, 49
    %v1711 = vpop.permute.xlu0 %1710
    %v1712 = vsel %vm237, %v1709, %v1711
    %v1713 = vsel %vm237, %v1711, %v1709
    %s1714 = sld [smem:[#allocation2 + $0x2]]
    %s1715 = sld [smem:[#allocation2 + $0x33]]
    %v1716 = vstv %s1714
    %v1717 = vmul.f32 %v1716, %v1707
    %v1718 = vmul.f32 %v1716, %v1706
    %v1719 = vstv %s1715
    %v1720 = vmul.f32 %v1719, %v1713
    %v1721 = vmul.f32 %v1719, %v1712
    %v1722 = vadd.f32 %v1717, %v1720
    %v1723 = vadd.f32 %v1718, %v1721
    %v1724 = vsel %vm256, %v1722, 0.0
    %v1725 = vsel %vm257, %v1723, 0.0
    %v1726 = vadd.f32 %v1700, %v1724
    %v1727 = vadd.f32 %v1701, %v1725
    %1728 = vrot.lane.b32.xlu0 %v1648, 48
    %v1729 = vpop.permute.xlu0 %1728
    %1730 = vrot.lane.b32.xlu0 %v1649, 48
    %v1731 = vpop.permute.xlu0 %1730
    %v1732 = vsel %vm266, %v1729, %v1731
    %v1733 = vsel %vm266, %v1731, %v1729
    %1734 = vrot.lane.b32.xlu0 %v1640, 48
    %v1735 = vpop.permute.xlu0 %1734
    %1736 = vrot.lane.b32.xlu0 %v1647, 48
    %v1737 = vpop.permute.xlu0 %1736
    %v1738 = vsel %vm266, %v1735, %v1737
    %v1739 = vsel %vm266, %v1737, %v1735
    %s1740 = sld [smem:[#allocation2 + $0x3]]
    %s1741 = sld [smem:[#allocation2 + $0x34]]
    %v1742 = vstv %s1740
    %v1743 = vmul.f32 %v1742, %v1733
    %v1744 = vmul.f32 %v1742, %v1732
    %v1745 = vstv %s1741
    %v1746 = vmul.f32 %v1745, %v1739
    %v1747 = vmul.f32 %v1745, %v1738
    %v1748 = vadd.f32 %v1743, %v1746
    %v1749 = vadd.f32 %v1744, %v1747
    %v1750 = vsel %vm285, %v1748, 0.0
    %v1751 = vsel %vm286, %v1749, 0.0
    %v1752 = vadd.f32 %v1726, %v1750
    %v1753 = vadd.f32 %v1727, %v1751
    %1754 = vrot.lane.b32.xlu0 %v1648, 47
    %v1755 = vpop.permute.xlu0 %1754
    %1756 = vrot.lane.b32.xlu0 %v1649, 47
    %v1757 = vpop.permute.xlu0 %1756
    %v1758 = vsel %vm295, %v1755, %v1757
    %v1759 = vsel %vm295, %v1757, %v1755
    %1760 = vrot.lane.b32.xlu0 %v1640, 47
    %v1761 = vpop.permute.xlu0 %1760
    %1762 = vrot.lane.b32.xlu0 %v1647, 47
    %v1763 = vpop.permute.xlu0 %1762
    %v1764 = vsel %vm295, %v1761, %v1763
    %v1765 = vsel %vm295, %v1763, %v1761
    %s1766 = sld [smem:[#allocation2 + $0x4]]
    %s1767 = sld [smem:[#allocation2 + $0x35]]
    %v1768 = vstv %s1766
    %v1769 = vmul.f32 %v1768, %v1759
    %v1770 = vmul.f32 %v1768, %v1758
    %v1771 = vstv %s1767
    %v1772 = vmul.f32 %v1771, %v1765
    %v1773 = vmul.f32 %v1771, %v1764
    %v1774 = vadd.f32 %v1769, %v1772
    %v1775 = vadd.f32 %v1770, %v1773
    %v1776 = vsel %vm314, %v1774, 0.0
    %v1777 = vsel %vm315, %v1775, 0.0
    %v1778 = vadd.f32 %v1752, %v1776
    %v1779 = vadd.f32 %v1753, %v1777
    %1780 = vrot.lane.b32.xlu0 %v1648, 46
    %v1781 = vpop.permute.xlu0 %1780
    %1782 = vrot.lane.b32.xlu0 %v1649, 46
    %v1783 = vpop.permute.xlu0 %1782
    %v1784 = vsel %vm324, %v1781, %v1783
    %v1785 = vsel %vm324, %v1783, %v1781
    %1786 = vrot.lane.b32.xlu0 %v1640, 46
    %v1787 = vpop.permute.xlu0 %1786
    %1788 = vrot.lane.b32.xlu0 %v1647, 46
    %v1789 = vpop.permute.xlu0 %1788
    %v1790 = vsel %vm324, %v1787, %v1789
    %v1791 = vsel %vm324, %v1789, %v1787
    %s1792 = sld [smem:[#allocation2 + $0x5]]
    %s1793 = sld [smem:[#allocation2 + $0x36]]
    %v1794 = vstv %s1792
    %v1795 = vmul.f32 %v1794, %v1785
    %v1796 = vmul.f32 %v1794, %v1784
    %v1797 = vstv %s1793
    %v1798 = vmul.f32 %v1797, %v1791
    %v1799 = vmul.f32 %v1797, %v1790
    %v1800 = vadd.f32 %v1795, %v1798
    %v1801 = vadd.f32 %v1796, %v1799
    %v1802 = vsel %vm343, %v1800, 0.0
    %v1803 = vsel %vm344, %v1801, 0.0
    %v1804 = vadd.f32 %v1778, %v1802
    %v1805 = vadd.f32 %v1779, %v1803
    %1806 = vrot.lane.b32.xlu0 %v1648, 45
    %v1807 = vpop.permute.xlu0 %1806
    %1808 = vrot.lane.b32.xlu0 %v1649, 45
    %v1809 = vpop.permute.xlu0 %1808
    %v1810 = vsel %vm353, %v1807, %v1809
    %v1811 = vsel %vm353, %v1809, %v1807
    %1812 = vrot.lane.b32.xlu0 %v1640, 45
    %v1813 = vpop.permute.xlu0 %1812
    %1814 = vrot.lane.b32.xlu0 %v1647, 45
    %v1815 = vpop.permute.xlu0 %1814
    %v1816 = vsel %vm353, %v1813, %v1815
    %v1817 = vsel %vm353, %v1815, %v1813
    %s1818 = sld [smem:[#allocation2 + $0x6]]
    %s1819 = sld [smem:[#allocation2 + $0x37]]
    %v1820 = vstv %s1818
    %v1821 = vmul.f32 %v1820, %v1811
    %v1822 = vmul.f32 %v1820, %v1810
    %v1823 = vstv %s1819
    %v1824 = vmul.f32 %v1823, %v1817
    %v1825 = vmul.f32 %v1823, %v1816
    %v1826 = vadd.f32 %v1821, %v1824
    %v1827 = vadd.f32 %v1822, %v1825
    %v1828 = vsel %vm372, %v1826, 0.0
    %v1829 = vsel %vm373, %v1827, 0.0
    %v1830 = vadd.f32 %v1804, %v1828
    %v1831 = vadd.f32 %v1805, %v1829
    %1832 = vrot.lane.b32.xlu0 %v1648, 35
    %v1833 = vpop.permute.xlu0 %1832
    %1834 = vrot.lane.b32.xlu0 %v1649, 35
    %v1835 = vpop.permute.xlu0 %1834
    %v1836 = vsel %vm382, %v1833, %v1835
    %v1837 = vsel %vm382, %v1835, %v1833
    %1838 = vrot.lane.b32.xlu0 %v1640, 35
    %v1839 = vpop.permute.xlu0 %1838
    %1840 = vrot.lane.b32.xlu0 %v1647, 35
    %v1841 = vpop.permute.xlu0 %1840
    %v1842 = vsel %vm382, %v1839, %v1841
    %v1843 = vsel %vm382, %v1841, %v1839
    %s1844 = sld [smem:[#allocation2 + $0x7]]
    %s1845 = sld [smem:[#allocation2 + $0x38]]
    %v1846 = vstv %s1844
    %v1847 = vmul.f32 %v1846, %v1837
    %v1848 = vmul.f32 %v1846, %v1836
    %v1849 = vstv %s1845
    %v1850 = vmul.f32 %v1849, %v1843
    %v1851 = vmul.f32 %v1849, %v1842
    %v1852 = vadd.f32 %v1847, %v1850
    %v1853 = vadd.f32 %v1848, %v1851
    %v1854 = vsel %vm401, %v1852, 0.0
    %v1855 = vsel %vm402, %v1853, 0.0
    %v1856 = vadd.f32 %v1830, %v1854
    %v1857 = vadd.f32 %v1831, %v1855
    %1858 = vrot.lane.b32.xlu0 %v1648, 34
    %v1859 = vpop.permute.xlu0 %1858
    %1860 = vrot.lane.b32.xlu0 %v1649, 34
    %v1861 = vpop.permute.xlu0 %1860
    %v1862 = vsel %vm411, %v1859, %v1861
    %v1863 = vsel %vm411, %v1861, %v1859
    %1864 = vrot.lane.b32.xlu0 %v1640, 34
    %v1865 = vpop.permute.xlu0 %1864
    %1866 = vrot.lane.b32.xlu0 %v1647, 34
    %v1867 = vpop.permute.xlu0 %1866
    %v1868 = vsel %vm411, %v1865, %v1867
    %v1869 = vsel %vm411, %v1867, %v1865
    %s1870 = sld [smem:[#allocation2 + $0x8]]
    %s1871 = sld [smem:[#allocation2 + $0x39]]
    %v1872 = vstv %s1870
    %v1873 = vmul.f32 %v1872, %v1863
    %v1874 = vmul.f32 %v1872, %v1862
    %v1875 = vstv %s1871
    %v1876 = vmul.f32 %v1875, %v1869
    %v1877 = vmul.f32 %v1875, %v1868
    %v1878 = vadd.f32 %v1873, %v1876
    %v1879 = vadd.f32 %v1874, %v1877
    %v1880 = vsel %vm430, %v1878, 0.0
    %v1881 = vsel %vm431, %v1879, 0.0
    %v1882 = vadd.f32 %v1856, %v1880
    %v1883 = vadd.f32 %v1857, %v1881
    %1884 = vrot.lane.b32.xlu0 %v1648, 33
    %v1885 = vpop.permute.xlu0 %1884
    %1886 = vrot.lane.b32.xlu0 %v1649, 33
    %v1887 = vpop.permute.xlu0 %1886
    %v1888 = vsel %vm440, %v1885, %v1887
    %v1889 = vsel %vm440, %v1887, %v1885
    %1890 = vrot.lane.b32.xlu0 %v1640, 33
    %v1891 = vpop.permute.xlu0 %1890
    %1892 = vrot.lane.b32.xlu0 %v1647, 33
    %v1893 = vpop.permute.xlu0 %1892
    %v1894 = vsel %vm440, %v1891, %v1893
    %v1895 = vsel %vm440, %v1893, %v1891
    %s1896 = sld [smem:[#allocation2 + $0x9]]
    %s1897 = sld [smem:[#allocation2 + $0x3a]]
    %v1898 = vstv %s1896
    %v1899 = vmul.f32 %v1898, %v1889
    %v1900 = vmul.f32 %v1898, %v1888
    %v1901 = vstv %s1897
    %v1902 = vmul.f32 %v1901, %v1895
    %v1903 = vmul.f32 %v1901, %v1894
    %v1904 = vadd.f32 %v1899, %v1902
    %v1905 = vadd.f32 %v1900, %v1903
    %v1906 = vsel %vm459, %v1904, 0.0
    %v1907 = vsel %vm460, %v1905, 0.0
    %v1908 = vadd.f32 %v1882, %v1906
    %v1909 = vadd.f32 %v1883, %v1907
    %1910 = vrot.lane.b32.xlu0 %v1648, 32
    %v1911 = vpop.permute.xlu0 %1910
    %1912 = vrot.lane.b32.xlu0 %v1649, 32
    %v1913 = vpop.permute.xlu0 %1912
    %v1914 = vsel %vm469, %v1911, %v1913
    %v1915 = vsel %vm469, %v1913, %v1911
    %1916 = vrot.lane.b32.xlu0 %v1640, 32
    %v1917 = vpop.permute.xlu0 %1916
    %1918 = vrot.lane.b32.xlu0 %v1647, 32
    %v1919 = vpop.permute.xlu0 %1918
    %v1920 = vsel %vm469, %v1917, %v1919
    %v1921 = vsel %vm469, %v1919, %v1917
    %s1922 = sld [smem:[#allocation2 + $0xa]]
    %s1923 = sld [smem:[#allocation2 + $0x3b]]
    %v1924 = vstv %s1922
    %v1925 = vmul.f32 %v1924, %v1915
    %v1926 = vmul.f32 %v1924, %v1914
    %v1927 = vstv %s1923
    %v1928 = vmul.f32 %v1927, %v1921
    %v1929 = vmul.f32 %v1927, %v1920
    %v1930 = vadd.f32 %v1925, %v1928
    %v1931 = vadd.f32 %v1926, %v1929
    %v1932 = vsel %vm488, %v1930, 0.0
    %v1933 = vsel %vm489, %v1931, 0.0
    %v1934 = vadd.f32 %v1908, %v1932
    %v1935 = vadd.f32 %v1909, %v1933
    %1936 = vrot.lane.b32.xlu0 %v1648, 31
    %v1937 = vpop.permute.xlu0 %1936
    %1938 = vrot.lane.b32.xlu0 %v1649, 31
    %v1939 = vpop.permute.xlu0 %1938
    %v1940 = vsel %vm498, %v1937, %v1939
    %v1941 = vsel %vm498, %v1939, %v1937
    %1942 = vrot.lane.b32.xlu0 %v1640, 31
    %v1943 = vpop.permute.xlu0 %1942
    %1944 = vrot.lane.b32.xlu0 %v1647, 31
    %v1945 = vpop.permute.xlu0 %1944
    %v1946 = vsel %vm498, %v1943, %v1945
    %v1947 = vsel %vm498, %v1945, %v1943
    %s1948 = sld [smem:[#allocation2 + $0xb]]
    %s1949 = sld [smem:[#allocation2 + $0x3c]]
    %v1950 = vstv %s1948
    %v1951 = vmul.f32 %v1950, %v1941
    %v1952 = vmul.f32 %v1950, %v1940
    %v1953 = vstv %s1949
    %v1954 = vmul.f32 %v1953, %v1947
    %v1955 = vmul.f32 %v1953, %v1946
    %v1956 = vadd.f32 %v1951, %v1954
    %v1957 = vadd.f32 %v1952, %v1955
    %v1958 = vsel %vm517, %v1956, 0.0
    %v1959 = vsel %vm518, %v1957, 0.0
    %v1960 = vadd.f32 %v1934, %v1958
    %v1961 = vadd.f32 %v1935, %v1959
    %1962 = vrot.lane.b32.xlu0 %v1648, 30
    %v1963 = vpop.permute.xlu0 %1962
    %1964 = vrot.lane.b32.xlu0 %v1649, 30
    %v1965 = vpop.permute.xlu0 %1964
    %v1966 = vsel %vm527, %v1963, %v1965
    %v1967 = vsel %vm527, %v1965, %v1963
    %1968 = vrot.lane.b32.xlu0 %v1640, 30
    %v1969 = vpop.permute.xlu0 %1968
    %1970 = vrot.lane.b32.xlu0 %v1647, 30
    %v1971 = vpop.permute.xlu0 %1970
    %v1972 = vsel %vm527, %v1969, %v1971
    %v1973 = vsel %vm527, %v1971, %v1969
    %s1974 = sld [smem:[#allocation2 + $0xc]]
    %s1975 = sld [smem:[#allocation2 + $0x3d]]
    %v1976 = vstv %s1974
    %v1977 = vmul.f32 %v1976, %v1967
    %v1978 = vmul.f32 %v1976, %v1966
    %v1979 = vstv %s1975
    %v1980 = vmul.f32 %v1979, %v1973
    %v1981 = vmul.f32 %v1979, %v1972
    %v1982 = vadd.f32 %v1977, %v1980
    %v1983 = vadd.f32 %v1978, %v1981
    %v1984 = vsel %vm546, %v1982, 0.0
    %v1985 = vsel %vm547, %v1983, 0.0
    %v1986 = vadd.f32 %v1960, %v1984
    %v1987 = vadd.f32 %v1961, %v1985
    %1988 = vrot.lane.b32.xlu0 %v1648, 29
    %v1989 = vpop.permute.xlu0 %1988
    %1990 = vrot.lane.b32.xlu0 %v1649, 29
    %v1991 = vpop.permute.xlu0 %1990
    %v1992 = vsel %vm556, %v1989, %v1991
    %v1993 = vsel %vm556, %v1991, %v1989
    %1994 = vrot.lane.b32.xlu0 %v1640, 29
    %v1995 = vpop.permute.xlu0 %1994
    %1996 = vrot.lane.b32.xlu0 %v1647, 29
    %v1997 = vpop.permute.xlu0 %1996
    %v1998 = vsel %vm556, %v1995, %v1997
    %v1999 = vsel %vm556, %v1997, %v1995
    %s2000 = sld [smem:[#allocation2 + $0xd]]
    %s2001 = sld [smem:[#allocation2 + $0x3e]]
    %v2002 = vstv %s2000
    %v2003 = vmul.f32 %v2002, %v1993
    %v2004 = vmul.f32 %v2002, %v1992
    %v2005 = vstv %s2001
    %v2006 = vmul.f32 %v2005, %v1999
    %v2007 = vmul.f32 %v2005, %v1998
    %v2008 = vadd.f32 %v2003, %v2006
    %v2009 = vadd.f32 %v2004, %v2007
    %v2010 = vsel %vm575, %v2008, 0.0
    %v2011 = vsel %vm576, %v2009, 0.0
    %v2012 = vadd.f32 %v1986, %v2010
    %v2013 = vadd.f32 %v1987, %v2011
    %2014 = vrot.lane.b32.xlu0 %v1648, 19
    %v2015 = vpop.permute.xlu0 %2014
    %2016 = vrot.lane.b32.xlu0 %v1649, 19
    %v2017 = vpop.permute.xlu0 %2016
    %v2018 = vsel %vm585, %v2015, %v2017
    %v2019 = vsel %vm585, %v2017, %v2015
    %2020 = vrot.lane.b32.xlu0 %v1640, 19
    %v2021 = vpop.permute.xlu0 %2020
    %2022 = vrot.lane.b32.xlu0 %v1647, 19
    %v2023 = vpop.permute.xlu0 %2022
    %v2024 = vsel %vm585, %v2021, %v2023
    %v2025 = vsel %vm585, %v2023, %v2021
    %s2026 = sld [smem:[#allocation2 + $0xe]]
    %s2027 = sld [smem:[#allocation2 + $0x3f]]
    %v2028 = vstv %s2026
    %v2029 = vmul.f32 %v2028, %v2019
    %v2030 = vmul.f32 %v2028, %v2018
    %v2031 = vstv %s2027
    %v2032 = vmul.f32 %v2031, %v2025
    %v2033 = vmul.f32 %v2031, %v2024
    %v2034 = vadd.f32 %v2029, %v2032
    %v2035 = vadd.f32 %v2030, %v2033
    %v2036 = vsel %vm604, %v2034, 0.0
    %v2037 = vsel %vm605, %v2035, 0.0
    %v2038 = vadd.f32 %v2012, %v2036
    %v2039 = vadd.f32 %v2013, %v2037
    %2040 = vrot.lane.b32.xlu0 %v1648, 18
    %v2041 = vpop.permute.xlu0 %2040
    %2042 = vrot.lane.b32.xlu0 %v1649, 18
    %v2043 = vpop.permute.xlu0 %2042
    %v2044 = vsel %vm614, %v2041, %v2043
    %v2045 = vsel %vm614, %v2043, %v2041
    %2046 = vrot.lane.b32.xlu0 %v1640, 18
    %v2047 = vpop.permute.xlu0 %2046
    %2048 = vrot.lane.b32.xlu0 %v1647, 18
    %v2049 = vpop.permute.xlu0 %2048
    %v2050 = vsel %vm614, %v2047, %v2049
    %v2051 = vsel %vm614, %v2049, %v2047
    %s2052 = sld [smem:[#allocation2 + $0xf]]
    %s2053 = sld [smem:[#allocation2 + $0x40]]
    %v2054 = vstv %s2052
    %v2055 = vmul.f32 %v2054, %v2045
    %v2056 = vmul.f32 %v2054, %v2044
    %v2057 = vstv %s2053
    %v2058 = vmul.f32 %v2057, %v2051
    %v2059 = vmul.f32 %v2057, %v2050
    %v2060 = vadd.f32 %v2055, %v2058
    %v2061 = vadd.f32 %v2056, %v2059
    %v2062 = vsel %vm633, %v2060, 0.0
    %v2063 = vsel %vm634, %v2061, 0.0
    %v2064 = vadd.f32 %v2038, %v2062
    %v2065 = vadd.f32 %v2039, %v2063
    %2066 = vrot.lane.b32.xlu0 %v1648, 17
    %v2067 = vpop.permute.xlu0 %2066
    %2068 = vrot.lane.b32.xlu0 %v1649, 17
    %v2069 = vpop.permute.xlu0 %2068
    %v2070 = vsel %vm643, %v2067, %v2069
    %v2071 = vsel %vm643, %v2069, %v2067
    %2072 = vrot.lane.b32.xlu0 %v1640, 17
    %v2073 = vpop.permute.xlu0 %2072
    %2074 = vrot.lane.b32.xlu0 %v1647, 17
    %v2075 = vpop.permute.xlu0 %2074
    %v2076 = vsel %vm643, %v2073, %v2075
    %v2077 = vsel %vm643, %v2075, %v2073
    %s2078 = sld [smem:[#allocation2 + $0x10]]
    %s2079 = sld [smem:[#allocation2 + $0x41]]
    %v2080 = vstv %s2078
    %v2081 = vmul.f32 %v2080, %v2071
    %v2082 = vmul.f32 %v2080, %v2070
    %v2083 = vstv %s2079
    %v2084 = vmul.f32 %v2083, %v2077
    %v2085 = vmul.f32 %v2083, %v2076
    %v2086 = vadd.f32 %v2081, %v2084
    %v2087 = vadd.f32 %v2082, %v2085
    %v2088 = vsel %vm662, %v2086, 0.0
    %v2089 = vsel %vm663, %v2087, 0.0
    %v2090 = vadd.f32 %v2064, %v2088
    %v2091 = vadd.f32 %v2065, %v2089
    %2092 = vrot.lane.b32.xlu0 %v1648, 16
    %v2093 = vpop.permute.xlu0 %2092
    %2094 = vrot.lane.b32.xlu0 %v1649, 16
    %v2095 = vpop.permute.xlu0 %2094
    %v2096 = vsel %vm672, %v2093, %v2095
    %v2097 = vsel %vm672, %v2095, %v2093
    %2098 = vrot.lane.b32.xlu0 %v1640, 16
    %v2099 = vpop.permute.xlu0 %2098
    %2100 = vrot.lane.b32.xlu0 %v1647, 16
    %v2101 = vpop.permute.xlu0 %2100
    %v2102 = vsel %vm672, %v2099, %v2101
    %v2103 = vsel %vm672, %v2101, %v2099
    %s2104 = sld [smem:[#allocation2 + $0x11]]
    %s2105 = sld [smem:[#allocation2 + $0x42]]
    %v2106 = vstv %s2104
    %v2107 = vmul.f32 %v2106, %v2097
    %v2108 = vmul.f32 %v2106, %v2096
    %v2109 = vstv %s2105
    %v2110 = vmul.f32 %v2109, %v2103
    %v2111 = vmul.f32 %v2109, %v2102
    %v2112 = vadd.f32 %v2107, %v2110
    %v2113 = vadd.f32 %v2108, %v2111
    %v2114 = vsel %vm691, %v2112, 0.0
    %v2115 = vsel %vm692, %v2113, 0.0
    %v2116 = vadd.f32 %v2090, %v2114
    %v2117 = vadd.f32 %v2091, %v2115
    %2118 = vrot.lane.b32.xlu0 %v1648, 15
    %v2119 = vpop.permute.xlu0 %2118
    %2120 = vrot.lane.b32.xlu0 %v1649, 15
    %v2121 = vpop.permute.xlu0 %2120
    %v2122 = vsel %vm701, %v2119, %v2121
    %v2123 = vsel %vm701, %v2121, %v2119
    %2124 = vrot.lane.b32.xlu0 %v1640, 15
    %v2125 = vpop.permute.xlu0 %2124
    %2126 = vrot.lane.b32.xlu0 %v1647, 15
    %v2127 = vpop.permute.xlu0 %2126
    %v2128 = vsel %vm701, %v2125, %v2127
    %v2129 = vsel %vm701, %v2127, %v2125
    %s2130 = sld [smem:[#allocation2 + $0x12]]
    %s2131 = sld [smem:[#allocation2 + $0x43]]
    %v2132 = vstv %s2130
    %v2133 = vmul.f32 %v2132, %v2123
    %v2134 = vmul.f32 %v2132, %v2122
    %v2135 = vstv %s2131
    %v2136 = vmul.f32 %v2135, %v2129
    %v2137 = vmul.f32 %v2135, %v2128
    %v2138 = vadd.f32 %v2133, %v2136
    %v2139 = vadd.f32 %v2134, %v2137
    %v2140 = vsel %vm720, %v2138, 0.0
    %v2141 = vsel %vm721, %v2139, 0.0
    %v2142 = vadd.f32 %v2116, %v2140
    %v2143 = vadd.f32 %v2117, %v2141
    %2144 = vrot.lane.b32.xlu0 %v1648, 14
    %v2145 = vpop.permute.xlu0 %2144
    %2146 = vrot.lane.b32.xlu0 %v1649, 14
    %v2147 = vpop.permute.xlu0 %2146
    %v2148 = vsel %vm730, %v2145, %v2147
    %v2149 = vsel %vm730, %v2147, %v2145
    %2150 = vrot.lane.b32.xlu0 %v1640, 14
    %v2151 = vpop.permute.xlu0 %2150
    %2152 = vrot.lane.b32.xlu0 %v1647, 14
    %v2153 = vpop.permute.xlu0 %2152
    %v2154 = vsel %vm730, %v2151, %v2153
    %v2155 = vsel %vm730, %v2153, %v2151
    %s2156 = sld [smem:[#allocation2 + $0x13]]
    %s2157 = sld [smem:[#allocation2 + $0x44]]
    %v2158 = vstv %s2156
    %v2159 = vmul.f32 %v2158, %v2149
    %v2160 = vmul.f32 %v2158, %v2148
    %v2161 = vstv %s2157
    %v2162 = vmul.f32 %v2161, %v2155
    %v2163 = vmul.f32 %v2161, %v2154
    %v2164 = vadd.f32 %v2159, %v2162
    %v2165 = vadd.f32 %v2160, %v2163
    %v2166 = vsel %vm749, %v2164, 0.0
    %v2167 = vsel %vm750, %v2165, 0.0
    %v2168 = vadd.f32 %v2142, %v2166
    %v2169 = vadd.f32 %v2143, %v2167
    %2170 = vrot.lane.b32.xlu0 %v1648, 13
    %v2171 = vpop.permute.xlu0 %2170
    %2172 = vrot.lane.b32.xlu0 %v1649, 13
    %v2173 = vpop.permute.xlu0 %2172
    %v2174 = vsel %vm759, %v2171, %v2173
    %v2175 = vsel %vm759, %v2173, %v2171
    %2176 = vrot.lane.b32.xlu0 %v1640, 13
    %v2177 = vpop.permute.xlu0 %2176
    %2178 = vrot.lane.b32.xlu0 %v1647, 13
    %v2179 = vpop.permute.xlu0 %2178
    %v2180 = vsel %vm759, %v2177, %v2179
    %v2181 = vsel %vm759, %v2179, %v2177
    %s2182 = sld [smem:[#allocation2 + $0x14]]
    %s2183 = sld [smem:[#allocation2 + $0x45]]
    %v2184 = vstv %s2182
    %v2185 = vmul.f32 %v2184, %v2175
    %v2186 = vmul.f32 %v2184, %v2174
    %v2187 = vstv %s2183
    %v2188 = vmul.f32 %v2187, %v2181
    %v2189 = vmul.f32 %v2187, %v2180
    %v2190 = vadd.f32 %v2185, %v2188
    %v2191 = vadd.f32 %v2186, %v2189
    %v2192 = vsel %vm778, %v2190, 0.0
    %v2193 = vsel %vm779, %v2191, 0.0
    %v2194 = vadd.f32 %v2168, %v2192
    %v2195 = vadd.f32 %v2169, %v2193
    %2196 = vrot.lane.b32.xlu0 %v1648, 3
    %v2197 = vpop.permute.xlu0 %2196
    %2198 = vrot.lane.b32.xlu0 %v1649, 3
    %v2199 = vpop.permute.xlu0 %2198
    %v2200 = vsel %vm788, %v2197, %v2199
    %v2201 = vsel %vm788, %v2199, %v2197
    %2202 = vrot.lane.b32.xlu0 %v1640, 3
    %v2203 = vpop.permute.xlu0 %2202
    %2204 = vrot.lane.b32.xlu0 %v1647, 3
    %v2205 = vpop.permute.xlu0 %2204
    %v2206 = vsel %vm788, %v2203, %v2205
    %v2207 = vsel %vm788, %v2205, %v2203
    %s2208 = sld [smem:[#allocation2 + $0x15]]
    %s2209 = sld [smem:[#allocation2 + $0x46]]
    %v2210 = vstv %s2208
    %v2211 = vmul.f32 %v2210, %v2201
    %v2212 = vmul.f32 %v2210, %v2200
    %v2213 = vstv %s2209
    %v2214 = vmul.f32 %v2213, %v2207
    %v2215 = vmul.f32 %v2213, %v2206
    %v2216 = vadd.f32 %v2211, %v2214
    %v2217 = vadd.f32 %v2212, %v2215
    %v2218 = vsel %vm807, %v2216, 0.0
    %v2219 = vsel %vm808, %v2217, 0.0
    %v2220 = vadd.f32 %v2194, %v2218
    %v2221 = vadd.f32 %v2195, %v2219
    %2222 = vrot.lane.b32.xlu0 %v1648, 2
    %v2223 = vpop.permute.xlu0 %2222
    %2224 = vrot.lane.b32.xlu0 %v1649, 2
    %v2225 = vpop.permute.xlu0 %2224
    %v2226 = vsel %vm817, %v2223, %v2225
    %v2227 = vsel %vm817, %v2225, %v2223
    %2228 = vrot.lane.b32.xlu0 %v1640, 2
    %v2229 = vpop.permute.xlu0 %2228
    %2230 = vrot.lane.b32.xlu0 %v1647, 2
    %v2231 = vpop.permute.xlu0 %2230
    %v2232 = vsel %vm817, %v2229, %v2231
    %v2233 = vsel %vm817, %v2231, %v2229
    %s2234 = sld [smem:[#allocation2 + $0x16]]
    %s2235 = sld [smem:[#allocation2 + $0x47]]
    %v2236 = vstv %s2234
    %v2237 = vmul.f32 %v2236, %v2227
    %v2238 = vmul.f32 %v2236, %v2226
    %v2239 = vstv %s2235
    %v2240 = vmul.f32 %v2239, %v2233
    %v2241 = vmul.f32 %v2239, %v2232
    %v2242 = vadd.f32 %v2237, %v2240
    %v2243 = vadd.f32 %v2238, %v2241
    %v2244 = vsel %vm836, %v2242, 0.0
    %v2245 = vsel %vm837, %v2243, 0.0
    %v2246 = vadd.f32 %v2220, %v2244
    %v2247 = vadd.f32 %v2221, %v2245
    %2248 = vrot.lane.b32.xlu0 %v1648, 1
    %v2249 = vpop.permute.xlu0 %2248
    %2250 = vrot.lane.b32.xlu0 %v1649, 1
    %v2251 = vpop.permute.xlu0 %2250
    %v2252 = vsel %vm846, %v2249, %v2251
    %v2253 = vsel %vm846, %v2251, %v2249
    %2254 = vrot.lane.b32.xlu0 %v1640, 1
    %v2255 = vpop.permute.xlu0 %2254
    %2256 = vrot.lane.b32.xlu0 %v1647, 1
    %v2257 = vpop.permute.xlu0 %2256
    %v2258 = vsel %vm846, %v2255, %v2257
    %v2259 = vsel %vm846, %v2257, %v2255
    %s2260 = sld [smem:[#allocation2 + $0x17]]
    %s2261 = sld [smem:[#allocation2 + $0x48]]
    %v2262 = vstv %s2260
    %v2263 = vmul.f32 %v2262, %v2253
    %v2264 = vmul.f32 %v2262, %v2252
    %v2265 = vstv %s2261
    %v2266 = vmul.f32 %v2265, %v2259
    %v2267 = vmul.f32 %v2265, %v2258
    %v2268 = vadd.f32 %v2263, %v2266
    %v2269 = vadd.f32 %v2264, %v2267
    %v2270 = vsel %vm865, %v2268, 0.0
    %v2271 = vsel %vm866, %v2269, 0.0
    %v2272 = vadd.f32 %v2246, %v2270
    %v2273 = vadd.f32 %v2247, %v2271
    %s2274 = sld [smem:[#allocation2 + $0x18]]
    %s2275 = sld [smem:[#allocation2 + $0x49]]
    %v2276 = vstv %s2274
    %v2277 = vmul.f32 %v2276, %v1648
    %v2278 = vmul.f32 %v2276, %v1649
    %v2279 = vstv %s2275
    %v2280 = vmul.f32 %v2279, %v1640
    %v2281 = vmul.f32 %v2279, %v1647
    %v2282 = vadd.f32 %v2277, %v2280
    %v2283 = vadd.f32 %v2278, %v2281
    %v2284 = vsel %vm881, %v2282, 0.0
    %v2285 = vsel %vm882, %v2283, 0.0
    %v2286 = vadd.f32 %v2272, %v2284
    %v2287 = vadd.f32 %v2273, %v2285
    %2288 = vrot.lane.b32.xlu0 %v1648, 127
    %v2289 = vpop.permute.xlu0 %2288
    %2290 = vrot.lane.b32.xlu0 %v1649, 127
    %v2291 = vpop.permute.xlu0 %2290
    %v2292 = vsel %vm891, %v2289, %v2291
    %v2293 = vsel %vm891, %v2291, %v2289
    %2294 = vrot.lane.b32.xlu0 %v1640, 127
    %v2295 = vpop.permute.xlu0 %2294
    %2296 = vrot.lane.b32.xlu0 %v1647, 127
    %v2297 = vpop.permute.xlu0 %2296
    %v2298 = vsel %vm891, %v2295, %v2297
    %v2299 = vsel %vm891, %v2297, %v2295
    %s2300 = sld [smem:[#allocation2 + $0x19]]
    %s2301 = sld [smem:[#allocation2 + $0x4a]]
    %v2302 = vstv %s2300
    %v2303 = vmul.f32 %v2302, %v2292
    %v2304 = vmul.f32 %v2302, %v2293
    %v2305 = vstv %s2301
    %v2306 = vmul.f32 %v2305, %v2298
    %v2307 = vmul.f32 %v2305, %v2299
    %v2308 = vadd.f32 %v2303, %v2306
    %v2309 = vadd.f32 %v2304, %v2307
    %v2310 = vsel %vm910, %v2308, 0.0
    %v2311 = vsel %vm911, %v2309, 0.0
    %v2312 = vadd.f32 %v2286, %v2310
    %v2313 = vadd.f32 %v2287, %v2311
    %2314 = vrot.lane.b32.xlu0 %v1648, 126
    %v2315 = vpop.permute.xlu0 %2314
    %2316 = vrot.lane.b32.xlu0 %v1649, 126
    %v2317 = vpop.permute.xlu0 %2316
    %v2318 = vsel %vm920, %v2315, %v2317
    %v2319 = vsel %vm920, %v2317, %v2315
    %2320 = vrot.lane.b32.xlu0 %v1640, 126
    %v2321 = vpop.permute.xlu0 %2320
    %2322 = vrot.lane.b32.xlu0 %v1647, 126
    %v2323 = vpop.permute.xlu0 %2322
    %v2324 = vsel %vm920, %v2321, %v2323
    %v2325 = vsel %vm920, %v2323, %v2321
    %s2326 = sld [smem:[#allocation2 + $0x1a]]
    %s2327 = sld [smem:[#allocation2 + $0x4b]]
    %v2328 = vstv %s2326
    %v2329 = vmul.f32 %v2328, %v2318
    %v2330 = vmul.f32 %v2328, %v2319
    %v2331 = vstv %s2327
    %v2332 = vmul.f32 %v2331, %v2324
    %v2333 = vmul.f32 %v2331, %v2325
    %v2334 = vadd.f32 %v2329, %v2332
    %v2335 = vadd.f32 %v2330, %v2333
    %v2336 = vsel %vm939, %v2334, 0.0
    %v2337 = vsel %vm940, %v2335, 0.0
    %v2338 = vadd.f32 %v2312, %v2336
    %v2339 = vadd.f32 %v2313, %v2337
    %2340 = vrot.lane.b32.xlu0 %v1648, 125
    %v2341 = vpop.permute.xlu0 %2340
    %2342 = vrot.lane.b32.xlu0 %v1649, 125
    %v2343 = vpop.permute.xlu0 %2342
    %v2344 = vsel %vm949, %v2341, %v2343
    %v2345 = vsel %vm949, %v2343, %v2341
    %2346 = vrot.lane.b32.xlu0 %v1640, 125
    %v2347 = vpop.permute.xlu0 %2346
    %2348 = vrot.lane.b32.xlu0 %v1647, 125
    %v2349 = vpop.permute.xlu0 %2348
    %v2350 = vsel %vm949, %v2347, %v2349
    %v2351 = vsel %vm949, %v2349, %v2347
    %s2352 = sld [smem:[#allocation2 + $0x1b]]
    %s2353 = sld [smem:[#allocation2 + $0x4c]]
    %v2354 = vstv %s2352
    %v2355 = vmul.f32 %v2354, %v2344
    %v2356 = vmul.f32 %v2354, %v2345
    %v2357 = vstv %s2353
    %v2358 = vmul.f32 %v2357, %v2350
    %v2359 = vmul.f32 %v2357, %v2351
    %v2360 = vadd.f32 %v2355, %v2358
    %v2361 = vadd.f32 %v2356, %v2359
    %v2362 = vsel %vm968, %v2360, 0.0
    %v2363 = vsel %vm969, %v2361, 0.0
    %v2364 = vadd.f32 %v2338, %v2362
    %v2365 = vadd.f32 %v2339, %v2363
    %2366 = vrot.lane.b32.xlu0 %v1648, 115
    %v2367 = vpop.permute.xlu0 %2366
    %2368 = vrot.lane.b32.xlu0 %v1649, 115
    %v2369 = vpop.permute.xlu0 %2368
    %v2370 = vsel %vm978, %v2367, %v2369
    %v2371 = vsel %vm978, %v2369, %v2367
    %2372 = vrot.lane.b32.xlu0 %v1640, 115
    %v2373 = vpop.permute.xlu0 %2372
    %2374 = vrot.lane.b32.xlu0 %v1647, 115
    %v2375 = vpop.permute.xlu0 %2374
    %v2376 = vsel %vm978, %v2373, %v2375
    %v2377 = vsel %vm978, %v2375, %v2373
    %s2378 = sld [smem:[#allocation2 + $0x1c]]
    %s2379 = sld [smem:[#allocation2 + $0x4d]]
    %v2380 = vstv %s2378
    %v2381 = vmul.f32 %v2380, %v2370
    %v2382 = vmul.f32 %v2380, %v2371
    %v2383 = vstv %s2379
    %v2384 = vmul.f32 %v2383, %v2376
    %v2385 = vmul.f32 %v2383, %v2377
    %v2386 = vadd.f32 %v2381, %v2384
    %v2387 = vadd.f32 %v2382, %v2385
    %v2388 = vsel %vm997, %v2386, 0.0
    %v2389 = vsel %vm998, %v2387, 0.0
    %v2390 = vadd.f32 %v2364, %v2388
    %v2391 = vadd.f32 %v2365, %v2389
    %2392 = vrot.lane.b32.xlu0 %v1648, 114
    %v2393 = vpop.permute.xlu0 %2392
    %2394 = vrot.lane.b32.xlu0 %v1649, 114
    %v2395 = vpop.permute.xlu0 %2394
    %v2396 = vsel %vm1007, %v2393, %v2395
    %v2397 = vsel %vm1007, %v2395, %v2393
    %2398 = vrot.lane.b32.xlu0 %v1640, 114
    %v2399 = vpop.permute.xlu0 %2398
    %2400 = vrot.lane.b32.xlu0 %v1647, 114
    %v2401 = vpop.permute.xlu0 %2400
    %v2402 = vsel %vm1007, %v2399, %v2401
    %v2403 = vsel %vm1007, %v2401, %v2399
    %s2404 = sld [smem:[#allocation2 + $0x1d]]
    %s2405 = sld [smem:[#allocation2 + $0x4e]]
    %v2406 = vstv %s2404
    %v2407 = vmul.f32 %v2406, %v2396
    %v2408 = vmul.f32 %v2406, %v2397
    %v2409 = vstv %s2405
    %v2410 = vmul.f32 %v2409, %v2402
    %v2411 = vmul.f32 %v2409, %v2403
    %v2412 = vadd.f32 %v2407, %v2410
    %v2413 = vadd.f32 %v2408, %v2411
    %v2414 = vsel %vm1026, %v2412, 0.0
    %v2415 = vsel %vm1027, %v2413, 0.0
    %v2416 = vadd.f32 %v2390, %v2414
    %v2417 = vadd.f32 %v2391, %v2415
    %2418 = vrot.lane.b32.xlu0 %v1648, 113
    %v2419 = vpop.permute.xlu0 %2418
    %2420 = vrot.lane.b32.xlu0 %v1649, 113
    %v2421 = vpop.permute.xlu0 %2420
    %v2422 = vsel %vm1036, %v2419, %v2421
    %v2423 = vsel %vm1036, %v2421, %v2419
    %2424 = vrot.lane.b32.xlu0 %v1640, 113
    %v2425 = vpop.permute.xlu0 %2424
    %2426 = vrot.lane.b32.xlu0 %v1647, 113
    %v2427 = vpop.permute.xlu0 %2426
    %v2428 = vsel %vm1036, %v2425, %v2427
    %v2429 = vsel %vm1036, %v2427, %v2425
    %s2430 = sld [smem:[#allocation2 + $0x1e]]
    %s2431 = sld [smem:[#allocation2 + $0x4f]]
    %v2432 = vstv %s2430
    %v2433 = vmul.f32 %v2432, %v2422
    %v2434 = vmul.f32 %v2432, %v2423
    %v2435 = vstv %s2431
    %v2436 = vmul.f32 %v2435, %v2428
    %v2437 = vmul.f32 %v2435, %v2429
    %v2438 = vadd.f32 %v2433, %v2436
    %v2439 = vadd.f32 %v2434, %v2437
    %v2440 = vsel %vm1055, %v2438, 0.0
    %v2441 = vsel %vm1056, %v2439, 0.0
    %v2442 = vadd.f32 %v2416, %v2440
    %v2443 = vadd.f32 %v2417, %v2441
    %2444 = vrot.lane.b32.xlu0 %v1648, 112
    %v2445 = vpop.permute.xlu0 %2444
    %2446 = vrot.lane.b32.xlu0 %v1649, 112
    %v2447 = vpop.permute.xlu0 %2446
    %v2448 = vsel %vm1065, %v2445, %v2447
    %v2449 = vsel %vm1065, %v2447, %v2445
    %2450 = vrot.lane.b32.xlu0 %v1640, 112
    %v2451 = vpop.permute.xlu0 %2450
    %2452 = vrot.lane.b32.xlu0 %v1647, 112
    %v2453 = vpop.permute.xlu0 %2452
    %v2454 = vsel %vm1065, %v2451, %v2453
    %v2455 = vsel %vm1065, %v2453, %v2451
    %s2456 = sld [smem:[#allocation2 + $0x1f]]
    %s2457 = sld [smem:[#allocation2 + $0x50]]
    %v2458 = vstv %s2456
    %v2459 = vmul.f32 %v2458, %v2448
    %v2460 = vmul.f32 %v2458, %v2449
    %v2461 = vstv %s2457
    %v2462 = vmul.f32 %v2461, %v2454
    %v2463 = vmul.f32 %v2461, %v2455
    %v2464 = vadd.f32 %v2459, %v2462
    %v2465 = vadd.f32 %v2460, %v2463
    %v2466 = vsel %vm1084, %v2464, 0.0
    %v2467 = vsel %vm1085, %v2465, 0.0
    %v2468 = vadd.f32 %v2442, %v2466
    %v2469 = vadd.f32 %v2443, %v2467
    %2470 = vrot.lane.b32.xlu0 %v1648, 111
    %v2471 = vpop.permute.xlu0 %2470
    %2472 = vrot.lane.b32.xlu0 %v1649, 111
    %v2473 = vpop.permute.xlu0 %2472
    %v2474 = vsel %vm1094, %v2471, %v2473
    %v2475 = vsel %vm1094, %v2473, %v2471
    %2476 = vrot.lane.b32.xlu0 %v1640, 111
    %v2477 = vpop.permute.xlu0 %2476
    %2478 = vrot.lane.b32.xlu0 %v1647, 111
    %v2479 = vpop.permute.xlu0 %2478
    %v2480 = vsel %vm1094, %v2477, %v2479
    %v2481 = vsel %vm1094, %v2479, %v2477
    %s2482 = sld [smem:[#allocation2 + $0x20]]
    %s2483 = sld [smem:[#allocation2 + $0x51]]
    %v2484 = vstv %s2482
    %v2485 = vmul.f32 %v2484, %v2474
    %v2486 = vmul.f32 %v2484, %v2475
    %v2487 = vstv %s2483
    %v2488 = vmul.f32 %v2487, %v2480
    %v2489 = vmul.f32 %v2487, %v2481
    %v2490 = vadd.f32 %v2485, %v2488
    %v2491 = vadd.f32 %v2486, %v2489
    %v2492 = vsel %vm1113, %v2490, 0.0
    %v2493 = vsel %vm1114, %v2491, 0.0
    %v2494 = vadd.f32 %v2468, %v2492
    %v2495 = vadd.f32 %v2469, %v2493
    %2496 = vrot.lane.b32.xlu0 %v1648, 110
    %v2497 = vpop.permute.xlu0 %2496
    %2498 = vrot.lane.b32.xlu0 %v1649, 110
    %v2499 = vpop.permute.xlu0 %2498
    %v2500 = vsel %vm1123, %v2497, %v2499
    %v2501 = vsel %vm1123, %v2499, %v2497
    %2502 = vrot.lane.b32.xlu0 %v1640, 110
    %v2503 = vpop.permute.xlu0 %2502
    %2504 = vrot.lane.b32.xlu0 %v1647, 110
    %v2505 = vpop.permute.xlu0 %2504
    %v2506 = vsel %vm1123, %v2503, %v2505
    %v2507 = vsel %vm1123, %v2505, %v2503
    %s2508 = sld [smem:[#allocation2 + $0x21]]
    %s2509 = sld [smem:[#allocation2 + $0x52]]
    %v2510 = vstv %s2508
    %v2511 = vmul.f32 %v2510, %v2500
    %v2512 = vmul.f32 %v2510, %v2501
    %v2513 = vstv %s2509
    %v2514 = vmul.f32 %v2513, %v2506
    %v2515 = vmul.f32 %v2513, %v2507
    %v2516 = vadd.f32 %v2511, %v2514
    %v2517 = vadd.f32 %v2512, %v2515
    %v2518 = vsel %vm1142, %v2516, 0.0
    %v2519 = vsel %vm1143, %v2517, 0.0
    %v2520 = vadd.f32 %v2494, %v2518
    %v2521 = vadd.f32 %v2495, %v2519
    %2522 = vrot.lane.b32.xlu0 %v1648, 109
    %v2523 = vpop.permute.xlu0 %2522
    %2524 = vrot.lane.b32.xlu0 %v1649, 109
    %v2525 = vpop.permute.xlu0 %2524
    %v2526 = vsel %vm1152, %v2523, %v2525
    %v2527 = vsel %vm1152, %v2525, %v2523
    %2528 = vrot.lane.b32.xlu0 %v1640, 109
    %v2529 = vpop.permute.xlu0 %2528
    %2530 = vrot.lane.b32.xlu0 %v1647, 109
    %v2531 = vpop.permute.xlu0 %2530
    %v2532 = vsel %vm1152, %v2529, %v2531
    %v2533 = vsel %vm1152, %v2531, %v2529
    %s2534 = sld [smem:[#allocation2 + $0x22]]
    %s2535 = sld [smem:[#allocation2 + $0x53]]
    %v2536 = vstv %s2534
    %v2537 = vmul.f32 %v2536, %v2526
    %v2538 = vmul.f32 %v2536, %v2527
    %v2539 = vstv %s2535
    %v2540 = vmul.f32 %v2539, %v2532
    %v2541 = vmul.f32 %v2539, %v2533
    %v2542 = vadd.f32 %v2537, %v2540
    %v2543 = vadd.f32 %v2538, %v2541
    %v2544 = vsel %vm1171, %v2542, 0.0
    %v2545 = vsel %vm1172, %v2543, 0.0
    %v2546 = vadd.f32 %v2520, %v2544
    %v2547 = vadd.f32 %v2521, %v2545
    %2548 = vrot.lane.b32.xlu0 %v1648, 99
    %v2549 = vpop.permute.xlu0 %2548
    %2550 = vrot.lane.b32.xlu0 %v1649, 99
    %v2551 = vpop.permute.xlu0 %2550
    %v2552 = vsel %vm1181, %v2549, %v2551
    %v2553 = vsel %vm1181, %v2551, %v2549
    %2554 = vrot.lane.b32.xlu0 %v1640, 99
    %v2555 = vpop.permute.xlu0 %2554
    %2556 = vrot.lane.b32.xlu0 %v1647, 99
    %v2557 = vpop.permute.xlu0 %2556
    %v2558 = vsel %vm1181, %v2555, %v2557
    %v2559 = vsel %vm1181, %v2557, %v2555
    %s2560 = sld [smem:[#allocation2 + $0x23]]
    %s2561 = sld [smem:[#allocation2 + $0x54]]
    %v2562 = vstv %s2560
    %v2563 = vmul.f32 %v2562, %v2552
    %v2564 = vmul.f32 %v2562, %v2553
    %v2565 = vstv %s2561
    %v2566 = vmul.f32 %v2565, %v2558
    %v2567 = vmul.f32 %v2565, %v2559
    %v2568 = vadd.f32 %v2563, %v2566
    %v2569 = vadd.f32 %v2564, %v2567
    %v2570 = vsel %vm1200, %v2568, 0.0
    %v2571 = vsel %vm1201, %v2569, 0.0
    %v2572 = vadd.f32 %v2546, %v2570
    %v2573 = vadd.f32 %v2547, %v2571
    %2574 = vrot.lane.b32.xlu0 %v1648, 98
    %v2575 = vpop.permute.xlu0 %2574
    %2576 = vrot.lane.b32.xlu0 %v1649, 98
    %v2577 = vpop.permute.xlu0 %2576
    %v2578 = vsel %vm1210, %v2575, %v2577
    %v2579 = vsel %vm1210, %v2577, %v2575
    %2580 = vrot.lane.b32.xlu0 %v1640, 98
    %v2581 = vpop.permute.xlu0 %2580
    %2582 = vrot.lane.b32.xlu0 %v1647, 98
    %v2583 = vpop.permute.xlu0 %2582
    %v2584 = vsel %vm1210, %v2581, %v2583
    %v2585 = vsel %vm1210, %v2583, %v2581
    %s2586 = sld [smem:[#allocation2 + $0x24]]
    %s2587 = sld [smem:[#allocation2 + $0x55]]
    %v2588 = vstv %s2586
    %v2589 = vmul.f32 %v2588, %v2578
    %v2590 = vmul.f32 %v2588, %v2579
    %v2591 = vstv %s2587
    %v2592 = vmul.f32 %v2591, %v2584
    %v2593 = vmul.f32 %v2591, %v2585
    %v2594 = vadd.f32 %v2589, %v2592
    %v2595 = vadd.f32 %v2590, %v2593
    %v2596 = vsel %vm1229, %v2594, 0.0
    %v2597 = vsel %vm1230, %v2595, 0.0
    %v2598 = vadd.f32 %v2572, %v2596
    %v2599 = vadd.f32 %v2573, %v2597
    %2600 = vrot.lane.b32.xlu0 %v1648, 97
    %v2601 = vpop.permute.xlu0 %2600
    %2602 = vrot.lane.b32.xlu0 %v1649, 97
    %v2603 = vpop.permute.xlu0 %2602
    %v2604 = vsel %vm1239, %v2601, %v2603
    %v2605 = vsel %vm1239, %v2603, %v2601
    %2606 = vrot.lane.b32.xlu0 %v1640, 97
    %v2607 = vpop.permute.xlu0 %2606
    %2608 = vrot.lane.b32.xlu0 %v1647, 97
    %v2609 = vpop.permute.xlu0 %2608
    %v2610 = vsel %vm1239, %v2607, %v2609
    %v2611 = vsel %vm1239, %v2609, %v2607
    %s2612 = sld [smem:[#allocation2 + $0x25]]
    %s2613 = sld [smem:[#allocation2 + $0x56]]
    %v2614 = vstv %s2612
    %v2615 = vmul.f32 %v2614, %v2604
    %v2616 = vmul.f32 %v2614, %v2605
    %v2617 = vstv %s2613
    %v2618 = vmul.f32 %v2617, %v2610
    %v2619 = vmul.f32 %v2617, %v2611
    %v2620 = vadd.f32 %v2615, %v2618
    %v2621 = vadd.f32 %v2616, %v2619
    %v2622 = vsel %vm1258, %v2620, 0.0
    %v2623 = vsel %vm1259, %v2621, 0.0
    %v2624 = vadd.f32 %v2598, %v2622
    %v2625 = vadd.f32 %v2599, %v2623
    %2626 = vrot.lane.b32.xlu0 %v1648, 96
    %v2627 = vpop.permute.xlu0 %2626
    %2628 = vrot.lane.b32.xlu0 %v1649, 96
    %v2629 = vpop.permute.xlu0 %2628
    %v2630 = vsel %vm1268, %v2627, %v2629
    %v2631 = vsel %vm1268, %v2629, %v2627
    %2632 = vrot.lane.b32.xlu0 %v1640, 96
    %v2633 = vpop.permute.xlu0 %2632
    %2634 = vrot.lane.b32.xlu0 %v1647, 96
    %v2635 = vpop.permute.xlu0 %2634
    %v2636 = vsel %vm1268, %v2633, %v2635
    %v2637 = vsel %vm1268, %v2635, %v2633
    %s2638 = sld [smem:[#allocation2 + $0x26]]
    %s2639 = sld [smem:[#allocation2 + $0x57]]
    %v2640 = vstv %s2638
    %v2641 = vmul.f32 %v2640, %v2630
    %v2642 = vmul.f32 %v2640, %v2631
    %v2643 = vstv %s2639
    %v2644 = vmul.f32 %v2643, %v2636
    %v2645 = vmul.f32 %v2643, %v2637
    %v2646 = vadd.f32 %v2641, %v2644
    %v2647 = vadd.f32 %v2642, %v2645
    %v2648 = vsel %vm1287, %v2646, 0.0
    %v2649 = vsel %vm1288, %v2647, 0.0
    %v2650 = vadd.f32 %v2624, %v2648
    %v2651 = vadd.f32 %v2625, %v2649
    %2652 = vrot.lane.b32.xlu0 %v1648, 95
    %v2653 = vpop.permute.xlu0 %2652
    %2654 = vrot.lane.b32.xlu0 %v1649, 95
    %v2655 = vpop.permute.xlu0 %2654
    %v2656 = vsel %vm1297, %v2653, %v2655
    %v2657 = vsel %vm1297, %v2655, %v2653
    %2658 = vrot.lane.b32.xlu0 %v1640, 95
    %v2659 = vpop.permute.xlu0 %2658
    %2660 = vrot.lane.b32.xlu0 %v1647, 95
    %v2661 = vpop.permute.xlu0 %2660
    %v2662 = vsel %vm1297, %v2659, %v2661
    %v2663 = vsel %vm1297, %v2661, %v2659
    %s2664 = sld [smem:[#allocation2 + $0x27]]
    %s2665 = sld [smem:[#allocation2 + $0x58]]
    %v2666 = vstv %s2664
    %v2667 = vmul.f32 %v2666, %v2656
    %v2668 = vmul.f32 %v2666, %v2657
    %v2669 = vstv %s2665
    %v2670 = vmul.f32 %v2669, %v2662
    %v2671 = vmul.f32 %v2669, %v2663
    %v2672 = vadd.f32 %v2667, %v2670
    %v2673 = vadd.f32 %v2668, %v2671
    %v2674 = vsel %vm1316, %v2672, 0.0
    %v2675 = vsel %vm1317, %v2673, 0.0
    %v2676 = vadd.f32 %v2650, %v2674
    %v2677 = vadd.f32 %v2651, %v2675
    %2678 = vrot.lane.b32.xlu0 %v1648, 94
    %v2679 = vpop.permute.xlu0 %2678
    %2680 = vrot.lane.b32.xlu0 %v1649, 94
    %v2681 = vpop.permute.xlu0 %2680
    %v2682 = vsel %vm1326, %v2679, %v2681
    %v2683 = vsel %vm1326, %v2681, %v2679
    %2684 = vrot.lane.b32.xlu0 %v1640, 94
    %v2685 = vpop.permute.xlu0 %2684
    %2686 = vrot.lane.b32.xlu0 %v1647, 94
    %v2687 = vpop.permute.xlu0 %2686
    %v2688 = vsel %vm1326, %v2685, %v2687
    %v2689 = vsel %vm1326, %v2687, %v2685
    %s2690 = sld [smem:[#allocation2 + $0x28]]
    %s2691 = sld [smem:[#allocation2 + $0x59]]
    %v2692 = vstv %s2690
    %v2693 = vmul.f32 %v2692, %v2682
    %v2694 = vmul.f32 %v2692, %v2683
    %v2695 = vstv %s2691
    %v2696 = vmul.f32 %v2695, %v2688
    %v2697 = vmul.f32 %v2695, %v2689
    %v2698 = vadd.f32 %v2693, %v2696
    %v2699 = vadd.f32 %v2694, %v2697
    %v2700 = vsel %vm1345, %v2698, 0.0
    %v2701 = vsel %vm1346, %v2699, 0.0
    %v2702 = vadd.f32 %v2676, %v2700
    %v2703 = vadd.f32 %v2677, %v2701
    %2704 = vrot.lane.b32.xlu0 %v1648, 93
    %v2705 = vpop.permute.xlu0 %2704
    %2706 = vrot.lane.b32.xlu0 %v1649, 93
    %v2707 = vpop.permute.xlu0 %2706
    %v2708 = vsel %vm1355, %v2705, %v2707
    %v2709 = vsel %vm1355, %v2707, %v2705
    %2710 = vrot.lane.b32.xlu0 %v1640, 93
    %v2711 = vpop.permute.xlu0 %2710
    %2712 = vrot.lane.b32.xlu0 %v1647, 93
    %v2713 = vpop.permute.xlu0 %2712
    %v2714 = vsel %vm1355, %v2711, %v2713
    %v2715 = vsel %vm1355, %v2713, %v2711
    %s2716 = sld [smem:[#allocation2 + $0x29]]
    %s2717 = sld [smem:[#allocation2 + $0x5a]]
    %v2718 = vstv %s2716
    %v2719 = vmul.f32 %v2718, %v2708
    %v2720 = vmul.f32 %v2718, %v2709
    %v2721 = vstv %s2717
    %v2722 = vmul.f32 %v2721, %v2714
    %v2723 = vmul.f32 %v2721, %v2715
    %v2724 = vadd.f32 %v2719, %v2722
    %v2725 = vadd.f32 %v2720, %v2723
    %v2726 = vsel %vm1374, %v2724, 0.0
    %v2727 = vsel %vm1375, %v2725, 0.0
    %v2728 = vadd.f32 %v2702, %v2726
    %v2729 = vadd.f32 %v2703, %v2727
    %2730 = vrot.lane.b32.xlu0 %v1648, 83
    %v2731 = vpop.permute.xlu0 %2730
    %2732 = vrot.lane.b32.xlu0 %v1649, 83
    %v2733 = vpop.permute.xlu0 %2732
    %v2734 = vsel %vm1384, %v2731, %v2733
    %v2735 = vsel %vm1384, %v2733, %v2731
    %2736 = vrot.lane.b32.xlu0 %v1640, 83
    %v2737 = vpop.permute.xlu0 %2736
    %2738 = vrot.lane.b32.xlu0 %v1647, 83
    %v2739 = vpop.permute.xlu0 %2738
    %v2740 = vsel %vm1384, %v2737, %v2739
    %v2741 = vsel %vm1384, %v2739, %v2737
    %s2742 = sld [smem:[#allocation2 + $0x2a]]
    %s2743 = sld [smem:[#allocation2 + $0x5b]]
    %v2744 = vstv %s2742
    %v2745 = vmul.f32 %v2744, %v2734
    %v2746 = vmul.f32 %v2744, %v2735
    %v2747 = vstv %s2743
    %v2748 = vmul.f32 %v2747, %v2740
    %v2749 = vmul.f32 %v2747, %v2741
    %v2750 = vadd.f32 %v2745, %v2748
    %v2751 = vadd.f32 %v2746, %v2749
    %v2752 = vsel %vm1403, %v2750, 0.0
    %v2753 = vsel %vm1404, %v2751, 0.0
    %v2754 = vadd.f32 %v2728, %v2752
    %v2755 = vadd.f32 %v2729, %v2753
    %2756 = vrot.lane.b32.xlu0 %v1648, 82
    %v2757 = vpop.permute.xlu0 %2756
    %2758 = vrot.lane.b32.xlu0 %v1649, 82
    %v2759 = vpop.permute.xlu0 %2758
    %v2760 = vsel %vm1413, %v2757, %v2759
    %v2761 = vsel %vm1413, %v2759, %v2757
    %2762 = vrot.lane.b32.xlu0 %v1640, 82
    %v2763 = vpop.permute.xlu0 %2762
    %2764 = vrot.lane.b32.xlu0 %v1647, 82
    %v2765 = vpop.permute.xlu0 %2764
    %v2766 = vsel %vm1413, %v2763, %v2765
    %v2767 = vsel %vm1413, %v2765, %v2763
    %s2768 = sld [smem:[#allocation2 + $0x2b]]
    %s2769 = sld [smem:[#allocation2 + $0x5c]]
    %v2770 = vstv %s2768
    %v2771 = vmul.f32 %v2770, %v2760
    %v2772 = vmul.f32 %v2770, %v2761
    %v2773 = vstv %s2769
    %v2774 = vmul.f32 %v2773, %v2766
    %v2775 = vmul.f32 %v2773, %v2767
    %v2776 = vadd.f32 %v2771, %v2774
    %v2777 = vadd.f32 %v2772, %v2775
    %v2778 = vsel %vm1432, %v2776, 0.0
    %v2779 = vsel %vm1433, %v2777, 0.0
    %v2780 = vadd.f32 %v2754, %v2778
    %v2781 = vadd.f32 %v2755, %v2779
    %2782 = vrot.lane.b32.xlu0 %v1648, 81
    %v2783 = vpop.permute.xlu0 %2782
    %2784 = vrot.lane.b32.xlu0 %v1649, 81
    %v2785 = vpop.permute.xlu0 %2784
    %v2786 = vsel %vm1442, %v2783, %v2785
    %v2787 = vsel %vm1442, %v2785, %v2783
    %2788 = vrot.lane.b32.xlu0 %v1640, 81
    %v2789 = vpop.permute.xlu0 %2788
    %2790 = vrot.lane.b32.xlu0 %v1647, 81
    %v2791 = vpop.permute.xlu0 %2790
    %v2792 = vsel %vm1442, %v2789, %v2791
    %v2793 = vsel %vm1442, %v2791, %v2789
    %s2794 = sld [smem:[#allocation2 + $0x2c]]
    %s2795 = sld [smem:[#allocation2 + $0x5d]]
    %v2796 = vstv %s2794
    %v2797 = vmul.f32 %v2796, %v2786
    %v2798 = vmul.f32 %v2796, %v2787
    %v2799 = vstv %s2795
    %v2800 = vmul.f32 %v2799, %v2792
    %v2801 = vmul.f32 %v2799, %v2793
    %v2802 = vadd.f32 %v2797, %v2800
    %v2803 = vadd.f32 %v2798, %v2801
    %v2804 = vsel %vm1461, %v2802, 0.0
    %v2805 = vsel %vm1462, %v2803, 0.0
    %v2806 = vadd.f32 %v2780, %v2804
    %v2807 = vadd.f32 %v2781, %v2805
    %2808 = vrot.lane.b32.xlu0 %v1648, 80
    %v2809 = vpop.permute.xlu0 %2808
    %2810 = vrot.lane.b32.xlu0 %v1649, 80
    %v2811 = vpop.permute.xlu0 %2810
    %v2812 = vsel %vm1471, %v2809, %v2811
    %v2813 = vsel %vm1471, %v2811, %v2809
    %2814 = vrot.lane.b32.xlu0 %v1640, 80
    %v2815 = vpop.permute.xlu0 %2814
    %2816 = vrot.lane.b32.xlu0 %v1647, 80
    %v2817 = vpop.permute.xlu0 %2816
    %v2818 = vsel %vm1471, %v2815, %v2817
    %v2819 = vsel %vm1471, %v2817, %v2815
    %s2820 = sld [smem:[#allocation2 + $0x2d]]
    %s2821 = sld [smem:[#allocation2 + $0x5e]]
    %v2822 = vstv %s2820
    %v2823 = vmul.f32 %v2822, %v2812
    %v2824 = vmul.f32 %v2822, %v2813
    %v2825 = vstv %s2821
    %v2826 = vmul.f32 %v2825, %v2818
    %v2827 = vmul.f32 %v2825, %v2819
    %v2828 = vadd.f32 %v2823, %v2826
    %v2829 = vadd.f32 %v2824, %v2827
    %v2830 = vsel %vm1490, %v2828, 0.0
    %v2831 = vsel %vm1491, %v2829, 0.0
    %v2832 = vadd.f32 %v2806, %v2830
    %v2833 = vadd.f32 %v2807, %v2831
    %2834 = vrot.lane.b32.xlu0 %v1648, 79
    %v2835 = vpop.permute.xlu0 %2834
    %2836 = vrot.lane.b32.xlu0 %v1649, 79
    %v2837 = vpop.permute.xlu0 %2836
    %v2838 = vsel %vm1500, %v2835, %v2837
    %v2839 = vsel %vm1500, %v2837, %v2835
    %2840 = vrot.lane.b32.xlu0 %v1640, 79
    %v2841 = vpop.permute.xlu0 %2840
    %2842 = vrot.lane.b32.xlu0 %v1647, 79
    %v2843 = vpop.permute.xlu0 %2842
    %v2844 = vsel %vm1500, %v2841, %v2843
    %v2845 = vsel %vm1500, %v2843, %v2841
    %s2846 = sld [smem:[#allocation2 + $0x2e]]
    %s2847 = sld [smem:[#allocation2 + $0x5f]]
    %v2848 = vstv %s2846
    %v2849 = vmul.f32 %v2848, %v2838
    %v2850 = vmul.f32 %v2848, %v2839
    %v2851 = vstv %s2847
    %v2852 = vmul.f32 %v2851, %v2844
    %v2853 = vmul.f32 %v2851, %v2845
    %v2854 = vadd.f32 %v2849, %v2852
    %v2855 = vadd.f32 %v2850, %v2853
    %v2856 = vsel %vm1519, %v2854, 0.0
    %v2857 = vsel %vm1520, %v2855, 0.0
    %v2858 = vadd.f32 %v2832, %v2856
    %v2859 = vadd.f32 %v2833, %v2857
    %2860 = vrot.lane.b32.xlu0 %v1648, 78
    %v2861 = vpop.permute.xlu0 %2860
    %2862 = vrot.lane.b32.xlu0 %v1649, 78
    %v2863 = vpop.permute.xlu0 %2862
    %v2864 = vsel %vm1529, %v2861, %v2863
    %v2865 = vsel %vm1529, %v2863, %v2861
    %2866 = vrot.lane.b32.xlu0 %v1640, 78
    %v2867 = vpop.permute.xlu0 %2866
    %2868 = vrot.lane.b32.xlu0 %v1647, 78
    %v2869 = vpop.permute.xlu0 %2868
    %v2870 = vsel %vm1529, %v2867, %v2869
    %v2871 = vsel %vm1529, %v2869, %v2867
    %s2872 = sld [smem:[#allocation2 + $0x2f]]
    %s2873 = sld [smem:[#allocation2 + $0x60]]
    %v2874 = vstv %s2872
    %v2875 = vmul.f32 %v2874, %v2864
    %v2876 = vmul.f32 %v2874, %v2865
    %v2877 = vstv %s2873
    %v2878 = vmul.f32 %v2877, %v2870
    %v2879 = vmul.f32 %v2877, %v2871
    %v2880 = vadd.f32 %v2875, %v2878
    %v2881 = vadd.f32 %v2876, %v2879
    %v2882 = vsel %vm1548, %v2880, 0.0
    %v2883 = vsel %vm1549, %v2881, 0.0
    %v2884 = vadd.f32 %v2858, %v2882
    %v2885 = vadd.f32 %v2859, %v2883
    %2886 = vrot.lane.b32.xlu0 %v1648, 77
    %v2887 = vpop.permute.xlu0 %2886
    %2888 = vrot.lane.b32.xlu0 %v1649, 77
    %v2889 = vpop.permute.xlu0 %2888
    %v2890 = vsel %vm1558, %v2887, %v2889
    %v2891 = vsel %vm1558, %v2889, %v2887
    %2892 = vrot.lane.b32.xlu0 %v1640, 77
    %v2893 = vpop.permute.xlu0 %2892
    %2894 = vrot.lane.b32.xlu0 %v1647, 77
    %v2895 = vpop.permute.xlu0 %2894
    %v2896 = vsel %vm1558, %v2893, %v2895
    %v2897 = vsel %vm1558, %v2895, %v2893
    %s2898 = sld [smem:[#allocation2 + $0x30]]
    %s2899 = sld [smem:[#allocation2 + $0x61]]
    %v2900 = vstv %s2898
    %v2901 = vmul.f32 %v2900, %v2890
    %v2902 = vmul.f32 %v2900, %v2891
    %v2903 = vstv %s2899
    %v2904 = vmul.f32 %v2903, %v2896
    %v2905 = vmul.f32 %v2903, %v2897
    %v2906 = vadd.f32 %v2901, %v2904
    %v2907 = vadd.f32 %v2902, %v2905
    %v2908 = vsel %vm1577, %v2906, 0.0
    %v2909 = vsel %vm1578, %v2907, 0.0
    %v2910 = vadd.f32 %v2884, %v2908
    %v2911 = vadd.f32 %v2885, %v2909
    %v2912 = vxor.u32 %v2910, 2147483648
    %v2913 = vxor.u32 %v2911, 2147483648
    %v2914 = vmul.f32 %v2912, 1.442695
    %v2915 = vpow.pop %v2914
    %v2916 = vmul.f32 %v2913, 1.442695
    %v2917 = vpow.pop %v2916
    %v2918 = vadd.f32 %v2915, 1.0
    %v2919 = vadd.f32 %v2917, 1.0
    %v2920 = vrcp.pop %v2918
    %v2921 = vmul.f32 1.0, %v2920
    %v2922 = vrcp.pop %v2919
    %v2923 = vmul.f32 1.0, %v2922
    %v2924 = vlaneseq
    %v2925 = vshrl.u32 %v2924, 7
    %v2926 = vsub.s32 0, %v2925
    %v2927 = vrot.slane %v2921, %v2926
    %v2928 = vlaneseq
    %v2929 = vshrl.u32 %v2928, 7
    %v2930 = vsub.s32 0, %v2929
    %v2931 = vrot.slane %v2923, %v2930
    %v2934 = vcombine.low %v2927, %v2931
    %v2936 = vmul.f32 %v1614, %v2934
    %s2937 = smul.addr %s1611, 4
    %s2938 = scalar_lea.vmem [#allocation7], %s2937
    %2939 = vst [vmem:[%s2938] sm:$0xff] %v2936
    // Predicated region
    $region18: #{tpu_custom_call.1} parent=1 // pred_check
      _
    $region19: #{tpu_custom_call.1} parent=1 // pred_check_branch
      %2941 = sbr.rel (0) target = $region21
    $region20: #{tpu_custom_call.1} parent=1 // pred_region
      %s2943 = ssub.s32 256, 256
      %2944 = vsyncadd [#allocation4], %s2943
      %s2945 = sshll.u32 [#allocation7], 4
      %s2946 = int_to_ptr.vmem [resolvable:$true] %s2945
      %2951 = dma.vmem_to_hbm [thread:$0]  %s2946, 256, %s2, [#allocation4], 128, 128, 8
    $region21: #{tpu_custom_call.1} parent=1 // pred_fallthru
      _
    // Predicated region
    $region22: #{tpu_custom_call.1} parent=1 // pred_check
      _
    $region23: #{tpu_custom_call.1} parent=1 // pred_check_branch
      %2953 = sbr.rel (0) target = $region25
    $region24: #{tpu_custom_call.1} parent=1 // pred_region
      %2954 = dma.done [#allocation4], 256
    $region25: #{tpu_custom_call.1} parent=1 // pred_fallthru
      _
    %2955 = vsyncpa [#allocation3], 1
    %2956 = vsyncpa [#allocation4], 1
    %2957 = vsyncpa [#allocation5], 1

</llo_original>
